<compile_context>
chip_gen: v5e
topology: v5e:2x2
jax: 0.10.0
libtpu: 0.0.40
codegen_flags: <defaults>
</compile_context>

<pallas_src>
import functools

import jax
import jax.numpy as jnp
from jax import lax
from jax.experimental import pallas as pl
from jax.experimental.pallas import tpu as pltpu

VMEM_SPEC = pl.BlockSpec(memory_space=pltpu.MemorySpace.VMEM)


# ---------------------------------------------------------------------------
# Fused BiLSTM + classifier + CRF Viterbi kernel factory.
# All sequence tensors are time-major 2-D: row t*B + b  <->  (time t, batch b),
# with B the padded batch (multiple of 8) so row blocks are sublane aligned.
# Gate-column layout (8H): [i_f i_b | f_f f_b | o_f o_b | g_f g_b].
# ---------------------------------------------------------------------------
def make_ner_kernel(num_layers, T, B, H, C):
    H2, H4, H6, H8 = 2 * H, 4 * H, 6 * H, 8 * H
    unroll = True if T <= 32 else 8      # full unroll only for small static T

    def kernel(emb_ref, mask_ref, *rest):
        lw = [(rest[3 * l], rest[3 * l + 1], rest[3 * l + 2])
              for l in range(num_layers)]
        p = 3 * num_layers
        (w_cls_ref, b_cls_ref, transT_ref, start_ref, end_ref,
         tags_ref) = rest[p:p + 6]
        act_a, act_b, xrev_ref, gx_ref, em_ref, hist_ref = rest[p + 6:p + 12]
        act_refs = (act_a, act_b)

        # ------------------------------------------------------------------
        # Bidirectional LSTM stack.
        # ------------------------------------------------------------------
        for l in range(num_layers):
            wih_ref, whh_ref, b_ref = lw[l]
            din = H if l == 0 else H2
            x_ref = emb_ref if l == 0 else act_refs[(l + 1) % 2]
            out_ref = act_refs[l % 2]

            # Time-reversed copy of the layer input (feeds the backward
            # direction's hoisted projection; off the serial critical path).
            for t in range(T):
                xrev_ref[t * B:(t + 1) * B, 0:din] = \
                    x_ref[(T - 1 - t) * B:(T - t) * B, :]

            # Hoisted input projection for BOTH directions, written directly
            # in the combined gate layout: fwd columns from x(t), bwd columns
            # from x(T-1-t), so step s reads ONE contiguous (B,8H) row block.
            x_bf = x_ref[...].astype(jnp.bfloat16)
            xr_bf = xrev_ref[:, 0:din].astype(jnp.bfloat16)
            gx_ref[...] = (
                jnp.dot(x_bf, wih_ref[0:din, :],
                        preferred_element_type=jnp.float32)
                + jnp.dot(xr_bf, wih_ref[din:2 * din, :],
                          preferred_element_type=jnp.float32)
                + b_ref[...])

            whh = whh_ref[...]                       # (2H, 8H) bf16, hoisted

            def step(s, carry):
                h, c = carry                         # (B, 2H) f32 = [fwd|bwd]
                rf = pl.multiple_of(s * B, B)        # forward time row block
                rb = pl.multiple_of((T - 1 - s) * B, B)  # backward time block
                gates = gx_ref[pl.ds(rf, B), :] + jnp.dot(
                    h.astype(jnp.bfloat16), whh,
                    preferred_element_type=jnp.float32)      # (B, 8H)
                # One EUP push for all six sigmoid blocks, one for g, one for
                # tanh(c):  sigmoid(x) = 0.5*tanh(x/2) + 0.5.
                sig = 0.5 * jnp.tanh(0.5 * gates[:, 0:H6]) + 0.5
                g = jnp.tanh(gates[:, H6:H8])
                i_g = sig[:, 0:H2]
                f_g = sig[:, H2:H4]
                o_g = sig[:, H4:H6]
                c = f_g * c + i_g * g
                h = o_g * jnp.tanh(c)
                out_ref[pl.ds(rf, B), 0:H] = h[:, 0:H]        # forward half
                out_ref[pl.ds(rb, B), H:H2] = h[:, H:H2]      # backward half
                return (h, c)

            z = jnp.zeros((B, H2), jnp.float32)
            lax.fori_loop(0, T, step, (z, z), unroll=unroll)

        # ------------------------------------------------------------------
        # Classifier (Dropout is identity at inference time).
        # ------------------------------------------------------------------
        h_final = act_refs[(num_layers - 1) % 2][...].astype(jnp.bfloat16)
        em_ref[...] = (
            jnp.dot(h_final, w_cls_ref[...],
                    preferred_element_type=jnp.float32) + b_cls_ref[...])

        # ------------------------------------------------------------------
        # CRF Viterbi forward DP (torchcrf._viterbi_decode forward pass).
        # transT[next, prev] == transitions[prev, next].
        # ------------------------------------------------------------------
        transT = transT_ref[...]                                   # (C, C)
        transT_b = jnp.broadcast_to(transT[None, :, :], (B, C, C))  # hoisted
        iota_cc = lax.broadcasted_iota(jnp.int32, (B, C, C), 2)     # hoisted
        iota_bc = lax.broadcasted_iota(jnp.int32, (B, C), 1)        # hoisted
        sentC = jnp.int32(C)
        score0 = start_ref[...] + em_ref[0:B, :]                    # (B, C)
        count0 = mask_ref[0:B, :]                                   # (B, 1)

        def vstep(t, carry):
            score, count = carry
            r = pl.multiple_of(t * B, B)
            em_t = em_ref[pl.ds(r, B), :]                           # (B, C)
            mask_t = mask_ref[pl.ds(r, B), :]                       # (B, 1)
            # M[b, next, prev] = score[b, prev] + transitions[prev, next]
            M = score[:, None, :] + transT_b                        # (B, C, C)
            m = jnp.max(M, axis=-1)                                 # (B, C)
            idx = jnp.min(jnp.where(M >= m[:, :, None], iota_cc, sentC),
                          axis=-1)                                  # 1st argmax
            hist_ref[pl.ds(r, B), :] = idx
            score = jnp.where(mask_t != 0, m + em_t, score)
            return (score, count + mask_t)

        score, count = lax.fori_loop(1, T, vstep, (score0, count0),
                                     unroll=unroll)
        score = score + end_ref[...]                                # (B, C)
        seq_end = jnp.maximum(count - 1, 0)                         # (B, 1)

        # ------------------------------------------------------------------
        # Backtrace, linear: per-step row-block stores into the time-major
        # (T*B, 1) output.  Positions past each sequence end are -1.
        # ------------------------------------------------------------------
        mval = jnp.max(score, axis=1, keepdims=True)
        last = jnp.min(jnp.where(score >= mval, iota_bc, sentC),
                       axis=1, keepdims=True)                       # (B, 1)
        tags_ref[(T - 1) * B:T * B, :] = jnp.where(
            seq_end == (T - 1), last, jnp.int32(-1))

        def bstep(i, cur):
            t = T - 2 - i
            r = pl.multiple_of((t + 1) * B, B)
            hist_t = hist_ref[pl.ds(r, B), :]                       # (B, C)
            prev = jnp.sum(jnp.where(iota_bc == cur, hist_t, 0),
                           axis=1, keepdims=True)                   # gather
            new_cur = jnp.where(t < seq_end, prev, cur)
            tag_t = jnp.where(t > seq_end, jnp.int32(-1), new_cur)
            tags_ref[pl.ds(pl.multiple_of(t * B, B), B), :] = tag_t
            return new_cur

        lax.fori_loop(0, T - 1, bstep, last, unroll=unroll)

    return kernel


# ---------------------------------------------------------------------------
# Parameter init (deterministic, synthetic), pre-packed into the fused layout.
# ---------------------------------------------------------------------------
def init_params(key, vocab_size, hidden_size, num_layers, class_num,
                pad_token_id):
    # NOTE (checkpoint mapping): nn.LSTM stores weight_ih_l{k}[_reverse] as
    # (4H, Din) and weight_hh as (4H, H), gate order [i f g o], separate
    # b_ih/b_hh.  To load a real checkpoint: transpose to (Din, 4H)/(H, 4H),
    # combine b = b_ih + b_hh, then repack with combine_cols below.  The
    # classifier weight is transposed from (C, 2H) to (2H, C).
    H = hidden_size
    keys = jax.random.split(key, 3 + num_layers)

    def rnd(k, shape, scale=0.1):
        return (scale * jax.random.normal(k, shape)).astype(jnp.float32)

    emb = rnd(keys[0], (vocab_size, H))
    emb = emb.at[pad_token_id].set(0.0)      # nn.Embedding padding_idx row = 0

    def combine_cols(m, direction):
        # m: (..., 4H) in PyTorch gate order [i | f | g | o], one direction.
        # Returns (..., 8H) in layout [i_f i_b | f_f f_b | o_f o_b | g_f g_b]
        # with zeros in the other direction's columns.
        i, f, g, o = (m[..., 0:H], m[..., H:2 * H],
                      m[..., 2 * H:3 * H], m[..., 3 * H:4 * H])
        z = jnp.zeros_like(i)
        cols = [i, z, f, z, o, z, g, z] if direction == 0 else \
               [z, i, z, f, z, o, z, g]
        return jnp.concatenate(cols, axis=-1)

    lstm = []
    for l in range(num_layers):
        din = H if l == 0 else 2 * H
        lk = jax.random.split(keys[1 + l], 8)
        wih_f = rnd(lk[0], (din, 4 * H)); whh_f = rnd(lk[1], (H, 4 * H))
        b_f = rnd(lk[2], (1, 4 * H)) + rnd(lk[3], (1, 4 * H))   # b_ih + b_hh
        wih_b = rnd(lk[4], (din, 4 * H)); whh_b = rnd(lk[5], (H, 4 * H))
        b_b = rnd(lk[6], (1, 4 * H)) + rnd(lk[7], (1, 4 * H))
        # (2*Din, 8H): rows 0:Din feed fwd columns, rows Din:2Din feed bwd
        # columns (the bwd rows multiply the time-reversed input).
        wih = jnp.concatenate([combine_cols(wih_f, 0), combine_cols(wih_b, 1)],
                              axis=0)
        # (2H, 8H): rows 0:H = h_fwd, rows H:2H = h_bwd (block structure).
        whh = jnp.concatenate([combine_cols(whh_f, 0), combine_cols(whh_b, 1)],
                              axis=0)
        b = combine_cols(b_f, 0) + combine_cols(b_b, 1)          # (1, 8H)
        lstm.append(dict(wih=wih.astype(jnp.bfloat16),
                         whh=whh.astype(jnp.bfloat16), b=b))

    k_cls = jax.random.split(keys[1 + num_layers], 2)
    w_cls = rnd(k_cls[0], (2 * H, class_num)).astype(jnp.bfloat16)
    b_cls = rnd(k_cls[1], (1, class_num))

    k_crf = jax.random.split(keys[2 + num_layers], 3)
    trans = rnd(k_crf[0], (class_num, class_num))
    start = rnd(k_crf[1], (1, class_num))
    end = rnd(k_crf[2], (1, class_num))

    return dict(embedding=emb, lstm=lstm, w_cls=w_cls, b_cls=b_cls,
                trans_T=jnp.transpose(trans), start=start, end=end)


# ---------------------------------------------------------------------------
# Forward pass: one pallas_call does everything after the embedding gather.
# ---------------------------------------------------------------------------
@functools.partial(jax.jit, static_argnames=("pad_token_id",))
def ner_forward(params, x, pad_token_id=0):
    """Inference path of NerBertModel (target=None, use_bert=False).

    Returns (B, T) int32 best tag sequences, padded with -1 past each
    sequence end (torchcrf.decode returns ragged lists)."""
    B, T = x.shape
    H = params["embedding"].shape[1]
    C = params["w_cls"].shape[1]
    num_layers = len(params["lstm"])
    Bp = ((B + 7) // 8) * 8                      # sublane-complete batch tiles

    x_p = jnp.pad(x, ((0, Bp - B), (0, 0)), constant_values=pad_token_id)
    emb = params["embedding"][x_p]                               # (Bp, T, H)
    emb_tm = jnp.transpose(emb, (1, 0, 2)).reshape(T * Bp, H)
    emb_tm = emb_tm.astype(jnp.float32)
    mask_tm = (jnp.transpose(x_p, (1, 0)) != pad_token_id)
    mask_tm = mask_tm.astype(jnp.int32).reshape(T * Bp, 1)

    inputs = [emb_tm, mask_tm]
    for layer in params["lstm"]:
        inputs += [layer["wih"], layer["whh"], layer["b"]]
    inputs += [params["w_cls"], params["b_cls"], params["trans_T"],
               params["start"], params["end"]]

    kernel = make_ner_kernel(num_layers, T, Bp, H, C)
    tags_tm = pl.pallas_call(
        kernel,
        out_shape=jax.ShapeDtypeStruct((T * Bp, 1), jnp.int32),
        in_specs=[VMEM_SPEC] * len(inputs),
        out_specs=VMEM_SPEC,
        scratch_shapes=[
            pltpu.VMEM((T * Bp, 2 * H), jnp.float32),   # layer acts (ping)
            pltpu.VMEM((T * Bp, 2 * H), jnp.float32),   # layer acts (pong)
            pltpu.VMEM((T * Bp, 2 * H), jnp.float32),   # time-reversed input
            pltpu.VMEM((T * Bp, 8 * H), jnp.float32),   # gate pre-activations
            pltpu.VMEM((T * Bp, C), jnp.float32),       # emissions
            pltpu.VMEM((T * Bp, C), jnp.int32),         # Viterbi history
        ],
    )(*inputs)
    return tags_tm.reshape(T, Bp).transpose(1, 0)[:B]


if __name__ == "__main__":
    config = dict(use_bert_switch=False, vocab_size=50, hidden_size=32,
                  num_layers=2, class_num=8, pad_token_id=0, ignore_label=-1)

    key = jax.random.PRNGKey(0)
    params = init_params(key, config["vocab_size"], config["hidden_size"],
                         config["num_layers"], config["class_num"],
                         config["pad_token_id"])

    # batch=2, seq=8; second sequence has two pad tokens at the end.
    x = jax.random.randint(jax.random.fold_in(key, 99), (2, 8),
                           1, config["vocab_size"], dtype=jnp.int32)
    x = x.at[1, 6:].set(config["pad_token_id"])

    tags = ner_forward(params, x, pad_token_id=config["pad_token_id"])
    jax.block_until_ready(tags)
    assert tags.shape == (2, 8) and tags.dtype == jnp.int32
    assert int(tags[1, 6]) == -1 and int(tags[1, 7]) == -1       # pad -> -1
    assert bool((tags[0] >= 0).all())
    assert bool((tags[0] < config["class_num"]).all())
    print("KERNEL_OK")
</pallas_src>

<mosaic_0001>
module attributes {stable_mosaic.version = 11 : i64} {
  func.func @kernel(%arg0: memref<64x32xf32, #tpu.memory_space<vmem>>, %arg1: memref<64x1xi32, #tpu.memory_space<vmem>>, %arg2: memref<64x256xbf16, #tpu.memory_space<vmem>>, %arg3: memref<64x256xbf16, #tpu.memory_space<vmem>>, %arg4: memref<1x256xf32, #tpu.memory_space<vmem>>, %arg5: memref<128x256xbf16, #tpu.memory_space<vmem>>, %arg6: memref<64x256xbf16, #tpu.memory_space<vmem>>, %arg7: memref<1x256xf32, #tpu.memory_space<vmem>>, %arg8: memref<64x8xbf16, #tpu.memory_space<vmem>>, %arg9: memref<1x8xf32, #tpu.memory_space<vmem>>, %arg10: memref<8x8xf32, #tpu.memory_space<vmem>>, %arg11: memref<1x8xf32, #tpu.memory_space<vmem>>, %arg12: memref<1x8xf32, #tpu.memory_space<vmem>>, %arg13: memref<64x1xi32, #tpu.memory_space<vmem>>, %arg14: memref<64x64xf32, #tpu.memory_space<vmem>>, %arg15: memref<64x64xf32, #tpu.memory_space<vmem>>, %arg16: memref<64x64xf32, #tpu.memory_space<vmem>>, %arg17: memref<64x256xf32, #tpu.memory_space<vmem>>, %arg18: memref<64x8xf32, #tpu.memory_space<vmem>>, %arg19: memref<64x8xi32, #tpu.memory_space<vmem>>) attributes {dimension_semantics = [], scalar_prefetch = 0 : i64, scratch_operands = 6 : i64, tpu.core_type = #tpu.core_type<tc>} {
    %c56 = arith.constant 56 : index
    %c0 = arith.constant 0 : index
    %0 = vector.load %arg0[%c56, %c0] : memref<64x32xf32, #tpu.memory_space<vmem>>, vector<8x32xf32>
    %c0_0 = arith.constant 0 : index
    %c0_1 = arith.constant 0 : index
    %1 = vector.load %arg16[%c0_0, %c0_1] : memref<64x64xf32, #tpu.memory_space<vmem>>, vector<8x32xf32>
    tpu.vector_store %arg16[%c0_0, %c0_1], %0 {strides = array<i32>} : memref<64x64xf32, #tpu.memory_space<vmem>>, vector<8x32xf32>,
    %c48 = arith.constant 48 : index
    %c0_2 = arith.constant 0 : index
    %2 = vector.load %arg0[%c48, %c0_2] : memref<64x32xf32, #tpu.memory_space<vmem>>, vector<8x32xf32>
    %c8 = arith.constant 8 : index
    %c0_3 = arith.constant 0 : index
    %3 = vector.load %arg16[%c8, %c0_3] : memref<64x64xf32, #tpu.memory_space<vmem>>, vector<8x32xf32>
    tpu.vector_store %arg16[%c8, %c0_3], %2 {strides = array<i32>} : memref<64x64xf32, #tpu.memory_space<vmem>>, vector<8x32xf32>,
    %c40 = arith.constant 40 : index
    %c0_4 = arith.constant 0 : index
    %4 = vector.load %arg0[%c40, %c0_4] : memref<64x32xf32, #tpu.memory_space<vmem>>, vector<8x32xf32>
    %c16 = arith.constant 16 : index
    %c0_5 = arith.constant 0 : index
    %5 = vector.load %arg16[%c16, %c0_5] : memref<64x64xf32, #tpu.memory_space<vmem>>, vector<8x32xf32>
    tpu.vector_store %arg16[%c16, %c0_5], %4 {strides = array<i32>} : memref<64x64xf32, #tpu.memory_space<vmem>>, vector<8x32xf32>,
    %c32 = arith.constant 32 : index
    %c0_6 = arith.constant 0 : index
    %6 = vector.load %arg0[%c32, %c0_6] : memref<64x32xf32, #tpu.memory_space<vmem>>, vector<8x32xf32>
    %c24 = arith.constant 24 : index
    %c0_7 = arith.constant 0 : index
    %7 = vector.load %arg16[%c24, %c0_7] : memref<64x64xf32, #tpu.memory_space<vmem>>, vector<8x32xf32>
    tpu.vector_store %arg16[%c24, %c0_7], %6 {strides = array<i32>} : memref<64x64xf32, #tpu.memory_space<vmem>>, vector<8x32xf32>,
    %c24_8 = arith.constant 24 : index
    %c0_9 = arith.constant 0 : index
    %8 = vector.load %arg0[%c24_8, %c0_9] : memref<64x32xf32, #tpu.memory_space<vmem>>, vector<8x32xf32>
    %c32_10 = arith.constant 32 : index
    %c0_11 = arith.constant 0 : index
    %9 = vector.load %arg16[%c32_10, %c0_11] : memref<64x64xf32, #tpu.memory_space<vmem>>, vector<8x32xf32>
    tpu.vector_store %arg16[%c32_10, %c0_11], %8 {strides = array<i32>} : memref<64x64xf32, #tpu.memory_space<vmem>>, vector<8x32xf32>,
    %c16_12 = arith.constant 16 : index
    %c0_13 = arith.constant 0 : index
    %10 = vector.load %arg0[%c16_12, %c0_13] : memref<64x32xf32, #tpu.memory_space<vmem>>, vector<8x32xf32>
    %c40_14 = arith.constant 40 : index
    %c0_15 = arith.constant 0 : index
    %11 = vector.load %arg16[%c40_14, %c0_15] : memref<64x64xf32, #tpu.memory_space<vmem>>, vector<8x32xf32>
    tpu.vector_store %arg16[%c40_14, %c0_15], %10 {strides = array<i32>} : memref<64x64xf32, #tpu.memory_space<vmem>>, vector<8x32xf32>,
    %c8_16 = arith.constant 8 : index
    %c0_17 = arith.constant 0 : index
    %12 = vector.load %arg0[%c8_16, %c0_17] : memref<64x32xf32, #tpu.memory_space<vmem>>, vector<8x32xf32>
    %c48_18 = arith.constant 48 : index
    %c0_19 = arith.constant 0 : index
    %13 = vector.load %arg16[%c48_18, %c0_19] : memref<64x64xf32, #tpu.memory_space<vmem>>, vector<8x32xf32>
    tpu.vector_store %arg16[%c48_18, %c0_19], %12 {strides = array<i32>} : memref<64x64xf32, #tpu.memory_space<vmem>>, vector<8x32xf32>,
    %c0_20 = arith.constant 0 : index
    %c0_21 = arith.constant 0 : index
    %14 = vector.load %arg0[%c0_20, %c0_21] : memref<64x32xf32, #tpu.memory_space<vmem>>, vector<8x32xf32>
    %c56_22 = arith.constant 56 : index
    %c0_23 = arith.constant 0 : index
    %15 = vector.load %arg16[%c56_22, %c0_23] : memref<64x64xf32, #tpu.memory_space<vmem>>, vector<8x32xf32>
    tpu.vector_store %arg16[%c56_22, %c0_23], %14 {strides = array<i32>} : memref<64x64xf32, #tpu.memory_space<vmem>>, vector<8x32xf32>,
    %c0_24 = arith.constant 0 : index
    %c0_25 = arith.constant 0 : index
    %16 = vector.load %arg0[%c0_24, %c0_25] : memref<64x32xf32, #tpu.memory_space<vmem>>, vector<64x32xf32>
    %17 = arith.truncf %16 : vector<64x32xf32> to vector<64x32xbf16>
    %c0_26 = arith.constant 0 : index
    %c0_27 = arith.constant 0 : index
    %18 = vector.load %arg16[%c0_26, %c0_27] : memref<64x64xf32, #tpu.memory_space<vmem>>, vector<64x32xf32>
    %19 = arith.truncf %18 : vector<64x32xf32> to vector<64x32xbf16>
    %c0_28 = arith.constant 0 : index
    %c0_29 = arith.constant 0 : index
    %20 = vector.load %arg2[%c0_28, %c0_29] : memref<64x256xbf16, #tpu.memory_space<vmem>>, vector<32x256xbf16>
    %cst = arith.constant dense<0.000000e+00> : vector<64x256xf32>
    %21 = tpu.matmul %17, %20, %cst {dimension_numbers = #tpu.dot_dimension_numbers<[1], [0], [0], [1], [0, 0, 1, 1], [], []>} : vector<64x32xbf16>, vector<32x256xbf16>, vector<64x256xf32> -> vector<64x256xf32>
    %c32_30 = arith.constant 32 : index
    %c0_31 = arith.constant 0 : index
    %22 = vector.load %arg2[%c32_30, %c0_31] : memref<64x256xbf16, #tpu.memory_space<vmem>>, vector<32x256xbf16>
    %cst_32 = arith.constant dense<0.000000e+00> : vector<64x256xf32>
    %23 = tpu.matmul %19, %22, %cst_32 {dimension_numbers = #tpu.dot_dimension_numbers<[1], [0], [0], [1], [0, 0, 1, 1], [], []>} : vector<64x32xbf16>, vector<32x256xbf16>, vector<64x256xf32> -> vector<64x256xf32>
    %24 = arith.addf %21, %23 : vector<64x256xf32>
    %c0_33 = arith.constant 0 : index
    %c0_34 = arith.constant 0 : index
    %25 = vector.load %arg4[%c0_33, %c0_34] : memref<1x256xf32, #tpu.memory_space<vmem>>, vector<1x256xf32>
    %26 = vector.broadcast %25 : vector<1x256xf32> to vector<64x256xf32>
    %27 = arith.addf %24, %26 : vector<64x256xf32>
    %c0_35 = arith.constant 0 : index
    %c0_36 = arith.constant 0 : index
    %28 = vector.load %arg17[%c0_35, %c0_36] : memref<64x256xf32, #tpu.memory_space<vmem>>, vector<64x256xf32>
    tpu.vector_store %arg17[%c0_35, %c0_36], %27 {strides = array<i32>} : memref<64x256xf32, #tpu.memory_space<vmem>>, vector<64x256xf32>,
    %c0_37 = arith.constant 0 : index
    %c0_38 = arith.constant 0 : index
    %29 = vector.load %arg3[%c0_37, %c0_38] : memref<64x256xbf16, #tpu.memory_space<vmem>>, vector<64x256xbf16>
    %cst_39 = arith.constant 0.000000e+00 : f32
    %30 = vector.broadcast %cst_39 : f32 to vector<8x64xf32>
    %c0_i32 = arith.constant 0 : i32
    %c8_i32 = arith.constant 8 : i32
    %31 = arith.muli %c0_i32, %c8_i32 : i32
    %32 = tpu.assume_multiple %31, 8 : i32
    %c7_i32 = arith.constant 7 : i32
    %33 = arith.subi %c7_i32, %c0_i32 : i32
    %c8_i32_40 = arith.constant 8 : i32
    %34 = arith.muli %33, %c8_i32_40 : i32
    %35 = tpu.assume_multiple %34, 8 : i32
    %36 = arith.index_cast %32 : i32 to index
    %c0_41 = arith.constant 0 : index
    %37 = vector.load %arg17[%36, %c0_41] : memref<64x256xf32, #tpu.memory_space<vmem>>, vector<8x256xf32>
    %38 = arith.truncf %30 : vector<8x64xf32> to vector<8x64xbf16>
    %cst_42 = arith.constant dense<0.000000e+00> : vector<8x256xf32>
    %39 = tpu.matmul %38, %29, %cst_42 {dimension_numbers = #tpu.dot_dimension_numbers<[1], [0], [0], [1], [0, 0, 1, 1], [], []>} : vector<8x64xbf16>, vector<64x256xbf16>, vector<8x256xf32> -> vector<8x256xf32>
    %40 = arith.addf %37, %39 : vector<8x256xf32>
    %41 = vector.extract_strided_slice %40 {offsets = [0, 0], sizes = [8, 192], strides = [1, 1]} : vector<8x256xf32> to vector<8x192xf32>
    %cst_43 = arith.constant 5.000000e-01 : f32
    %42 = vector.broadcast %cst_43 : f32 to vector<8x192xf32>
    %43 = arith.mulf %42, %41 : vector<8x192xf32>
    %44 = math.tanh %43 : vector<8x192xf32>
    %cst_44 = arith.constant 5.000000e-01 : f32
    %45 = vector.broadcast %cst_44 : f32 to vector<8x192xf32>
    %46 = arith.mulf %45, %44 : vector<8x192xf32>
    %cst_45 = arith.constant 5.000000e-01 : f32
    %47 = vector.broadcast %cst_45 : f32 to vector<8x192xf32>
    %48 = arith.addf %46, %47 : vector<8x192xf32>
    %49 = vector.extract_strided_slice %40 {offsets = [0, 192], sizes = [8, 64], strides = [1, 1]} : vector<8x256xf32> to vector<8x64xf32>
    %50 = math.tanh %49 : vector<8x64xf32>
    %51 = vector.extract_strided_slice %48 {offsets = [0, 0], sizes = [8, 64], strides = [1, 1]} : vector<8x192xf32> to vector<8x64xf32>
    %52 = vector.extract_strided_slice %48 {offsets = [0, 64], sizes = [8, 64], strides = [1, 1]} : vector<8x192xf32> to vector<8x64xf32>
    %53 = vector.extract_strided_slice %48 {offsets = [0, 128], sizes = [8, 64], strides = [1, 1]} : vector<8x192xf32> to vector<8x64xf32>
    %54 = arith.mulf %52, %30 : vector<8x64xf32>
    %55 = arith.mulf %51, %50 : vector<8x64xf32>
    %56 = arith.addf %54, %55 : vector<8x64xf32>
    %57 = math.tanh %56 : vector<8x64xf32>
    %58 = arith.mulf %53, %57 : vector<8x64xf32>
    %59 = vector.extract_strided_slice %58 {offsets = [0, 0], sizes = [8, 32], strides = [1, 1]} : vector<8x64xf32> to vector<8x32xf32>
    %60 = arith.index_cast %32 : i32 to index
    %c0_46 = arith.constant 0 : index
    %61 = vector.load %arg14[%60, %c0_46] : memref<64x64xf32, #tpu.memory_space<vmem>>, vector<8x32xf32>
    tpu.vector_store %arg14[%60, %c0_46], %59 {strides = array<i32>} : memref<64x64xf32, #tpu.memory_space<vmem>>, vector<8x32xf32>,
    %62 = vector.extract_strided_slice %58 {offsets = [0, 32], sizes = [8, 32], strides = [1, 1]} : vector<8x64xf32> to vector<8x32xf32>
    %63 = arith.index_cast %35 : i32 to index
    %c32_47 = arith.constant 32 : index
    %64 = vector.load %arg14[%63, %c32_47] : memref<64x64xf32, #tpu.memory_space<vmem>>, vector<8x32xf32>
    tpu.vector_store %arg14[%63, %c32_47], %62 {strides = array<i32>} : memref<64x64xf32, #tpu.memory_space<vmem>>, vector<8x32xf32>,
    %c1_i32 = arith.constant 1 : i32
    %c8_i32_48 = arith.constant 8 : i32
    %65 = arith.muli %c1_i32, %c8_i32_48 : i32
    %66 = tpu.assume_multiple %65, 8 : i32
    %c7_i32_49 = arith.constant 7 : i32
    %67 = arith.subi %c7_i32_49, %c1_i32 : i32
    %c8_i32_50 = arith.constant 8 : i32
    %68 = arith.muli %67, %c8_i32_50 : i32
    %69 = tpu.assume_multiple %68, 8 : i32
    %70 = arith.index_cast %66 : i32 to index
    %c0_51 = arith.constant 0 : index
    %71 = vector.load %arg17[%70, %c0_51] : memref<64x256xf32, #tpu.memory_space<vmem>>, vector<8x256xf32>
    %72 = arith.truncf %58 : vector<8x64xf32> to vector<8x64xbf16>
    %cst_52 = arith.constant dense<0.000000e+00> : vector<8x256xf32>
    %73 = tpu.matmul %72, %29, %cst_52 {dimension_numbers = #tpu.dot_dimension_numbers<[1], [0], [0], [1], [0, 0, 1, 1], [], []>} : vector<8x64xbf16>, vector<64x256xbf16>, vector<8x256xf32> -> vector<8x256xf32>
    %74 = arith.addf %71, %73 : vector<8x256xf32>
    %75 = vector.extract_strided_slice %74 {offsets = [0, 0], sizes = [8, 192], strides = [1, 1]} : vector<8x256xf32> to vector<8x192xf32>
    %cst_53 = arith.constant 5.000000e-01 : f32
    %76 = vector.broadcast %cst_53 : f32 to vector<8x192xf32>
    %77 = arith.mulf %76, %75 : vector<8x192xf32>
    %78 = math.tanh %77 : vector<8x192xf32>
    %cst_54 = arith.constant 5.000000e-01 : f32
    %79 = vector.broadcast %cst_54 : f32 to vector<8x192xf32>
    %80 = arith.mulf %79, %78 : vector<8x192xf32>
    %cst_55 = arith.constant 5.000000e-01 : f32
    %81 = vector.broadcast %cst_55 : f32 to vector<8x192xf32>
    %82 = arith.addf %80, %81 : vector<8x192xf32>
    %83 = vector.extract_strided_slice %74 {offsets = [0, 192], sizes = [8, 64], strides = [1, 1]} : vector<8x256xf32> to vector<8x64xf32>
    %84 = math.tanh %83 : vector<8x64xf32>
    %85 = vector.extract_strided_slice %82 {offsets = [0, 0], sizes = [8, 64], strides = [1, 1]} : vector<8x192xf32> to vector<8x64xf32>
    %86 = vector.extract_strided_slice %82 {offsets = [0, 64], sizes = [8, 64], strides = [1, 1]} : vector<8x192xf32> to vector<8x64xf32>
    %87 = vector.extract_strided_slice %82 {offsets = [0, 128], sizes = [8, 64], strides = [1, 1]} : vector<8x192xf32> to vector<8x64xf32>
    %88 = arith.mulf %86, %56 : vector<8x64xf32>
    %89 = arith.mulf %85, %84 : vector<8x64xf32>
    %90 = arith.addf %88, %89 : vector<8x64xf32>
    %91 = math.tanh %90 : vector<8x64xf32>
    %92 = arith.mulf %87, %91 : vector<8x64xf32>
    %93 = vector.extract_strided_slice %92 {offsets = [0, 0], sizes = [8, 32], strides = [1, 1]} : vector<8x64xf32> to vector<8x32xf32>
    %94 = arith.index_cast %66 : i32 to index
    %c0_56 = arith.constant 0 : index
    %95 = vector.load %arg14[%94, %c0_56] : memref<64x64xf32, #tpu.memory_space<vmem>>, vector<8x32xf32>
    tpu.vector_store %arg14[%94, %c0_56], %93 {strides = array<i32>} : memref<64x64xf32, #tpu.memory_space<vmem>>, vector<8x32xf32>,
    %96 = vector.extract_strided_slice %92 {offsets = [0, 32], sizes = [8, 32], strides = [1, 1]} : vector<8x64xf32> to vector<8x32xf32>
    %97 = arith.index_cast %69 : i32 to index
    %c32_57 = arith.constant 32 : index
    %98 = vector.load %arg14[%97, %c32_57] : memref<64x64xf32, #tpu.memory_space<vmem>>, vector<8x32xf32>
    tpu.vector_store %arg14[%97, %c32_57], %96 {strides = array<i32>} : memref<64x64xf32, #tpu.memory_space<vmem>>, vector<8x32xf32>,
    %c2_i32 = arith.constant 2 : i32
    %c8_i32_58 = arith.constant 8 : i32
    %99 = arith.muli %c2_i32, %c8_i32_58 : i32
    %100 = tpu.assume_multiple %99, 8 : i32
    %c7_i32_59 = arith.constant 7 : i32
    %101 = arith.subi %c7_i32_59, %c2_i32 : i32
    %c8_i32_60 = arith.constant 8 : i32
    %102 = arith.muli %101, %c8_i32_60 : i32
    %103 = tpu.assume_multiple %102, 8 : i32
    %104 = arith.index_cast %100 : i32 to index
    %c0_61 = arith.constant 0 : index
    %105 = vector.load %arg17[%104, %c0_61] : memref<64x256xf32, #tpu.memory_space<vmem>>, vector<8x256xf32>
    %106 = arith.truncf %92 : vector<8x64xf32> to vector<8x64xbf16>
    %cst_62 = arith.constant dense<0.000000e+00> : vector<8x256xf32>
    %107 = tpu.matmul %106, %29, %cst_62 {dimension_numbers = #tpu.dot_dimension_numbers<[1], [0], [0], [1], [0, 0, 1, 1], [], []>} : vector<8x64xbf16>, vector<64x256xbf16>, vector<8x256xf32> -> vector<8x256xf32>
    %108 = arith.addf %105, %107 : vector<8x256xf32>
    %109 = vector.extract_strided_slice %108 {offsets = [0, 0], sizes = [8, 192], strides = [1, 1]} : vector<8x256xf32> to vector<8x192xf32>
    %cst_63 = arith.constant 5.000000e-01 : f32
    %110 = vector.broadcast %cst_63 : f32 to vector<8x192xf32>
    %111 = arith.mulf %110, %109 : vector<8x192xf32>
    %112 = math.tanh %111 : vector<8x192xf32>
    %cst_64 = arith.constant 5.000000e-01 : f32
    %113 = vector.broadcast %cst_64 : f32 to vector<8x192xf32>
    %114 = arith.mulf %113, %112 : vector<8x192xf32>
    %cst_65 = arith.constant 5.000000e-01 : f32
    %115 = vector.broadcast %cst_65 : f32 to vector<8x192xf32>
    %116 = arith.addf %114, %115 : vector<8x192xf32>
    %117 = vector.extract_strided_slice %108 {offsets = [0, 192], sizes = [8, 64], strides = [1, 1]} : vector<8x256xf32> to vector<8x64xf32>
    %118 = math.tanh %117 : vector<8x64xf32>
    %119 = vector.extract_strided_slice %116 {offsets = [0, 0], sizes = [8, 64], strides = [1, 1]} : vector<8x192xf32> to vector<8x64xf32>
    %120 = vector.extract_strided_slice %116 {offsets = [0, 64], sizes = [8, 64], strides = [1, 1]} : vector<8x192xf32> to vector<8x64xf32>
    %121 = vector.extract_strided_slice %116 {offsets = [0, 128], sizes = [8, 64], strides = [1, 1]} : vector<8x192xf32> to vector<8x64xf32>
    %122 = arith.mulf %120, %90 : vector<8x64xf32>
    %123 = arith.mulf %119, %118 : vector<8x64xf32>
    %124 = arith.addf %122, %123 : vector<8x64xf32>
    %125 = math.tanh %124 : vector<8x64xf32>
    %126 = arith.mulf %121, %125 : vector<8x64xf32>
    %127 = vector.extract_strided_slice %126 {offsets = [0, 0], sizes = [8, 32], strides = [1, 1]} : vector<8x64xf32> to vector<8x32xf32>
    %128 = arith.index_cast %100 : i32 to index
    %c0_66 = arith.constant 0 : index
    %129 = vector.load %arg14[%128, %c0_66] : memref<64x64xf32, #tpu.memory_space<vmem>>, vector<8x32xf32>
    tpu.vector_store %arg14[%128, %c0_66], %127 {strides = array<i32>} : memref<64x64xf32, #tpu.memory_space<vmem>>, vector<8x32xf32>,
    %130 = vector.extract_strided_slice %126 {offsets = [0, 32], sizes = [8, 32], strides = [1, 1]} : vector<8x64xf32> to vector<8x32xf32>
    %131 = arith.index_cast %103 : i32 to index
    %c32_67 = arith.constant 32 : index
    %132 = vector.load %arg14[%131, %c32_67] : memref<64x64xf32, #tpu.memory_space<vmem>>, vector<8x32xf32>
    tpu.vector_store %arg14[%131, %c32_67], %130 {strides = array<i32>} : memref<64x64xf32, #tpu.memory_space<vmem>>, vector<8x32xf32>,
    %c3_i32 = arith.constant 3 : i32
    %c8_i32_68 = arith.constant 8 : i32
    %133 = arith.muli %c3_i32, %c8_i32_68 : i32
    %134 = tpu.assume_multiple %133, 8 : i32
    %c7_i32_69 = arith.constant 7 : i32
    %135 = arith.subi %c7_i32_69, %c3_i32 : i32
    %c8_i32_70 = arith.constant 8 : i32
    %136 = arith.muli %135, %c8_i32_70 : i32
    %137 = tpu.assume_multiple %136, 8 : i32
    %138 = arith.index_cast %134 : i32 to index
    %c0_71 = arith.constant 0 : index
    %139 = vector.load %arg17[%138, %c0_71] : memref<64x256xf32, #tpu.memory_space<vmem>>, vector<8x256xf32>
    %140 = arith.truncf %126 : vector<8x64xf32> to vector<8x64xbf16>
    %cst_72 = arith.constant dense<0.000000e+00> : vector<8x256xf32>
    %141 = tpu.matmul %140, %29, %cst_72 {dimension_numbers = #tpu.dot_dimension_numbers<[1], [0], [0], [1], [0, 0, 1, 1], [], []>} : vector<8x64xbf16>, vector<64x256xbf16>, vector<8x256xf32> -> vector<8x256xf32>
    %142 = arith.addf %139, %141 : vector<8x256xf32>
    %143 = vector.extract_strided_slice %142 {offsets = [0, 0], sizes = [8, 192], strides = [1, 1]} : vector<8x256xf32> to vector<8x192xf32>
    %cst_73 = arith.constant 5.000000e-01 : f32
    %144 = vector.broadcast %cst_73 : f32 to vector<8x192xf32>
    %145 = arith.mulf %144, %143 : vector<8x192xf32>
    %146 = math.tanh %145 : vector<8x192xf32>
    %cst_74 = arith.constant 5.000000e-01 : f32
    %147 = vector.broadcast %cst_74 : f32 to vector<8x192xf32>
    %148 = arith.mulf %147, %146 : vector<8x192xf32>
    %cst_75 = arith.constant 5.000000e-01 : f32
    %149 = vector.broadcast %cst_75 : f32 to vector<8x192xf32>
    %150 = arith.addf %148, %149 : vector<8x192xf32>
    %151 = vector.extract_strided_slice %142 {offsets = [0, 192], sizes = [8, 64], strides = [1, 1]} : vector<8x256xf32> to vector<8x64xf32>
    %152 = math.tanh %151 : vector<8x64xf32>
    %153 = vector.extract_strided_slice %150 {offsets = [0, 0], sizes = [8, 64], strides = [1, 1]} : vector<8x192xf32> to vector<8x64xf32>
    %154 = vector.extract_strided_slice %150 {offsets = [0, 64], sizes = [8, 64], strides = [1, 1]} : vector<8x192xf32> to vector<8x64xf32>
    %155 = vector.extract_strided_slice %150 {offsets = [0, 128], sizes = [8, 64], strides = [1, 1]} : vector<8x192xf32> to vector<8x64xf32>
    %156 = arith.mulf %154, %124 : vector<8x64xf32>
    %157 = arith.mulf %153, %152 : vector<8x64xf32>
    %158 = arith.addf %156, %157 : vector<8x64xf32>
    %159 = math.tanh %158 : vector<8x64xf32>
    %160 = arith.mulf %155, %159 : vector<8x64xf32>
    %161 = vector.extract_strided_slice %160 {offsets = [0, 0], sizes = [8, 32], strides = [1, 1]} : vector<8x64xf32> to vector<8x32xf32>
    %162 = arith.index_cast %134 : i32 to index
    %c0_76 = arith.constant 0 : index
    %163 = vector.load %arg14[%162, %c0_76] : memref<64x64xf32, #tpu.memory_space<vmem>>, vector<8x32xf32>
    tpu.vector_store %arg14[%162, %c0_76], %161 {strides = array<i32>} : memref<64x64xf32, #tpu.memory_space<vmem>>, vector<8x32xf32>,
    %164 = vector.extract_strided_slice %160 {offsets = [0, 32], sizes = [8, 32], strides = [1, 1]} : vector<8x64xf32> to vector<8x32xf32>
    %165 = arith.index_cast %137 : i32 to index
    %c32_77 = arith.constant 32 : index
    %166 = vector.load %arg14[%165, %c32_77] : memref<64x64xf32, #tpu.memory_space<vmem>>, vector<8x32xf32>
    tpu.vector_store %arg14[%165, %c32_77], %164 {strides = array<i32>} : memref<64x64xf32, #tpu.memory_space<vmem>>, vector<8x32xf32>,
    %c4_i32 = arith.constant 4 : i32
    %c8_i32_78 = arith.constant 8 : i32
    %167 = arith.muli %c4_i32, %c8_i32_78 : i32
    %168 = tpu.assume_multiple %167, 8 : i32
    %c7_i32_79 = arith.constant 7 : i32
    %169 = arith.subi %c7_i32_79, %c4_i32 : i32
    %c8_i32_80 = arith.constant 8 : i32
    %170 = arith.muli %169, %c8_i32_80 : i32
    %171 = tpu.assume_multiple %170, 8 : i32
    %172 = arith.index_cast %168 : i32 to index
    %c0_81 = arith.constant 0 : index
    %173 = vector.load %arg17[%172, %c0_81] : memref<64x256xf32, #tpu.memory_space<vmem>>, vector<8x256xf32>
    %174 = arith.truncf %160 : vector<8x64xf32> to vector<8x64xbf16>
    %cst_82 = arith.constant dense<0.000000e+00> : vector<8x256xf32>
    %175 = tpu.matmul %174, %29, %cst_82 {dimension_numbers = #tpu.dot_dimension_numbers<[1], [0], [0], [1], [0, 0, 1, 1], [], []>} : vector<8x64xbf16>, vector<64x256xbf16>, vector<8x256xf32> -> vector<8x256xf32>
    %176 = arith.addf %173, %175 : vector<8x256xf32>
    %177 = vector.extract_strided_slice %176 {offsets = [0, 0], sizes = [8, 192], strides = [1, 1]} : vector<8x256xf32> to vector<8x192xf32>
    %cst_83 = arith.constant 5.000000e-01 : f32
    %178 = vector.broadcast %cst_83 : f32 to vector<8x192xf32>
    %179 = arith.mulf %178, %177 : vector<8x192xf32>
    %180 = math.tanh %179 : vector<8x192xf32>
    %cst_84 = arith.constant 5.000000e-01 : f32
    %181 = vector.broadcast %cst_84 : f32 to vector<8x192xf32>
    %182 = arith.mulf %181, %180 : vector<8x192xf32>
    %cst_85 = arith.constant 5.000000e-01 : f32
    %183 = vector.broadcast %cst_85 : f32 to vector<8x192xf32>
    %184 = arith.addf %182, %183 : vector<8x192xf32>
    %185 = vector.extract_strided_slice %176 {offsets = [0, 192], sizes = [8, 64], strides = [1, 1]} : vector<8x256xf32> to vector<8x64xf32>
    %186 = math.tanh %185 : vector<8x64xf32>
    %187 = vector.extract_strided_slice %184 {offsets = [0, 0], sizes = [8, 64], strides = [1, 1]} : vector<8x192xf32> to vector<8x64xf32>
    %188 = vector.extract_strided_slice %184 {offsets = [0, 64], sizes = [8, 64], strides = [1, 1]} : vector<8x192xf32> to vector<8x64xf32>
    %189 = vector.extract_strided_slice %184 {offsets = [0, 128], sizes = [8, 64], strides = [1, 1]} : vector<8x192xf32> to vector<8x64xf32>
    %190 = arith.mulf %188, %158 : vector<8x64xf32>
    %191 = arith.mulf %187, %186 : vector<8x64xf32>
    %192 = arith.addf %190, %191 : vector<8x64xf32>
    %193 = math.tanh %192 : vector<8x64xf32>
    %194 = arith.mulf %189, %193 : vector<8x64xf32>
    %195 = vector.extract_strided_slice %194 {offsets = [0, 0], sizes = [8, 32], strides = [1, 1]} : vector<8x64xf32> to vector<8x32xf32>
    %196 = arith.index_cast %168 : i32 to index
    %c0_86 = arith.constant 0 : index
    %197 = vector.load %arg14[%196, %c0_86] : memref<64x64xf32, #tpu.memory_space<vmem>>, vector<8x32xf32>
    tpu.vector_store %arg14[%196, %c0_86], %195 {strides = array<i32>} : memref<64x64xf32, #tpu.memory_space<vmem>>, vector<8x32xf32>,
    %198 = vector.extract_strided_slice %194 {offsets = [0, 32], sizes = [8, 32], strides = [1, 1]} : vector<8x64xf32> to vector<8x32xf32>
    %199 = arith.index_cast %171 : i32 to index
    %c32_87 = arith.constant 32 : index
    %200 = vector.load %arg14[%199, %c32_87] : memref<64x64xf32, #tpu.memory_space<vmem>>, vector<8x32xf32>
    tpu.vector_store %arg14[%199, %c32_87], %198 {strides = array<i32>} : memref<64x64xf32, #tpu.memory_space<vmem>>, vector<8x32xf32>,
    %c5_i32 = arith.constant 5 : i32
    %c8_i32_88 = arith.constant 8 : i32
    %201 = arith.muli %c5_i32, %c8_i32_88 : i32
    %202 = tpu.assume_multiple %201, 8 : i32
    %c7_i32_89 = arith.constant 7 : i32
    %203 = arith.subi %c7_i32_89, %c5_i32 : i32
    %c8_i32_90 = arith.constant 8 : i32
    %204 = arith.muli %203, %c8_i32_90 : i32
    %205 = tpu.assume_multiple %204, 8 : i32
    %206 = arith.index_cast %202 : i32 to index
    %c0_91 = arith.constant 0 : index
    %207 = vector.load %arg17[%206, %c0_91] : memref<64x256xf32, #tpu.memory_space<vmem>>, vector<8x256xf32>
    %208 = arith.truncf %194 : vector<8x64xf32> to vector<8x64xbf16>
    %cst_92 = arith.constant dense<0.000000e+00> : vector<8x256xf32>
    %209 = tpu.matmul %208, %29, %cst_92 {dimension_numbers = #tpu.dot_dimension_numbers<[1], [0], [0], [1], [0, 0, 1, 1], [], []>} : vector<8x64xbf16>, vector<64x256xbf16>, vector<8x256xf32> -> vector<8x256xf32>
    %210 = arith.addf %207, %209 : vector<8x256xf32>
    %211 = vector.extract_strided_slice %210 {offsets = [0, 0], sizes = [8, 192], strides = [1, 1]} : vector<8x256xf32> to vector<8x192xf32>
    %cst_93 = arith.constant 5.000000e-01 : f32
    %212 = vector.broadcast %cst_93 : f32 to vector<8x192xf32>
    %213 = arith.mulf %212, %211 : vector<8x192xf32>
    %214 = math.tanh %213 : vector<8x192xf32>
    %cst_94 = arith.constant 5.000000e-01 : f32
    %215 = vector.broadcast %cst_94 : f32 to vector<8x192xf32>
    %216 = arith.mulf %215, %214 : vector<8x192xf32>
    %cst_95 = arith.constant 5.000000e-01 : f32
    %217 = vector.broadcast %cst_95 : f32 to vector<8x192xf32>
    %218 = arith.addf %216, %217 : vector<8x192xf32>
    %219 = vector.extract_strided_slice %210 {offsets = [0, 192], sizes = [8, 64], strides = [1, 1]} : vector<8x256xf32> to vector<8x64xf32>
    %220 = math.tanh %219 : vector<8x64xf32>
    %221 = vector.extract_strided_slice %218 {offsets = [0, 0], sizes = [8, 64], strides = [1, 1]} : vector<8x192xf32> to vector<8x64xf32>
    %222 = vector.extract_strided_slice %218 {offsets = [0, 64], sizes = [8, 64], strides = [1, 1]} : vector<8x192xf32> to vector<8x64xf32>
    %223 = vector.extract_strided_slice %218 {offsets = [0, 128], sizes = [8, 64], strides = [1, 1]} : vector<8x192xf32> to vector<8x64xf32>
    %224 = arith.mulf %222, %192 : vector<8x64xf32>
    %225 = arith.mulf %221, %220 : vector<8x64xf32>
    %226 = arith.addf %224, %225 : vector<8x64xf32>
    %227 = math.tanh %226 : vector<8x64xf32>
    %228 = arith.mulf %223, %227 : vector<8x64xf32>
    %229 = vector.extract_strided_slice %228 {offsets = [0, 0], sizes = [8, 32], strides = [1, 1]} : vector<8x64xf32> to vector<8x32xf32>
    %230 = arith.index_cast %202 : i32 to index
    %c0_96 = arith.constant 0 : index
    %231 = vector.load %arg14[%230, %c0_96] : memref<64x64xf32, #tpu.memory_space<vmem>>, vector<8x32xf32>
    tpu.vector_store %arg14[%230, %c0_96], %229 {strides = array<i32>} : memref<64x64xf32, #tpu.memory_space<vmem>>, vector<8x32xf32>,
    %232 = vector.extract_strided_slice %228 {offsets = [0, 32], sizes = [8, 32], strides = [1, 1]} : vector<8x64xf32> to vector<8x32xf32>
    %233 = arith.index_cast %205 : i32 to index
    %c32_97 = arith.constant 32 : index
    %234 = vector.load %arg14[%233, %c32_97] : memref<64x64xf32, #tpu.memory_space<vmem>>, vector<8x32xf32>
    tpu.vector_store %arg14[%233, %c32_97], %232 {strides = array<i32>} : memref<64x64xf32, #tpu.memory_space<vmem>>, vector<8x32xf32>,
    %c6_i32 = arith.constant 6 : i32
    %c8_i32_98 = arith.constant 8 : i32
    %235 = arith.muli %c6_i32, %c8_i32_98 : i32
    %236 = tpu.assume_multiple %235, 8 : i32
    %c7_i32_99 = arith.constant 7 : i32
    %237 = arith.subi %c7_i32_99, %c6_i32 : i32
    %c8_i32_100 = arith.constant 8 : i32
    %238 = arith.muli %237, %c8_i32_100 : i32
    %239 = tpu.assume_multiple %238, 8 : i32
    %240 = arith.index_cast %236 : i32 to index
    %c0_101 = arith.constant 0 : index
    %241 = vector.load %arg17[%240, %c0_101] : memref<64x256xf32, #tpu.memory_space<vmem>>, vector<8x256xf32>
    %242 = arith.truncf %228 : vector<8x64xf32> to vector<8x64xbf16>
    %cst_102 = arith.constant dense<0.000000e+00> : vector<8x256xf32>
    %243 = tpu.matmul %242, %29, %cst_102 {dimension_numbers = #tpu.dot_dimension_numbers<[1], [0], [0], [1], [0, 0, 1, 1], [], []>} : vector<8x64xbf16>, vector<64x256xbf16>, vector<8x256xf32> -> vector<8x256xf32>
    %244 = arith.addf %241, %243 : vector<8x256xf32>
    %245 = vector.extract_strided_slice %244 {offsets = [0, 0], sizes = [8, 192], strides = [1, 1]} : vector<8x256xf32> to vector<8x192xf32>
    %cst_103 = arith.constant 5.000000e-01 : f32
    %246 = vector.broadcast %cst_103 : f32 to vector<8x192xf32>
    %247 = arith.mulf %246, %245 : vector<8x192xf32>
    %248 = math.tanh %247 : vector<8x192xf32>
    %cst_104 = arith.constant 5.000000e-01 : f32
    %249 = vector.broadcast %cst_104 : f32 to vector<8x192xf32>
    %250 = arith.mulf %249, %248 : vector<8x192xf32>
    %cst_105 = arith.constant 5.000000e-01 : f32
    %251 = vector.broadcast %cst_105 : f32 to vector<8x192xf32>
    %252 = arith.addf %250, %251 : vector<8x192xf32>
    %253 = vector.extract_strided_slice %244 {offsets = [0, 192], sizes = [8, 64], strides = [1, 1]} : vector<8x256xf32> to vector<8x64xf32>
    %254 = math.tanh %253 : vector<8x64xf32>
    %255 = vector.extract_strided_slice %252 {offsets = [0, 0], sizes = [8, 64], strides = [1, 1]} : vector<8x192xf32> to vector<8x64xf32>
    %256 = vector.extract_strided_slice %252 {offsets = [0, 64], sizes = [8, 64], strides = [1, 1]} : vector<8x192xf32> to vector<8x64xf32>
    %257 = vector.extract_strided_slice %252 {offsets = [0, 128], sizes = [8, 64], strides = [1, 1]} : vector<8x192xf32> to vector<8x64xf32>
    %258 = arith.mulf %256, %226 : vector<8x64xf32>
    %259 = arith.mulf %255, %254 : vector<8x64xf32>
    %260 = arith.addf %258, %259 : vector<8x64xf32>
    %261 = math.tanh %260 : vector<8x64xf32>
    %262 = arith.mulf %257, %261 : vector<8x64xf32>
    %263 = vector.extract_strided_slice %262 {offsets = [0, 0], sizes = [8, 32], strides = [1, 1]} : vector<8x64xf32> to vector<8x32xf32>
    %264 = arith.index_cast %236 : i32 to index
    %c0_106 = arith.constant 0 : index
    %265 = vector.load %arg14[%264, %c0_106] : memref<64x64xf32, #tpu.memory_space<vmem>>, vector<8x32xf32>
    tpu.vector_store %arg14[%264, %c0_106], %263 {strides = array<i32>} : memref<64x64xf32, #tpu.memory_space<vmem>>, vector<8x32xf32>,
    %266 = vector.extract_strided_slice %262 {offsets = [0, 32], sizes = [8, 32], strides = [1, 1]} : vector<8x64xf32> to vector<8x32xf32>
    %267 = arith.index_cast %239 : i32 to index
    %c32_107 = arith.constant 32 : index
    %268 = vector.load %arg14[%267, %c32_107] : memref<64x64xf32, #tpu.memory_space<vmem>>, vector<8x32xf32>
    tpu.vector_store %arg14[%267, %c32_107], %266 {strides = array<i32>} : memref<64x64xf32, #tpu.memory_space<vmem>>, vector<8x32xf32>,
    %c7_i32_108 = arith.constant 7 : i32
    %c8_i32_109 = arith.constant 8 : i32
    %269 = arith.muli %c7_i32_108, %c8_i32_109 : i32
    %270 = tpu.assume_multiple %269, 8 : i32
    %c7_i32_110 = arith.constant 7 : i32
    %271 = arith.subi %c7_i32_110, %c7_i32_108 : i32
    %c8_i32_111 = arith.constant 8 : i32
    %272 = arith.muli %271, %c8_i32_111 : i32
    %273 = tpu.assume_multiple %272, 8 : i32
    %274 = arith.index_cast %270 : i32 to index
    %c0_112 = arith.constant 0 : index
    %275 = vector.load %arg17[%274, %c0_112] : memref<64x256xf32, #tpu.memory_space<vmem>>, vector<8x256xf32>
    %276 = arith.truncf %262 : vector<8x64xf32> to vector<8x64xbf16>
    %cst_113 = arith.constant dense<0.000000e+00> : vector<8x256xf32>
    %277 = tpu.matmul %276, %29, %cst_113 {dimension_numbers = #tpu.dot_dimension_numbers<[1], [0], [0], [1], [0, 0, 1, 1], [], []>} : vector<8x64xbf16>, vector<64x256xbf16>, vector<8x256xf32> -> vector<8x256xf32>
    %278 = arith.addf %275, %277 : vector<8x256xf32>
    %279 = vector.extract_strided_slice %278 {offsets = [0, 0], sizes = [8, 192], strides = [1, 1]} : vector<8x256xf32> to vector<8x192xf32>
    %cst_114 = arith.constant 5.000000e-01 : f32
    %280 = vector.broadcast %cst_114 : f32 to vector<8x192xf32>
    %281 = arith.mulf %280, %279 : vector<8x192xf32>
    %282 = math.tanh %281 : vector<8x192xf32>
    %cst_115 = arith.constant 5.000000e-01 : f32
    %283 = vector.broadcast %cst_115 : f32 to vector<8x192xf32>
    %284 = arith.mulf %283, %282 : vector<8x192xf32>
    %cst_116 = arith.constant 5.000000e-01 : f32
    %285 = vector.broadcast %cst_116 : f32 to vector<8x192xf32>
    %286 = arith.addf %284, %285 : vector<8x192xf32>
    %287 = vector.extract_strided_slice %278 {offsets = [0, 192], sizes = [8, 64], strides = [1, 1]} : vector<8x256xf32> to vector<8x64xf32>
    %288 = math.tanh %287 : vector<8x64xf32>
    %289 = vector.extract_strided_slice %286 {offsets = [0, 0], sizes = [8, 64], strides = [1, 1]} : vector<8x192xf32> to vector<8x64xf32>
    %290 = vector.extract_strided_slice %286 {offsets = [0, 64], sizes = [8, 64], strides = [1, 1]} : vector<8x192xf32> to vector<8x64xf32>
    %291 = vector.extract_strided_slice %286 {offsets = [0, 128], sizes = [8, 64], strides = [1, 1]} : vector<8x192xf32> to vector<8x64xf32>
    %292 = arith.mulf %290, %260 : vector<8x64xf32>
    %293 = arith.mulf %289, %288 : vector<8x64xf32>
    %294 = arith.addf %292, %293 : vector<8x64xf32>
    %295 = math.tanh %294 : vector<8x64xf32>
    %296 = arith.mulf %291, %295 : vector<8x64xf32>
    %297 = vector.extract_strided_slice %296 {offsets = [0, 0], sizes = [8, 32], strides = [1, 1]} : vector<8x64xf32> to vector<8x32xf32>
    %298 = arith.index_cast %270 : i32 to index
    %c0_117 = arith.constant 0 : index
    %299 = vector.load %arg14[%298, %c0_117] : memref<64x64xf32, #tpu.memory_space<vmem>>, vector<8x32xf32>
    tpu.vector_store %arg14[%298, %c0_117], %297 {strides = array<i32>} : memref<64x64xf32, #tpu.memory_space<vmem>>, vector<8x32xf32>,
    %300 = vector.extract_strided_slice %296 {offsets = [0, 32], sizes = [8, 32], strides = [1, 1]} : vector<8x64xf32> to vector<8x32xf32>
    %301 = arith.index_cast %273 : i32 to index
    %c32_118 = arith.constant 32 : index
    %302 = vector.load %arg14[%301, %c32_118] : memref<64x64xf32, #tpu.memory_space<vmem>>, vector<8x32xf32>
    tpu.vector_store %arg14[%301, %c32_118], %300 {strides = array<i32>} : memref<64x64xf32, #tpu.memory_space<vmem>>, vector<8x32xf32>,
    %c8_i32_119 = arith.constant 8 : i32
    %c56_120 = arith.constant 56 : index
    %c0_121 = arith.constant 0 : index
    %303 = vector.load %arg14[%c56_120, %c0_121] : memref<64x64xf32, #tpu.memory_space<vmem>>, vector<8x64xf32>
    %c0_122 = arith.constant 0 : index
    %c0_123 = arith.constant 0 : index
    %304 = vector.load %arg16[%c0_122, %c0_123] : memref<64x64xf32, #tpu.memory_space<vmem>>, vector<8x64xf32>
    tpu.vector_store %arg16[%c0_122, %c0_123], %303 {strides = array<i32>} : memref<64x64xf32, #tpu.memory_space<vmem>>, vector<8x64xf32>,
    %c48_124 = arith.constant 48 : index
    %c0_125 = arith.constant 0 : index
    %305 = vector.load %arg14[%c48_124, %c0_125] : memref<64x64xf32, #tpu.memory_space<vmem>>, vector<8x64xf32>
    %c8_126 = arith.constant 8 : index
    %c0_127 = arith.constant 0 : index
    %306 = vector.load %arg16[%c8_126, %c0_127] : memref<64x64xf32, #tpu.memory_space<vmem>>, vector<8x64xf32>
    tpu.vector_store %arg16[%c8_126, %c0_127], %305 {strides = array<i32>} : memref<64x64xf32, #tpu.memory_space<vmem>>, vector<8x64xf32>,
    %c40_128 = arith.constant 40 : index
    %c0_129 = arith.constant 0 : index
    %307 = vector.load %arg14[%c40_128, %c0_129] : memref<64x64xf32, #tpu.memory_space<vmem>>, vector<8x64xf32>
    %c16_130 = arith.constant 16 : index
    %c0_131 = arith.constant 0 : index
    %308 = vector.load %arg16[%c16_130, %c0_131] : memref<64x64xf32, #tpu.memory_space<vmem>>, vector<8x64xf32>
    tpu.vector_store %arg16[%c16_130, %c0_131], %307 {strides = array<i32>} : memref<64x64xf32, #tpu.memory_space<vmem>>, vector<8x64xf32>,
    %c32_132 = arith.constant 32 : index
    %c0_133 = arith.constant 0 : index
    %309 = vector.load %arg14[%c32_132, %c0_133] : memref<64x64xf32, #tpu.memory_space<vmem>>, vector<8x64xf32>
    %c24_134 = arith.constant 24 : index
    %c0_135 = arith.constant 0 : index
    %310 = vector.load %arg16[%c24_134, %c0_135] : memref<64x64xf32, #tpu.memory_space<vmem>>, vector<8x64xf32>
    tpu.vector_store %arg16[%c24_134, %c0_135], %309 {strides = array<i32>} : memref<64x64xf32, #tpu.memory_space<vmem>>, vector<8x64xf32>,
    %c24_136 = arith.constant 24 : index
    %c0_137 = arith.constant 0 : index
    %311 = vector.load %arg14[%c24_136, %c0_137] : memref<64x64xf32, #tpu.memory_space<vmem>>, vector<8x64xf32>
    %c32_138 = arith.constant 32 : index
    %c0_139 = arith.constant 0 : index
    %312 = vector.load %arg16[%c32_138, %c0_139] : memref<64x64xf32, #tpu.memory_space<vmem>>, vector<8x64xf32>
    tpu.vector_store %arg16[%c32_138, %c0_139], %311 {strides = array<i32>} : memref<64x64xf32, #tpu.memory_space<vmem>>, vector<8x64xf32>,
    %c16_140 = arith.constant 16 : index
    %c0_141 = arith.constant 0 : index
    %313 = vector.load %arg14[%c16_140, %c0_141] : memref<64x64xf32, #tpu.memory_space<vmem>>, vector<8x64xf32>
    %c40_142 = arith.constant 40 : index
    %c0_143 = arith.constant 0 : index
    %314 = vector.load %arg16[%c40_142, %c0_143] : memref<64x64xf32, #tpu.memory_space<vmem>>, vector<8x64xf32>
    tpu.vector_store %arg16[%c40_142, %c0_143], %313 {strides = array<i32>} : memref<64x64xf32, #tpu.memory_space<vmem>>, vector<8x64xf32>,
    %c8_144 = arith.constant 8 : index
    %c0_145 = arith.constant 0 : index
    %315 = vector.load %arg14[%c8_144, %c0_145] : memref<64x64xf32, #tpu.memory_space<vmem>>, vector<8x64xf32>
    %c48_146 = arith.constant 48 : index
    %c0_147 = arith.constant 0 : index
    %316 = vector.load %arg16[%c48_146, %c0_147] : memref<64x64xf32, #tpu.memory_space<vmem>>, vector<8x64xf32>
    tpu.vector_store %arg16[%c48_146, %c0_147], %315 {strides = array<i32>} : memref<64x64xf32, #tpu.memory_space<vmem>>, vector<8x64xf32>,
    %c0_148 = arith.constant 0 : index
    %c0_149 = arith.constant 0 : index
    %317 = vector.load %arg14[%c0_148, %c0_149] : memref<64x64xf32, #tpu.memory_space<vmem>>, vector<8x64xf32>
    %c56_150 = arith.constant 56 : index
    %c0_151 = arith.constant 0 : index
    %318 = vector.load %arg16[%c56_150, %c0_151] : memref<64x64xf32, #tpu.memory_space<vmem>>, vector<8x64xf32>
    tpu.vector_store %arg16[%c56_150, %c0_151], %317 {strides = array<i32>} : memref<64x64xf32, #tpu.memory_space<vmem>>, vector<8x64xf32>,
    %c0_152 = arith.constant 0 : index
    %c0_153 = arith.constant 0 : index
    %319 = vector.load %arg14[%c0_152, %c0_153] : memref<64x64xf32, #tpu.memory_space<vmem>>, vector<64x64xf32>
    %320 = arith.truncf %319 : vector<64x64xf32> to vector<64x64xbf16>
    %c0_154 = arith.constant 0 : index
    %c0_155 = arith.constant 0 : index
    %321 = vector.load %arg16[%c0_154, %c0_155] : memref<64x64xf32, #tpu.memory_space<vmem>>, vector<64x64xf32>
    %322 = arith.truncf %321 : vector<64x64xf32> to vector<64x64xbf16>
    %c0_156 = arith.constant 0 : index
    %c0_157 = arith.constant 0 : index
    %323 = vector.load %arg5[%c0_156, %c0_157] : memref<128x256xbf16, #tpu.memory_space<vmem>>, vector<64x256xbf16>
    %cst_158 = arith.constant dense<0.000000e+00> : vector<64x256xf32>
    %324 = tpu.matmul %320, %323, %cst_158 {dimension_numbers = #tpu.dot_dimension_numbers<[1], [0], [0], [1], [0, 0, 1, 1], [], []>} : vector<64x64xbf16>, vector<64x256xbf16>, vector<64x256xf32> -> vector<64x256xf32>
    %c64 = arith.constant 64 : index
    %c0_159 = arith.constant 0 : index
    %325 = vector.load %arg5[%c64, %c0_159] : memref<128x256xbf16, #tpu.memory_space<vmem>>, vector<64x256xbf16>
    %cst_160 = arith.constant dense<0.000000e+00> : vector<64x256xf32>
    %326 = tpu.matmul %322, %325, %cst_160 {dimension_numbers = #tpu.dot_dimension_numbers<[1], [0], [0], [1], [0, 0, 1, 1], [], []>} : vector<64x64xbf16>, vector<64x256xbf16>, vector<64x256xf32> -> vector<64x256xf32>
    %327 = arith.addf %324, %326 : vector<64x256xf32>
    %c0_161 = arith.constant 0 : index
    %c0_162 = arith.constant 0 : index
    %328 = vector.load %arg7[%c0_161, %c0_162] : memref<1x256xf32, #tpu.memory_space<vmem>>, vector<1x256xf32>
    %329 = vector.broadcast %328 : vector<1x256xf32> to vector<64x256xf32>
    %330 = arith.addf %327, %329 : vector<64x256xf32>
    %c0_163 = arith.constant 0 : index
    %c0_164 = arith.constant 0 : index
    %331 = vector.load %arg17[%c0_163, %c0_164] : memref<64x256xf32, #tpu.memory_space<vmem>>, vector<64x256xf32>
    tpu.vector_store %arg17[%c0_163, %c0_164], %330 {strides = array<i32>} : memref<64x256xf32, #tpu.memory_space<vmem>>, vector<64x256xf32>,
    %c0_165 = arith.constant 0 : index
    %c0_166 = arith.constant 0 : index
    %332 = vector.load %arg6[%c0_165, %c0_166] : memref<64x256xbf16, #tpu.memory_space<vmem>>, vector<64x256xbf16>
    %cst_167 = arith.constant 0.000000e+00 : f32
    %333 = vector.broadcast %cst_167 : f32 to vector<8x64xf32>
    %c0_i32_168 = arith.constant 0 : i32
    %c8_i32_169 = arith.constant 8 : i32
    %334 = arith.muli %c0_i32_168, %c8_i32_169 : i32
    %335 = tpu.assume_multiple %334, 8 : i32
    %c7_i32_170 = arith.constant 7 : i32
    %336 = arith.subi %c7_i32_170, %c0_i32_168 : i32
    %c8_i32_171 = arith.constant 8 : i32
    %337 = arith.muli %336, %c8_i32_171 : i32
    %338 = tpu.assume_multiple %337, 8 : i32
    %339 = arith.index_cast %335 : i32 to index
    %c0_172 = arith.constant 0 : index
    %340 = vector.load %arg17[%339, %c0_172] : memref<64x256xf32, #tpu.memory_space<vmem>>, vector<8x256xf32>
    %341 = arith.truncf %333 : vector<8x64xf32> to vector<8x64xbf16>
    %cst_173 = arith.constant dense<0.000000e+00> : vector<8x256xf32>
    %342 = tpu.matmul %341, %332, %cst_173 {dimension_numbers = #tpu.dot_dimension_numbers<[1], [0], [0], [1], [0, 0, 1, 1], [], []>} : vector<8x64xbf16>, vector<64x256xbf16>, vector<8x256xf32> -> vector<8x256xf32>
    %343 = arith.addf %340, %342 : vector<8x256xf32>
    %344 = vector.extract_strided_slice %343 {offsets = [0, 0], sizes = [8, 192], strides = [1, 1]} : vector<8x256xf32> to vector<8x192xf32>
    %cst_174 = arith.constant 5.000000e-01 : f32
    %345 = vector.broadcast %cst_174 : f32 to vector<8x192xf32>
    %346 = arith.mulf %345, %344 : vector<8x192xf32>
    %347 = math.tanh %346 : vector<8x192xf32>
    %cst_175 = arith.constant 5.000000e-01 : f32
    %348 = vector.broadcast %cst_175 : f32 to vector<8x192xf32>
    %349 = arith.mulf %348, %347 : vector<8x192xf32>
    %cst_176 = arith.constant 5.000000e-01 : f32
    %350 = vector.broadcast %cst_176 : f32 to vector<8x192xf32>
    %351 = arith.addf %349, %350 : vector<8x192xf32>
    %352 = vector.extract_strided_slice %343 {offsets = [0, 192], sizes = [8, 64], strides = [1, 1]} : vector<8x256xf32> to vector<8x64xf32>
    %353 = math.tanh %352 : vector<8x64xf32>
    %354 = vector.extract_strided_slice %351 {offsets = [0, 0], sizes = [8, 64], strides = [1, 1]} : vector<8x192xf32> to vector<8x64xf32>
    %355 = vector.extract_strided_slice %351 {offsets = [0, 64], sizes = [8, 64], strides = [1, 1]} : vector<8x192xf32> to vector<8x64xf32>
    %356 = vector.extract_strided_slice %351 {offsets = [0, 128], sizes = [8, 64], strides = [1, 1]} : vector<8x192xf32> to vector<8x64xf32>
    %357 = arith.mulf %355, %333 : vector<8x64xf32>
    %358 = arith.mulf %354, %353 : vector<8x64xf32>
    %359 = arith.addf %357, %358 : vector<8x64xf32>
    %360 = math.tanh %359 : vector<8x64xf32>
    %361 = arith.mulf %356, %360 : vector<8x64xf32>
    %362 = vector.extract_strided_slice %361 {offsets = [0, 0], sizes = [8, 32], strides = [1, 1]} : vector<8x64xf32> to vector<8x32xf32>
    %363 = arith.index_cast %335 : i32 to index
    %c0_177 = arith.constant 0 : index
    %364 = vector.load %arg15[%363, %c0_177] : memref<64x64xf32, #tpu.memory_space<vmem>>, vector<8x32xf32>
    tpu.vector_store %arg15[%363, %c0_177], %362 {strides = array<i32>} : memref<64x64xf32, #tpu.memory_space<vmem>>, vector<8x32xf32>,
    %365 = vector.extract_strided_slice %361 {offsets = [0, 32], sizes = [8, 32], strides = [1, 1]} : vector<8x64xf32> to vector<8x32xf32>
    %366 = arith.index_cast %338 : i32 to index
    %c32_178 = arith.constant 32 : index
    %367 = vector.load %arg15[%366, %c32_178] : memref<64x64xf32, #tpu.memory_space<vmem>>, vector<8x32xf32>
    tpu.vector_store %arg15[%366, %c32_178], %365 {strides = array<i32>} : memref<64x64xf32, #tpu.memory_space<vmem>>, vector<8x32xf32>,
    %c1_i32_179 = arith.constant 1 : i32
    %c8_i32_180 = arith.constant 8 : i32
    %368 = arith.muli %c1_i32_179, %c8_i32_180 : i32
    %369 = tpu.assume_multiple %368, 8 : i32
    %c7_i32_181 = arith.constant 7 : i32
    %370 = arith.subi %c7_i32_181, %c1_i32_179 : i32
    %c8_i32_182 = arith.constant 8 : i32
    %371 = arith.muli %370, %c8_i32_182 : i32
    %372 = tpu.assume_multiple %371, 8 : i32
    %373 = arith.index_cast %369 : i32 to index
    %c0_183 = arith.constant 0 : index
    %374 = vector.load %arg17[%373, %c0_183] : memref<64x256xf32, #tpu.memory_space<vmem>>, vector<8x256xf32>
    %375 = arith.truncf %361 : vector<8x64xf32> to vector<8x64xbf16>
    %cst_184 = arith.constant dense<0.000000e+00> : vector<8x256xf32>
    %376 = tpu.matmul %375, %332, %cst_184 {dimension_numbers = #tpu.dot_dimension_numbers<[1], [0], [0], [1], [0, 0, 1, 1], [], []>} : vector<8x64xbf16>, vector<64x256xbf16>, vector<8x256xf32> -> vector<8x256xf32>
    %377 = arith.addf %374, %376 : vector<8x256xf32>
    %378 = vector.extract_strided_slice %377 {offsets = [0, 0], sizes = [8, 192], strides = [1, 1]} : vector<8x256xf32> to vector<8x192xf32>
    %cst_185 = arith.constant 5.000000e-01 : f32
    %379 = vector.broadcast %cst_185 : f32 to vector<8x192xf32>
    %380 = arith.mulf %379, %378 : vector<8x192xf32>
    %381 = math.tanh %380 : vector<8x192xf32>
    %cst_186 = arith.constant 5.000000e-01 : f32
    %382 = vector.broadcast %cst_186 : f32 to vector<8x192xf32>
    %383 = arith.mulf %382, %381 : vector<8x192xf32>
    %cst_187 = arith.constant 5.000000e-01 : f32
    %384 = vector.broadcast %cst_187 : f32 to vector<8x192xf32>
    %385 = arith.addf %383, %384 : vector<8x192xf32>
    %386 = vector.extract_strided_slice %377 {offsets = [0, 192], sizes = [8, 64], strides = [1, 1]} : vector<8x256xf32> to vector<8x64xf32>
    %387 = math.tanh %386 : vector<8x64xf32>
    %388 = vector.extract_strided_slice %385 {offsets = [0, 0], sizes = [8, 64], strides = [1, 1]} : vector<8x192xf32> to vector<8x64xf32>
    %389 = vector.extract_strided_slice %385 {offsets = [0, 64], sizes = [8, 64], strides = [1, 1]} : vector<8x192xf32> to vector<8x64xf32>
    %390 = vector.extract_strided_slice %385 {offsets = [0, 128], sizes = [8, 64], strides = [1, 1]} : vector<8x192xf32> to vector<8x64xf32>
    %391 = arith.mulf %389, %359 : vector<8x64xf32>
    %392 = arith.mulf %388, %387 : vector<8x64xf32>
    %393 = arith.addf %391, %392 : vector<8x64xf32>
    %394 = math.tanh %393 : vector<8x64xf32>
    %395 = arith.mulf %390, %394 : vector<8x64xf32>
    %396 = vector.extract_strided_slice %395 {offsets = [0, 0], sizes = [8, 32], strides = [1, 1]} : vector<8x64xf32> to vector<8x32xf32>
    %397 = arith.index_cast %369 : i32 to index
    %c0_188 = arith.constant 0 : index
    %398 = vector.load %arg15[%397, %c0_188] : memref<64x64xf32, #tpu.memory_space<vmem>>, vector<8x32xf32>
    tpu.vector_store %arg15[%397, %c0_188], %396 {strides = array<i32>} : memref<64x64xf32, #tpu.memory_space<vmem>>, vector<8x32xf32>,
    %399 = vector.extract_strided_slice %395 {offsets = [0, 32], sizes = [8, 32], strides = [1, 1]} : vector<8x64xf32> to vector<8x32xf32>
    %400 = arith.index_cast %372 : i32 to index
    %c32_189 = arith.constant 32 : index
    %401 = vector.load %arg15[%400, %c32_189] : memref<64x64xf32, #tpu.memory_space<vmem>>, vector<8x32xf32>
    tpu.vector_store %arg15[%400, %c32_189], %399 {strides = array<i32>} : memref<64x64xf32, #tpu.memory_space<vmem>>, vector<8x32xf32>,
    %c2_i32_190 = arith.constant 2 : i32
    %c8_i32_191 = arith.constant 8 : i32
    %402 = arith.muli %c2_i32_190, %c8_i32_191 : i32
    %403 = tpu.assume_multiple %402, 8 : i32
    %c7_i32_192 = arith.constant 7 : i32
    %404 = arith.subi %c7_i32_192, %c2_i32_190 : i32
    %c8_i32_193 = arith.constant 8 : i32
    %405 = arith.muli %404, %c8_i32_193 : i32
    %406 = tpu.assume_multiple %405, 8 : i32
    %407 = arith.index_cast %403 : i32 to index
    %c0_194 = arith.constant 0 : index
    %408 = vector.load %arg17[%407, %c0_194] : memref<64x256xf32, #tpu.memory_space<vmem>>, vector<8x256xf32>
    %409 = arith.truncf %395 : vector<8x64xf32> to vector<8x64xbf16>
    %cst_195 = arith.constant dense<0.000000e+00> : vector<8x256xf32>
    %410 = tpu.matmul %409, %332, %cst_195 {dimension_numbers = #tpu.dot_dimension_numbers<[1], [0], [0], [1], [0, 0, 1, 1], [], []>} : vector<8x64xbf16>, vector<64x256xbf16>, vector<8x256xf32> -> vector<8x256xf32>
    %411 = arith.addf %408, %410 : vector<8x256xf32>
    %412 = vector.extract_strided_slice %411 {offsets = [0, 0], sizes = [8, 192], strides = [1, 1]} : vector<8x256xf32> to vector<8x192xf32>
    %cst_196 = arith.constant 5.000000e-01 : f32
    %413 = vector.broadcast %cst_196 : f32 to vector<8x192xf32>
    %414 = arith.mulf %413, %412 : vector<8x192xf32>
    %415 = math.tanh %414 : vector<8x192xf32>
    %cst_197 = arith.constant 5.000000e-01 : f32
    %416 = vector.broadcast %cst_197 : f32 to vector<8x192xf32>
    %417 = arith.mulf %416, %415 : vector<8x192xf32>
    %cst_198 = arith.constant 5.000000e-01 : f32
    %418 = vector.broadcast %cst_198 : f32 to vector<8x192xf32>
    %419 = arith.addf %417, %418 : vector<8x192xf32>
    %420 = vector.extract_strided_slice %411 {offsets = [0, 192], sizes = [8, 64], strides = [1, 1]} : vector<8x256xf32> to vector<8x64xf32>
    %421 = math.tanh %420 : vector<8x64xf32>
    %422 = vector.extract_strided_slice %419 {offsets = [0, 0], sizes = [8, 64], strides = [1, 1]} : vector<8x192xf32> to vector<8x64xf32>
    %423 = vector.extract_strided_slice %419 {offsets = [0, 64], sizes = [8, 64], strides = [1, 1]} : vector<8x192xf32> to vector<8x64xf32>
    %424 = vector.extract_strided_slice %419 {offsets = [0, 128], sizes = [8, 64], strides = [1, 1]} : vector<8x192xf32> to vector<8x64xf32>
    %425 = arith.mulf %423, %393 : vector<8x64xf32>
    %426 = arith.mulf %422, %421 : vector<8x64xf32>
    %427 = arith.addf %425, %426 : vector<8x64xf32>
    %428 = math.tanh %427 : vector<8x64xf32>
    %429 = arith.mulf %424, %428 : vector<8x64xf32>
    %430 = vector.extract_strided_slice %429 {offsets = [0, 0], sizes = [8, 32], strides = [1, 1]} : vector<8x64xf32> to vector<8x32xf32>
    %431 = arith.index_cast %403 : i32 to index
    %c0_199 = arith.constant 0 : index
    %432 = vector.load %arg15[%431, %c0_199] : memref<64x64xf32, #tpu.memory_space<vmem>>, vector<8x32xf32>
    tpu.vector_store %arg15[%431, %c0_199], %430 {strides = array<i32>} : memref<64x64xf32, #tpu.memory_space<vmem>>, vector<8x32xf32>,
    %433 = vector.extract_strided_slice %429 {offsets = [0, 32], sizes = [8, 32], strides = [1, 1]} : vector<8x64xf32> to vector<8x32xf32>
    %434 = arith.index_cast %406 : i32 to index
    %c32_200 = arith.constant 32 : index
    %435 = vector.load %arg15[%434, %c32_200] : memref<64x64xf32, #tpu.memory_space<vmem>>, vector<8x32xf32>
    tpu.vector_store %arg15[%434, %c32_200], %433 {strides = array<i32>} : memref<64x64xf32, #tpu.memory_space<vmem>>, vector<8x32xf32>,
    %c3_i32_201 = arith.constant 3 : i32
    %c8_i32_202 = arith.constant 8 : i32
    %436 = arith.muli %c3_i32_201, %c8_i32_202 : i32
    %437 = tpu.assume_multiple %436, 8 : i32
    %c7_i32_203 = arith.constant 7 : i32
    %438 = arith.subi %c7_i32_203, %c3_i32_201 : i32
    %c8_i32_204 = arith.constant 8 : i32
    %439 = arith.muli %438, %c8_i32_204 : i32
    %440 = tpu.assume_multiple %439, 8 : i32
    %441 = arith.index_cast %437 : i32 to index
    %c0_205 = arith.constant 0 : index
    %442 = vector.load %arg17[%441, %c0_205] : memref<64x256xf32, #tpu.memory_space<vmem>>, vector<8x256xf32>
    %443 = arith.truncf %429 : vector<8x64xf32> to vector<8x64xbf16>
    %cst_206 = arith.constant dense<0.000000e+00> : vector<8x256xf32>
    %444 = tpu.matmul %443, %332, %cst_206 {dimension_numbers = #tpu.dot_dimension_numbers<[1], [0], [0], [1], [0, 0, 1, 1], [], []>} : vector<8x64xbf16>, vector<64x256xbf16>, vector<8x256xf32> -> vector<8x256xf32>
    %445 = arith.addf %442, %444 : vector<8x256xf32>
    %446 = vector.extract_strided_slice %445 {offsets = [0, 0], sizes = [8, 192], strides = [1, 1]} : vector<8x256xf32> to vector<8x192xf32>
    %cst_207 = arith.constant 5.000000e-01 : f32
    %447 = vector.broadcast %cst_207 : f32 to vector<8x192xf32>
    %448 = arith.mulf %447, %446 : vector<8x192xf32>
    %449 = math.tanh %448 : vector<8x192xf32>
    %cst_208 = arith.constant 5.000000e-01 : f32
    %450 = vector.broadcast %cst_208 : f32 to vector<8x192xf32>
    %451 = arith.mulf %450, %449 : vector<8x192xf32>
    %cst_209 = arith.constant 5.000000e-01 : f32
    %452 = vector.broadcast %cst_209 : f32 to vector<8x192xf32>
    %453 = arith.addf %451, %452 : vector<8x192xf32>
    %454 = vector.extract_strided_slice %445 {offsets = [0, 192], sizes = [8, 64], strides = [1, 1]} : vector<8x256xf32> to vector<8x64xf32>
    %455 = math.tanh %454 : vector<8x64xf32>
    %456 = vector.extract_strided_slice %453 {offsets = [0, 0], sizes = [8, 64], strides = [1, 1]} : vector<8x192xf32> to vector<8x64xf32>
    %457 = vector.extract_strided_slice %453 {offsets = [0, 64], sizes = [8, 64], strides = [1, 1]} : vector<8x192xf32> to vector<8x64xf32>
    %458 = vector.extract_strided_slice %453 {offsets = [0, 128], sizes = [8, 64], strides = [1, 1]} : vector<8x192xf32> to vector<8x64xf32>
    %459 = arith.mulf %457, %427 : vector<8x64xf32>
    %460 = arith.mulf %456, %455 : vector<8x64xf32>
    %461 = arith.addf %459, %460 : vector<8x64xf32>
    %462 = math.tanh %461 : vector<8x64xf32>
    %463 = arith.mulf %458, %462 : vector<8x64xf32>
    %464 = vector.extract_strided_slice %463 {offsets = [0, 0], sizes = [8, 32], strides = [1, 1]} : vector<8x64xf32> to vector<8x32xf32>
    %465 = arith.index_cast %437 : i32 to index
    %c0_210 = arith.constant 0 : index
    %466 = vector.load %arg15[%465, %c0_210] : memref<64x64xf32, #tpu.memory_space<vmem>>, vector<8x32xf32>
    tpu.vector_store %arg15[%465, %c0_210], %464 {strides = array<i32>} : memref<64x64xf32, #tpu.memory_space<vmem>>, vector<8x32xf32>,
    %467 = vector.extract_strided_slice %463 {offsets = [0, 32], sizes = [8, 32], strides = [1, 1]} : vector<8x64xf32> to vector<8x32xf32>
    %468 = arith.index_cast %440 : i32 to index
    %c32_211 = arith.constant 32 : index
    %469 = vector.load %arg15[%468, %c32_211] : memref<64x64xf32, #tpu.memory_space<vmem>>, vector<8x32xf32>
    tpu.vector_store %arg15[%468, %c32_211], %467 {strides = array<i32>} : memref<64x64xf32, #tpu.memory_space<vmem>>, vector<8x32xf32>,
    %c4_i32_212 = arith.constant 4 : i32
    %c8_i32_213 = arith.constant 8 : i32
    %470 = arith.muli %c4_i32_212, %c8_i32_213 : i32
    %471 = tpu.assume_multiple %470, 8 : i32
    %c7_i32_214 = arith.constant 7 : i32
    %472 = arith.subi %c7_i32_214, %c4_i32_212 : i32
    %c8_i32_215 = arith.constant 8 : i32
    %473 = arith.muli %472, %c8_i32_215 : i32
    %474 = tpu.assume_multiple %473, 8 : i32
    %475 = arith.index_cast %471 : i32 to index
    %c0_216 = arith.constant 0 : index
    %476 = vector.load %arg17[%475, %c0_216] : memref<64x256xf32, #tpu.memory_space<vmem>>, vector<8x256xf32>
    %477 = arith.truncf %463 : vector<8x64xf32> to vector<8x64xbf16>
    %cst_217 = arith.constant dense<0.000000e+00> : vector<8x256xf32>
    %478 = tpu.matmul %477, %332, %cst_217 {dimension_numbers = #tpu.dot_dimension_numbers<[1], [0], [0], [1], [0, 0, 1, 1], [], []>} : vector<8x64xbf16>, vector<64x256xbf16>, vector<8x256xf32> -> vector<8x256xf32>
    %479 = arith.addf %476, %478 : vector<8x256xf32>
    %480 = vector.extract_strided_slice %479 {offsets = [0, 0], sizes = [8, 192], strides = [1, 1]} : vector<8x256xf32> to vector<8x192xf32>
    %cst_218 = arith.constant 5.000000e-01 : f32
    %481 = vector.broadcast %cst_218 : f32 to vector<8x192xf32>
    %482 = arith.mulf %481, %480 : vector<8x192xf32>
    %483 = math.tanh %482 : vector<8x192xf32>
    %cst_219 = arith.constant 5.000000e-01 : f32
    %484 = vector.broadcast %cst_219 : f32 to vector<8x192xf32>
    %485 = arith.mulf %484, %483 : vector<8x192xf32>
    %cst_220 = arith.constant 5.000000e-01 : f32
    %486 = vector.broadcast %cst_220 : f32 to vector<8x192xf32>
    %487 = arith.addf %485, %486 : vector<8x192xf32>
    %488 = vector.extract_strided_slice %479 {offsets = [0, 192], sizes = [8, 64], strides = [1, 1]} : vector<8x256xf32> to vector<8x64xf32>
    %489 = math.tanh %488 : vector<8x64xf32>
    %490 = vector.extract_strided_slice %487 {offsets = [0, 0], sizes = [8, 64], strides = [1, 1]} : vector<8x192xf32> to vector<8x64xf32>
    %491 = vector.extract_strided_slice %487 {offsets = [0, 64], sizes = [8, 64], strides = [1, 1]} : vector<8x192xf32> to vector<8x64xf32>
    %492 = vector.extract_strided_slice %487 {offsets = [0, 128], sizes = [8, 64], strides = [1, 1]} : vector<8x192xf32> to vector<8x64xf32>
    %493 = arith.mulf %491, %461 : vector<8x64xf32>
    %494 = arith.mulf %490, %489 : vector<8x64xf32>
    %495 = arith.addf %493, %494 : vector<8x64xf32>
    %496 = math.tanh %495 : vector<8x64xf32>
    %497 = arith.mulf %492, %496 : vector<8x64xf32>
    %498 = vector.extract_strided_slice %497 {offsets = [0, 0], sizes = [8, 32], strides = [1, 1]} : vector<8x64xf32> to vector<8x32xf32>
    %499 = arith.index_cast %471 : i32 to index
    %c0_221 = arith.constant 0 : index
    %500 = vector.load %arg15[%499, %c0_221] : memref<64x64xf32, #tpu.memory_space<vmem>>, vector<8x32xf32>
    tpu.vector_store %arg15[%499, %c0_221], %498 {strides = array<i32>} : memref<64x64xf32, #tpu.memory_space<vmem>>, vector<8x32xf32>,
    %501 = vector.extract_strided_slice %497 {offsets = [0, 32], sizes = [8, 32], strides = [1, 1]} : vector<8x64xf32> to vector<8x32xf32>
    %502 = arith.index_cast %474 : i32 to index
    %c32_222 = arith.constant 32 : index
    %503 = vector.load %arg15[%502, %c32_222] : memref<64x64xf32, #tpu.memory_space<vmem>>, vector<8x32xf32>
    tpu.vector_store %arg15[%502, %c32_222], %501 {strides = array<i32>} : memref<64x64xf32, #tpu.memory_space<vmem>>, vector<8x32xf32>,
    %c5_i32_223 = arith.constant 5 : i32
    %c8_i32_224 = arith.constant 8 : i32
    %504 = arith.muli %c5_i32_223, %c8_i32_224 : i32
    %505 = tpu.assume_multiple %504, 8 : i32
    %c7_i32_225 = arith.constant 7 : i32
    %506 = arith.subi %c7_i32_225, %c5_i32_223 : i32
    %c8_i32_226 = arith.constant 8 : i32
    %507 = arith.muli %506, %c8_i32_226 : i32
    %508 = tpu.assume_multiple %507, 8 : i32
    %509 = arith.index_cast %505 : i32 to index
    %c0_227 = arith.constant 0 : index
    %510 = vector.load %arg17[%509, %c0_227] : memref<64x256xf32, #tpu.memory_space<vmem>>, vector<8x256xf32>
    %511 = arith.truncf %497 : vector<8x64xf32> to vector<8x64xbf16>
    %cst_228 = arith.constant dense<0.000000e+00> : vector<8x256xf32>
    %512 = tpu.matmul %511, %332, %cst_228 {dimension_numbers = #tpu.dot_dimension_numbers<[1], [0], [0], [1], [0, 0, 1, 1], [], []>} : vector<8x64xbf16>, vector<64x256xbf16>, vector<8x256xf32> -> vector<8x256xf32>
    %513 = arith.addf %510, %512 : vector<8x256xf32>
    %514 = vector.extract_strided_slice %513 {offsets = [0, 0], sizes = [8, 192], strides = [1, 1]} : vector<8x256xf32> to vector<8x192xf32>
    %cst_229 = arith.constant 5.000000e-01 : f32
    %515 = vector.broadcast %cst_229 : f32 to vector<8x192xf32>
    %516 = arith.mulf %515, %514 : vector<8x192xf32>
    %517 = math.tanh %516 : vector<8x192xf32>
    %cst_230 = arith.constant 5.000000e-01 : f32
    %518 = vector.broadcast %cst_230 : f32 to vector<8x192xf32>
    %519 = arith.mulf %518, %517 : vector<8x192xf32>
    %cst_231 = arith.constant 5.000000e-01 : f32
    %520 = vector.broadcast %cst_231 : f32 to vector<8x192xf32>
    %521 = arith.addf %519, %520 : vector<8x192xf32>
    %522 = vector.extract_strided_slice %513 {offsets = [0, 192], sizes = [8, 64], strides = [1, 1]} : vector<8x256xf32> to vector<8x64xf32>
    %523 = math.tanh %522 : vector<8x64xf32>
    %524 = vector.extract_strided_slice %521 {offsets = [0, 0], sizes = [8, 64], strides = [1, 1]} : vector<8x192xf32> to vector<8x64xf32>
    %525 = vector.extract_strided_slice %521 {offsets = [0, 64], sizes = [8, 64], strides = [1, 1]} : vector<8x192xf32> to vector<8x64xf32>
    %526 = vector.extract_strided_slice %521 {offsets = [0, 128], sizes = [8, 64], strides = [1, 1]} : vector<8x192xf32> to vector<8x64xf32>
    %527 = arith.mulf %525, %495 : vector<8x64xf32>
    %528 = arith.mulf %524, %523 : vector<8x64xf32>
    %529 = arith.addf %527, %528 : vector<8x64xf32>
    %530 = math.tanh %529 : vector<8x64xf32>
    %531 = arith.mulf %526, %530 : vector<8x64xf32>
    %532 = vector.extract_strided_slice %531 {offsets = [0, 0], sizes = [8, 32], strides = [1, 1]} : vector<8x64xf32> to vector<8x32xf32>
    %533 = arith.index_cast %505 : i32 to index
    %c0_232 = arith.constant 0 : index
    %534 = vector.load %arg15[%533, %c0_232] : memref<64x64xf32, #tpu.memory_space<vmem>>, vector<8x32xf32>
    tpu.vector_store %arg15[%533, %c0_232], %532 {strides = array<i32>} : memref<64x64xf32, #tpu.memory_space<vmem>>, vector<8x32xf32>,
    %535 = vector.extract_strided_slice %531 {offsets = [0, 32], sizes = [8, 32], strides = [1, 1]} : vector<8x64xf32> to vector<8x32xf32>
    %536 = arith.index_cast %508 : i32 to index
    %c32_233 = arith.constant 32 : index
    %537 = vector.load %arg15[%536, %c32_233] : memref<64x64xf32, #tpu.memory_space<vmem>>, vector<8x32xf32>
    tpu.vector_store %arg15[%536, %c32_233], %535 {strides = array<i32>} : memref<64x64xf32, #tpu.memory_space<vmem>>, vector<8x32xf32>,
    %c6_i32_234 = arith.constant 6 : i32
    %c8_i32_235 = arith.constant 8 : i32
    %538 = arith.muli %c6_i32_234, %c8_i32_235 : i32
    %539 = tpu.assume_multiple %538, 8 : i32
    %c7_i32_236 = arith.constant 7 : i32
    %540 = arith.subi %c7_i32_236, %c6_i32_234 : i32
    %c8_i32_237 = arith.constant 8 : i32
    %541 = arith.muli %540, %c8_i32_237 : i32
    %542 = tpu.assume_multiple %541, 8 : i32
    %543 = arith.index_cast %539 : i32 to index
    %c0_238 = arith.constant 0 : index
    %544 = vector.load %arg17[%543, %c0_238] : memref<64x256xf32, #tpu.memory_space<vmem>>, vector<8x256xf32>
    %545 = arith.truncf %531 : vector<8x64xf32> to vector<8x64xbf16>
    %cst_239 = arith.constant dense<0.000000e+00> : vector<8x256xf32>
    %546 = tpu.matmul %545, %332, %cst_239 {dimension_numbers = #tpu.dot_dimension_numbers<[1], [0], [0], [1], [0, 0, 1, 1], [], []>} : vector<8x64xbf16>, vector<64x256xbf16>, vector<8x256xf32> -> vector<8x256xf32>
    %547 = arith.addf %544, %546 : vector<8x256xf32>
    %548 = vector.extract_strided_slice %547 {offsets = [0, 0], sizes = [8, 192], strides = [1, 1]} : vector<8x256xf32> to vector<8x192xf32>
    %cst_240 = arith.constant 5.000000e-01 : f32
    %549 = vector.broadcast %cst_240 : f32 to vector<8x192xf32>
    %550 = arith.mulf %549, %548 : vector<8x192xf32>
    %551 = math.tanh %550 : vector<8x192xf32>
    %cst_241 = arith.constant 5.000000e-01 : f32
    %552 = vector.broadcast %cst_241 : f32 to vector<8x192xf32>
    %553 = arith.mulf %552, %551 : vector<8x192xf32>
    %cst_242 = arith.constant 5.000000e-01 : f32
    %554 = vector.broadcast %cst_242 : f32 to vector<8x192xf32>
    %555 = arith.addf %553, %554 : vector<8x192xf32>
    %556 = vector.extract_strided_slice %547 {offsets = [0, 192], sizes = [8, 64], strides = [1, 1]} : vector<8x256xf32> to vector<8x64xf32>
    %557 = math.tanh %556 : vector<8x64xf32>
    %558 = vector.extract_strided_slice %555 {offsets = [0, 0], sizes = [8, 64], strides = [1, 1]} : vector<8x192xf32> to vector<8x64xf32>
    %559 = vector.extract_strided_slice %555 {offsets = [0, 64], sizes = [8, 64], strides = [1, 1]} : vector<8x192xf32> to vector<8x64xf32>
    %560 = vector.extract_strided_slice %555 {offsets = [0, 128], sizes = [8, 64], strides = [1, 1]} : vector<8x192xf32> to vector<8x64xf32>
    %561 = arith.mulf %559, %529 : vector<8x64xf32>
    %562 = arith.mulf %558, %557 : vector<8x64xf32>
    %563 = arith.addf %561, %562 : vector<8x64xf32>
    %564 = math.tanh %563 : vector<8x64xf32>
    %565 = arith.mulf %560, %564 : vector<8x64xf32>
    %566 = vector.extract_strided_slice %565 {offsets = [0, 0], sizes = [8, 32], strides = [1, 1]} : vector<8x64xf32> to vector<8x32xf32>
    %567 = arith.index_cast %539 : i32 to index
    %c0_243 = arith.constant 0 : index
    %568 = vector.load %arg15[%567, %c0_243] : memref<64x64xf32, #tpu.memory_space<vmem>>, vector<8x32xf32>
    tpu.vector_store %arg15[%567, %c0_243], %566 {strides = array<i32>} : memref<64x64xf32, #tpu.memory_space<vmem>>, vector<8x32xf32>,
    %569 = vector.extract_strided_slice %565 {offsets = [0, 32], sizes = [8, 32], strides = [1, 1]} : vector<8x64xf32> to vector<8x32xf32>
    %570 = arith.index_cast %542 : i32 to index
    %c32_244 = arith.constant 32 : index
    %571 = vector.load %arg15[%570, %c32_244] : memref<64x64xf32, #tpu.memory_space<vmem>>, vector<8x32xf32>
    tpu.vector_store %arg15[%570, %c32_244], %569 {strides = array<i32>} : memref<64x64xf32, #tpu.memory_space<vmem>>, vector<8x32xf32>,
    %c7_i32_245 = arith.constant 7 : i32
    %c8_i32_246 = arith.constant 8 : i32
    %572 = arith.muli %c7_i32_245, %c8_i32_246 : i32
    %573 = tpu.assume_multiple %572, 8 : i32
    %c7_i32_247 = arith.constant 7 : i32
    %574 = arith.subi %c7_i32_247, %c7_i32_245 : i32
    %c8_i32_248 = arith.constant 8 : i32
    %575 = arith.muli %574, %c8_i32_248 : i32
    %576 = tpu.assume_multiple %575, 8 : i32
    %577 = arith.index_cast %573 : i32 to index
    %c0_249 = arith.constant 0 : index
    %578 = vector.load %arg17[%577, %c0_249] : memref<64x256xf32, #tpu.memory_space<vmem>>, vector<8x256xf32>
    %579 = arith.truncf %565 : vector<8x64xf32> to vector<8x64xbf16>
    %cst_250 = arith.constant dense<0.000000e+00> : vector<8x256xf32>
    %580 = tpu.matmul %579, %332, %cst_250 {dimension_numbers = #tpu.dot_dimension_numbers<[1], [0], [0], [1], [0, 0, 1, 1], [], []>} : vector<8x64xbf16>, vector<64x256xbf16>, vector<8x256xf32> -> vector<8x256xf32>
    %581 = arith.addf %578, %580 : vector<8x256xf32>
    %582 = vector.extract_strided_slice %581 {offsets = [0, 0], sizes = [8, 192], strides = [1, 1]} : vector<8x256xf32> to vector<8x192xf32>
    %cst_251 = arith.constant 5.000000e-01 : f32
    %583 = vector.broadcast %cst_251 : f32 to vector<8x192xf32>
    %584 = arith.mulf %583, %582 : vector<8x192xf32>
    %585 = math.tanh %584 : vector<8x192xf32>
    %cst_252 = arith.constant 5.000000e-01 : f32
    %586 = vector.broadcast %cst_252 : f32 to vector<8x192xf32>
    %587 = arith.mulf %586, %585 : vector<8x192xf32>
    %cst_253 = arith.constant 5.000000e-01 : f32
    %588 = vector.broadcast %cst_253 : f32 to vector<8x192xf32>
    %589 = arith.addf %587, %588 : vector<8x192xf32>
    %590 = vector.extract_strided_slice %581 {offsets = [0, 192], sizes = [8, 64], strides = [1, 1]} : vector<8x256xf32> to vector<8x64xf32>
    %591 = math.tanh %590 : vector<8x64xf32>
    %592 = vector.extract_strided_slice %589 {offsets = [0, 0], sizes = [8, 64], strides = [1, 1]} : vector<8x192xf32> to vector<8x64xf32>
    %593 = vector.extract_strided_slice %589 {offsets = [0, 64], sizes = [8, 64], strides = [1, 1]} : vector<8x192xf32> to vector<8x64xf32>
    %594 = vector.extract_strided_slice %589 {offsets = [0, 128], sizes = [8, 64], strides = [1, 1]} : vector<8x192xf32> to vector<8x64xf32>
    %595 = arith.mulf %593, %563 : vector<8x64xf32>
    %596 = arith.mulf %592, %591 : vector<8x64xf32>
    %597 = arith.addf %595, %596 : vector<8x64xf32>
    %598 = math.tanh %597 : vector<8x64xf32>
    %599 = arith.mulf %594, %598 : vector<8x64xf32>
    %600 = vector.extract_strided_slice %599 {offsets = [0, 0], sizes = [8, 32], strides = [1, 1]} : vector<8x64xf32> to vector<8x32xf32>
    %601 = arith.index_cast %573 : i32 to index
    %c0_254 = arith.constant 0 : index
    %602 = vector.load %arg15[%601, %c0_254] : memref<64x64xf32, #tpu.memory_space<vmem>>, vector<8x32xf32>
    tpu.vector_store %arg15[%601, %c0_254], %600 {strides = array<i32>} : memref<64x64xf32, #tpu.memory_space<vmem>>, vector<8x32xf32>,
    %603 = vector.extract_strided_slice %599 {offsets = [0, 32], sizes = [8, 32], strides = [1, 1]} : vector<8x64xf32> to vector<8x32xf32>
    %604 = arith.index_cast %576 : i32 to index
    %c32_255 = arith.constant 32 : index
    %605 = vector.load %arg15[%604, %c32_255] : memref<64x64xf32, #tpu.memory_space<vmem>>, vector<8x32xf32>
    tpu.vector_store %arg15[%604, %c32_255], %603 {strides = array<i32>} : memref<64x64xf32, #tpu.memory_space<vmem>>, vector<8x32xf32>,
    %c8_i32_256 = arith.constant 8 : i32
    %c0_257 = arith.constant 0 : index
    %c0_258 = arith.constant 0 : index
    %606 = vector.load %arg15[%c0_257, %c0_258] : memref<64x64xf32, #tpu.memory_space<vmem>>, vector<64x64xf32>
    %607 = arith.truncf %606 : vector<64x64xf32> to vector<64x64xbf16>
    %c0_259 = arith.constant 0 : index
    %c0_260 = arith.constant 0 : index
    %608 = vector.load %arg8[%c0_259, %c0_260] : memref<64x8xbf16, #tpu.memory_space<vmem>>, vector<64x8xbf16>
    %cst_261 = arith.constant dense<0.000000e+00> : vector<64x8xf32>
    %609 = tpu.matmul %607, %608, %cst_261 {dimension_numbers = #tpu.dot_dimension_numbers<[1], [0], [0], [1], [0, 0, 1, 1], [], []>} : vector<64x64xbf16>, vector<64x8xbf16>, vector<64x8xf32> -> vector<64x8xf32>
    %c0_262 = arith.constant 0 : index
    %c0_263 = arith.constant 0 : index
    %610 = vector.load %arg9[%c0_262, %c0_263] : memref<1x8xf32, #tpu.memory_space<vmem>>, vector<1x8xf32>
    %611 = vector.broadcast %610 : vector<1x8xf32> to vector<64x8xf32>
    %612 = arith.addf %609, %611 : vector<64x8xf32>
    %c0_264 = arith.constant 0 : index
    %c0_265 = arith.constant 0 : index
    %613 = vector.load %arg18[%c0_264, %c0_265] : memref<64x8xf32, #tpu.memory_space<vmem>>, vector<64x8xf32>
    tpu.vector_store %arg18[%c0_264, %c0_265], %612 {strides = array<i32>} : memref<64x8xf32, #tpu.memory_space<vmem>>, vector<64x8xf32>,
    %c0_266 = arith.constant 0 : index
    %c0_267 = arith.constant 0 : index
    %614 = vector.load %arg10[%c0_266, %c0_267] : memref<8x8xf32, #tpu.memory_space<vmem>>, vector<8x8xf32>
    %615 = vector.shape_cast %614 : vector<8x8xf32> to vector<1x8x8xf32>
    %616 = vector.shape_cast %615 : vector<1x8x8xf32> to vector<1x8x8xf32>
    %617 = vector.broadcast %616 : vector<1x8x8xf32> to vector<8x8x8xf32>
    %618 = tpu.iota {dimensions = array<i32: 2>} : vector<8x8x8xi32>
    %619 = tpu.iota {dimensions = array<i32: 1>} : vector<8x8xi32>
    %c0_268 = arith.constant 0 : index
    %c0_269 = arith.constant 0 : index
    %620 = vector.load %arg11[%c0_268, %c0_269] : memref<1x8xf32, #tpu.memory_space<vmem>>, vector<1x8xf32>
    %c0_270 = arith.constant 0 : index
    %c0_271 = arith.constant 0 : index
    %621 = vector.load %arg18[%c0_270, %c0_271] : memref<64x8xf32, #tpu.memory_space<vmem>>, vector<8x8xf32>
    %622 = vector.broadcast %620 : vector<1x8xf32> to vector<8x8xf32>
    %623 = arith.addf %622, %621 : vector<8x8xf32>
    %c0_272 = arith.constant 0 : index
    %c0_273 = arith.constant 0 : index
    %624 = vector.load %arg1[%c0_272, %c0_273] : memref<64x1xi32, #tpu.memory_space<vmem>>, vector<8x1xi32>
    %c8_i32_274 = arith.constant 8 : i32
    %c1_i32_275 = arith.constant 1 : i32
    %c8_i32_276 = arith.constant 8 : i32
    %625 = arith.muli %c1_i32_275, %c8_i32_276 : i32
    %626 = tpu.assume_multiple %625, 8 : i32
    %627 = arith.index_cast %626 : i32 to index
    %c0_277 = arith.constant 0 : index
    %628 = vector.load %arg18[%627, %c0_277] : memref<64x8xf32, #tpu.memory_space<vmem>>, vector<8x8xf32>
    %629 = arith.index_cast %626 : i32 to index
    %c0_278 = arith.constant 0 : index
    %630 = vector.load %arg1[%629, %c0_278] : memref<64x1xi32, #tpu.memory_space<vmem>>, vector<8x1xi32>
    %631 = vector.shape_cast %623 : vector<8x8xf32> to vector<8x1x8xf32>
    %632 = vector.broadcast %631 : vector<8x1x8xf32> to vector<8x8x8xf32>
    %633 = arith.addf %632, %617 : vector<8x8x8xf32>
    %cst_279 = arith.constant dense<0xFF800000> : vector<8x8xf32>
    %634 = vector.multi_reduction <maximumf>, %633, %cst_279 [2] : vector<8x8x8xf32> to vector<8x8xf32>
    %635 = vector.shape_cast %634 : vector<8x8xf32> to vector<8x8x1xf32>
    %636 = vector.broadcast %635 : vector<8x8x1xf32> to vector<8x8x8xf32>
    %637 = arith.cmpf oge, %633, %636 : vector<8x8x8xf32>
    %638 = vector.broadcast %c8_i32_274 : i32 to vector<8x8x8xi32>
    %639 = arith.select %637, %618, %638 : vector<8x8x8xi1>, vector<8x8x8xi32>
    %cst_280 = arith.constant dense<2147483647> : vector<8x8xi32>
    %640 = vector.multi_reduction <minsi>, %639, %cst_280 [2] : vector<8x8x8xi32> to vector<8x8xi32>
    %641 = arith.index_cast %626 : i32 to index
    %c0_281 = arith.constant 0 : index
    %642 = vector.load %arg19[%641, %c0_281] : memref<64x8xi32, #tpu.memory_space<vmem>>, vector<8x8xi32>
    tpu.vector_store %arg19[%641, %c0_281], %640 {strides = array<i32>} : memref<64x8xi32, #tpu.memory_space<vmem>>, vector<8x8xi32>,
    %c0_i32_282 = arith.constant 0 : i32
    %643 = vector.broadcast %c0_i32_282 : i32 to vector<8x1xi32>
    %644 = arith.cmpi ne, %630, %643 : vector<8x1xi32>
    %645 = arith.addf %634, %628 : vector<8x8xf32>
    %646 = vector.shape_cast %644 : vector<8x1xi1> to vector<8x1xi1>
    %647 = vector.broadcast %646 : vector<8x1xi1> to vector<8x8xi1>
    %648 = arith.select %647, %645, %623 : vector<8x8xi1>, vector<8x8xf32>
    %649 = arith.addi %624, %630 : vector<8x1xi32>
    %c2_i32_283 = arith.constant 2 : i32
    %c8_i32_284 = arith.constant 8 : i32
    %650 = arith.muli %c2_i32_283, %c8_i32_284 : i32
    %651 = tpu.assume_multiple %650, 8 : i32
    %652 = arith.index_cast %651 : i32 to index
    %c0_285 = arith.constant 0 : index
    %653 = vector.load %arg18[%652, %c0_285] : memref<64x8xf32, #tpu.memory_space<vmem>>, vector<8x8xf32>
    %654 = arith.index_cast %651 : i32 to index
    %c0_286 = arith.constant 0 : index
    %655 = vector.load %arg1[%654, %c0_286] : memref<64x1xi32, #tpu.memory_space<vmem>>, vector<8x1xi32>
    %656 = vector.shape_cast %648 : vector<8x8xf32> to vector<8x1x8xf32>
    %657 = vector.broadcast %656 : vector<8x1x8xf32> to vector<8x8x8xf32>
    %658 = arith.addf %657, %617 : vector<8x8x8xf32>
    %cst_287 = arith.constant dense<0xFF800000> : vector<8x8xf32>
    %659 = vector.multi_reduction <maximumf>, %658, %cst_287 [2] : vector<8x8x8xf32> to vector<8x8xf32>
    %660 = vector.shape_cast %659 : vector<8x8xf32> to vector<8x8x1xf32>
    %661 = vector.broadcast %660 : vector<8x8x1xf32> to vector<8x8x8xf32>
    %662 = arith.cmpf oge, %658, %661 : vector<8x8x8xf32>
    %663 = vector.broadcast %c8_i32_274 : i32 to vector<8x8x8xi32>
    %664 = arith.select %662, %618, %663 : vector<8x8x8xi1>, vector<8x8x8xi32>
    %cst_288 = arith.constant dense<2147483647> : vector<8x8xi32>
    %665 = vector.multi_reduction <minsi>, %664, %cst_288 [2] : vector<8x8x8xi32> to vector<8x8xi32>
    %666 = arith.index_cast %651 : i32 to index
    %c0_289 = arith.constant 0 : index
    %667 = vector.load %arg19[%666, %c0_289] : memref<64x8xi32, #tpu.memory_space<vmem>>, vector<8x8xi32>
    tpu.vector_store %arg19[%666, %c0_289], %665 {strides = array<i32>} : memref<64x8xi32, #tpu.memory_space<vmem>>, vector<8x8xi32>,
    %c0_i32_290 = arith.constant 0 : i32
    %668 = vector.broadcast %c0_i32_290 : i32 to vector<8x1xi32>
    %669 = arith.cmpi ne, %655, %668 : vector<8x1xi32>
    %670 = arith.addf %659, %653 : vector<8x8xf32>
    %671 = vector.shape_cast %669 : vector<8x1xi1> to vector<8x1xi1>
    %672 = vector.broadcast %671 : vector<8x1xi1> to vector<8x8xi1>
    %673 = arith.select %672, %670, %648 : vector<8x8xi1>, vector<8x8xf32>
    %674 = arith.addi %649, %655 : vector<8x1xi32>
    %c3_i32_291 = arith.constant 3 : i32
    %c8_i32_292 = arith.constant 8 : i32
    %675 = arith.muli %c3_i32_291, %c8_i32_292 : i32
    %676 = tpu.assume_multiple %675, 8 : i32
    %677 = arith.index_cast %676 : i32 to index
    %c0_293 = arith.constant 0 : index
    %678 = vector.load %arg18[%677, %c0_293] : memref<64x8xf32, #tpu.memory_space<vmem>>, vector<8x8xf32>
    %679 = arith.index_cast %676 : i32 to index
    %c0_294 = arith.constant 0 : index
    %680 = vector.load %arg1[%679, %c0_294] : memref<64x1xi32, #tpu.memory_space<vmem>>, vector<8x1xi32>
    %681 = vector.shape_cast %673 : vector<8x8xf32> to vector<8x1x8xf32>
    %682 = vector.broadcast %681 : vector<8x1x8xf32> to vector<8x8x8xf32>
    %683 = arith.addf %682, %617 : vector<8x8x8xf32>
    %cst_295 = arith.constant dense<0xFF800000> : vector<8x8xf32>
    %684 = vector.multi_reduction <maximumf>, %683, %cst_295 [2] : vector<8x8x8xf32> to vector<8x8xf32>
    %685 = vector.shape_cast %684 : vector<8x8xf32> to vector<8x8x1xf32>
    %686 = vector.broadcast %685 : vector<8x8x1xf32> to vector<8x8x8xf32>
    %687 = arith.cmpf oge, %683, %686 : vector<8x8x8xf32>
    %688 = vector.broadcast %c8_i32_274 : i32 to vector<8x8x8xi32>
    %689 = arith.select %687, %618, %688 : vector<8x8x8xi1>, vector<8x8x8xi32>
    %cst_296 = arith.constant dense<2147483647> : vector<8x8xi32>
    %690 = vector.multi_reduction <minsi>, %689, %cst_296 [2] : vector<8x8x8xi32> to vector<8x8xi32>
    %691 = arith.index_cast %676 : i32 to index
    %c0_297 = arith.constant 0 : index
    %692 = vector.load %arg19[%691, %c0_297] : memref<64x8xi32, #tpu.memory_space<vmem>>, vector<8x8xi32>
    tpu.vector_store %arg19[%691, %c0_297], %690 {strides = array<i32>} : memref<64x8xi32, #tpu.memory_space<vmem>>, vector<8x8xi32>,
    %c0_i32_298 = arith.constant 0 : i32
    %693 = vector.broadcast %c0_i32_298 : i32 to vector<8x1xi32>
    %694 = arith.cmpi ne, %680, %693 : vector<8x1xi32>
    %695 = arith.addf %684, %678 : vector<8x8xf32>
    %696 = vector.shape_cast %694 : vector<8x1xi1> to vector<8x1xi1>
    %697 = vector.broadcast %696 : vector<8x1xi1> to vector<8x8xi1>
    %698 = arith.select %697, %695, %673 : vector<8x8xi1>, vector<8x8xf32>
    %699 = arith.addi %674, %680 : vector<8x1xi32>
    %c4_i32_299 = arith.constant 4 : i32
    %c8_i32_300 = arith.constant 8 : i32
    %700 = arith.muli %c4_i32_299, %c8_i32_300 : i32
    %701 = tpu.assume_multiple %700, 8 : i32
    %702 = arith.index_cast %701 : i32 to index
    %c0_301 = arith.constant 0 : index
    %703 = vector.load %arg18[%702, %c0_301] : memref<64x8xf32, #tpu.memory_space<vmem>>, vector<8x8xf32>
    %704 = arith.index_cast %701 : i32 to index
    %c0_302 = arith.constant 0 : index
    %705 = vector.load %arg1[%704, %c0_302] : memref<64x1xi32, #tpu.memory_space<vmem>>, vector<8x1xi32>
    %706 = vector.shape_cast %698 : vector<8x8xf32> to vector<8x1x8xf32>
    %707 = vector.broadcast %706 : vector<8x1x8xf32> to vector<8x8x8xf32>
    %708 = arith.addf %707, %617 : vector<8x8x8xf32>
    %cst_303 = arith.constant dense<0xFF800000> : vector<8x8xf32>
    %709 = vector.multi_reduction <maximumf>, %708, %cst_303 [2] : vector<8x8x8xf32> to vector<8x8xf32>
    %710 = vector.shape_cast %709 : vector<8x8xf32> to vector<8x8x1xf32>
    %711 = vector.broadcast %710 : vector<8x8x1xf32> to vector<8x8x8xf32>
    %712 = arith.cmpf oge, %708, %711 : vector<8x8x8xf32>
    %713 = vector.broadcast %c8_i32_274 : i32 to vector<8x8x8xi32>
    %714 = arith.select %712, %618, %713 : vector<8x8x8xi1>, vector<8x8x8xi32>
    %cst_304 = arith.constant dense<2147483647> : vector<8x8xi32>
    %715 = vector.multi_reduction <minsi>, %714, %cst_304 [2] : vector<8x8x8xi32> to vector<8x8xi32>
    %716 = arith.index_cast %701 : i32 to index
    %c0_305 = arith.constant 0 : index
    %717 = vector.load %arg19[%716, %c0_305] : memref<64x8xi32, #tpu.memory_space<vmem>>, vector<8x8xi32>
    tpu.vector_store %arg19[%716, %c0_305], %715 {strides = array<i32>} : memref<64x8xi32, #tpu.memory_space<vmem>>, vector<8x8xi32>,
    %c0_i32_306 = arith.constant 0 : i32
    %718 = vector.broadcast %c0_i32_306 : i32 to vector<8x1xi32>
    %719 = arith.cmpi ne, %705, %718 : vector<8x1xi32>
    %720 = arith.addf %709, %703 : vector<8x8xf32>
    %721 = vector.shape_cast %719 : vector<8x1xi1> to vector<8x1xi1>
    %722 = vector.broadcast %721 : vector<8x1xi1> to vector<8x8xi1>
    %723 = arith.select %722, %720, %698 : vector<8x8xi1>, vector<8x8xf32>
    %724 = arith.addi %699, %705 : vector<8x1xi32>
    %c5_i32_307 = arith.constant 5 : i32
    %c8_i32_308 = arith.constant 8 : i32
    %725 = arith.muli %c5_i32_307, %c8_i32_308 : i32
    %726 = tpu.assume_multiple %725, 8 : i32
    %727 = arith.index_cast %726 : i32 to index
    %c0_309 = arith.constant 0 : index
    %728 = vector.load %arg18[%727, %c0_309] : memref<64x8xf32, #tpu.memory_space<vmem>>, vector<8x8xf32>
    %729 = arith.index_cast %726 : i32 to index
    %c0_310 = arith.constant 0 : index
    %730 = vector.load %arg1[%729, %c0_310] : memref<64x1xi32, #tpu.memory_space<vmem>>, vector<8x1xi32>
    %731 = vector.shape_cast %723 : vector<8x8xf32> to vector<8x1x8xf32>
    %732 = vector.broadcast %731 : vector<8x1x8xf32> to vector<8x8x8xf32>
    %733 = arith.addf %732, %617 : vector<8x8x8xf32>
    %cst_311 = arith.constant dense<0xFF800000> : vector<8x8xf32>
    %734 = vector.multi_reduction <maximumf>, %733, %cst_311 [2] : vector<8x8x8xf32> to vector<8x8xf32>
    %735 = vector.shape_cast %734 : vector<8x8xf32> to vector<8x8x1xf32>
    %736 = vector.broadcast %735 : vector<8x8x1xf32> to vector<8x8x8xf32>
    %737 = arith.cmpf oge, %733, %736 : vector<8x8x8xf32>
    %738 = vector.broadcast %c8_i32_274 : i32 to vector<8x8x8xi32>
    %739 = arith.select %737, %618, %738 : vector<8x8x8xi1>, vector<8x8x8xi32>
    %cst_312 = arith.constant dense<2147483647> : vector<8x8xi32>
    %740 = vector.multi_reduction <minsi>, %739, %cst_312 [2] : vector<8x8x8xi32> to vector<8x8xi32>
    %741 = arith.index_cast %726 : i32 to index
    %c0_313 = arith.constant 0 : index
    %742 = vector.load %arg19[%741, %c0_313] : memref<64x8xi32, #tpu.memory_space<vmem>>, vector<8x8xi32>
    tpu.vector_store %arg19[%741, %c0_313], %740 {strides = array<i32>} : memref<64x8xi32, #tpu.memory_space<vmem>>, vector<8x8xi32>,
    %c0_i32_314 = arith.constant 0 : i32
    %743 = vector.broadcast %c0_i32_314 : i32 to vector<8x1xi32>
    %744 = arith.cmpi ne, %730, %743 : vector<8x1xi32>
    %745 = arith.addf %734, %728 : vector<8x8xf32>
    %746 = vector.shape_cast %744 : vector<8x1xi1> to vector<8x1xi1>
    %747 = vector.broadcast %746 : vector<8x1xi1> to vector<8x8xi1>
    %748 = arith.select %747, %745, %723 : vector<8x8xi1>, vector<8x8xf32>
    %749 = arith.addi %724, %730 : vector<8x1xi32>
    %c6_i32_315 = arith.constant 6 : i32
    %c8_i32_316 = arith.constant 8 : i32
    %750 = arith.muli %c6_i32_315, %c8_i32_316 : i32
    %751 = tpu.assume_multiple %750, 8 : i32
    %752 = arith.index_cast %751 : i32 to index
    %c0_317 = arith.constant 0 : index
    %753 = vector.load %arg18[%752, %c0_317] : memref<64x8xf32, #tpu.memory_space<vmem>>, vector<8x8xf32>
    %754 = arith.index_cast %751 : i32 to index
    %c0_318 = arith.constant 0 : index
    %755 = vector.load %arg1[%754, %c0_318] : memref<64x1xi32, #tpu.memory_space<vmem>>, vector<8x1xi32>
    %756 = vector.shape_cast %748 : vector<8x8xf32> to vector<8x1x8xf32>
    %757 = vector.broadcast %756 : vector<8x1x8xf32> to vector<8x8x8xf32>
    %758 = arith.addf %757, %617 : vector<8x8x8xf32>
    %cst_319 = arith.constant dense<0xFF800000> : vector<8x8xf32>
    %759 = vector.multi_reduction <maximumf>, %758, %cst_319 [2] : vector<8x8x8xf32> to vector<8x8xf32>
    %760 = vector.shape_cast %759 : vector<8x8xf32> to vector<8x8x1xf32>
    %761 = vector.broadcast %760 : vector<8x8x1xf32> to vector<8x8x8xf32>
    %762 = arith.cmpf oge, %758, %761 : vector<8x8x8xf32>
    %763 = vector.broadcast %c8_i32_274 : i32 to vector<8x8x8xi32>
    %764 = arith.select %762, %618, %763 : vector<8x8x8xi1>, vector<8x8x8xi32>
    %cst_320 = arith.constant dense<2147483647> : vector<8x8xi32>
    %765 = vector.multi_reduction <minsi>, %764, %cst_320 [2] : vector<8x8x8xi32> to vector<8x8xi32>
    %766 = arith.index_cast %751 : i32 to index
    %c0_321 = arith.constant 0 : index
    %767 = vector.load %arg19[%766, %c0_321] : memref<64x8xi32, #tpu.memory_space<vmem>>, vector<8x8xi32>
    tpu.vector_store %arg19[%766, %c0_321], %765 {strides = array<i32>} : memref<64x8xi32, #tpu.memory_space<vmem>>, vector<8x8xi32>,
    %c0_i32_322 = arith.constant 0 : i32
    %768 = vector.broadcast %c0_i32_322 : i32 to vector<8x1xi32>
    %769 = arith.cmpi ne, %755, %768 : vector<8x1xi32>
    %770 = arith.addf %759, %753 : vector<8x8xf32>
    %771 = vector.shape_cast %769 : vector<8x1xi1> to vector<8x1xi1>
    %772 = vector.broadcast %771 : vector<8x1xi1> to vector<8x8xi1>
    %773 = arith.select %772, %770, %748 : vector<8x8xi1>, vector<8x8xf32>
    %774 = arith.addi %749, %755 : vector<8x1xi32>
    %c7_i32_323 = arith.constant 7 : i32
    %c8_i32_324 = arith.constant 8 : i32
    %775 = arith.muli %c7_i32_323, %c8_i32_324 : i32
    %776 = tpu.assume_multiple %775, 8 : i32
    %777 = arith.index_cast %776 : i32 to index
    %c0_325 = arith.constant 0 : index
    %778 = vector.load %arg18[%777, %c0_325] : memref<64x8xf32, #tpu.memory_space<vmem>>, vector<8x8xf32>
    %779 = arith.index_cast %776 : i32 to index
    %c0_326 = arith.constant 0 : index
    %780 = vector.load %arg1[%779, %c0_326] : memref<64x1xi32, #tpu.memory_space<vmem>>, vector<8x1xi32>
    %781 = vector.shape_cast %773 : vector<8x8xf32> to vector<8x1x8xf32>
    %782 = vector.broadcast %781 : vector<8x1x8xf32> to vector<8x8x8xf32>
    %783 = arith.addf %782, %617 : vector<8x8x8xf32>
    %cst_327 = arith.constant dense<0xFF800000> : vector<8x8xf32>
    %784 = vector.multi_reduction <maximumf>, %783, %cst_327 [2] : vector<8x8x8xf32> to vector<8x8xf32>
    %785 = vector.shape_cast %784 : vector<8x8xf32> to vector<8x8x1xf32>
    %786 = vector.broadcast %785 : vector<8x8x1xf32> to vector<8x8x8xf32>
    %787 = arith.cmpf oge, %783, %786 : vector<8x8x8xf32>
    %788 = vector.broadcast %c8_i32_274 : i32 to vector<8x8x8xi32>
    %789 = arith.select %787, %618, %788 : vector<8x8x8xi1>, vector<8x8x8xi32>
    %cst_328 = arith.constant dense<2147483647> : vector<8x8xi32>
    %790 = vector.multi_reduction <minsi>, %789, %cst_328 [2] : vector<8x8x8xi32> to vector<8x8xi32>
    %791 = arith.index_cast %776 : i32 to index
    %c0_329 = arith.constant 0 : index
    %792 = vector.load %arg19[%791, %c0_329] : memref<64x8xi32, #tpu.memory_space<vmem>>, vector<8x8xi32>
    tpu.vector_store %arg19[%791, %c0_329], %790 {strides = array<i32>} : memref<64x8xi32, #tpu.memory_space<vmem>>, vector<8x8xi32>,
    %c0_i32_330 = arith.constant 0 : i32
    %793 = vector.broadcast %c0_i32_330 : i32 to vector<8x1xi32>
    %794 = arith.cmpi ne, %780, %793 : vector<8x1xi32>
    %795 = arith.addf %784, %778 : vector<8x8xf32>
    %796 = vector.shape_cast %794 : vector<8x1xi1> to vector<8x1xi1>
    %797 = vector.broadcast %796 : vector<8x1xi1> to vector<8x8xi1>
    %798 = arith.select %797, %795, %773 : vector<8x8xi1>, vector<8x8xf32>
    %799 = arith.addi %774, %780 : vector<8x1xi32>
    %c7_i32_331 = arith.constant 7 : i32
    %c0_332 = arith.constant 0 : index
    %c0_333 = arith.constant 0 : index
    %800 = vector.load %arg12[%c0_332, %c0_333] : memref<1x8xf32, #tpu.memory_space<vmem>>, vector<1x8xf32>
    %801 = vector.broadcast %800 : vector<1x8xf32> to vector<8x8xf32>
    %802 = arith.addf %798, %801 : vector<8x8xf32>
    %c1_i32_334 = arith.constant 1 : i32
    %803 = vector.broadcast %c1_i32_334 : i32 to vector<8x1xi32>
    %804 = arith.subi %799, %803 : vector<8x1xi32>
    %c0_i32_335 = arith.constant 0 : i32
    %805 = vector.broadcast %c0_i32_335 : i32 to vector<8x1xi32>
    %806 = arith.maxsi %804, %805 : vector<8x1xi32>
    %cst_336 = arith.constant dense<0xFF800000> : vector<8xf32>
    %807 = vector.multi_reduction <maximumf>, %802, %cst_336 [1] : vector<8x8xf32> to vector<8xf32>
    %808 = vector.shape_cast %807 : vector<8xf32> to vector<8x1xf32>
    %809 = vector.broadcast %808 : vector<8x1xf32> to vector<8x8xf32>
    %810 = arith.cmpf oge, %802, %809 : vector<8x8xf32>
    %c8_i32_337 = arith.constant 8 : i32
    %811 = vector.broadcast %c8_i32_337 : i32 to vector<8x8xi32>
    %812 = arith.select %810, %619, %811 : vector<8x8xi1>, vector<8x8xi32>
    %cst_338 = arith.constant dense<2147483647> : vector<8xi32>
    %813 = vector.multi_reduction <minsi>, %812, %cst_338 [1] : vector<8x8xi32> to vector<8xi32>
    %814 = vector.shape_cast %813 : vector<8xi32> to vector<8x1xi32>
    %c7_i32_339 = arith.constant 7 : i32
    %815 = vector.broadcast %c7_i32_339 : i32 to vector<8x1xi32>
    %816 = arith.cmpi eq, %806, %815 : vector<8x1xi32>
    %c-1_i32 = arith.constant -1 : i32
    %817 = vector.broadcast %c-1_i32 : i32 to vector<8x1xi32>
    %818 = arith.select %816, %814, %817 : vector<8x1xi1>, vector<8x1xi32>
    %c56_340 = arith.constant 56 : index
    %c0_341 = arith.constant 0 : index
    %819 = vector.load %arg13[%c56_340, %c0_341] : memref<64x1xi32, #tpu.memory_space<vmem>>, vector<8x1xi32>
    tpu.vector_store %arg13[%c56_340, %c0_341], %818 {strides = array<i32>} : memref<64x1xi32, #tpu.memory_space<vmem>>, vector<8x1xi32>,
    %c0_i32_342 = arith.constant 0 : i32
    %c6_i32_343 = arith.constant 6 : i32
    %820 = arith.subi %c6_i32_343, %c0_i32_342 : i32
    %c1_i32_344 = arith.constant 1 : i32
    %821 = arith.addi %820, %c1_i32_344 : i32
    %c8_i32_345 = arith.constant 8 : i32
    %822 = arith.muli %821, %c8_i32_345 : i32
    %823 = tpu.assume_multiple %822, 8 : i32
    %824 = arith.index_cast %823 : i32 to index
    %c0_346 = arith.constant 0 : index
    %825 = vector.load %arg19[%824, %c0_346] : memref<64x8xi32, #tpu.memory_space<vmem>>, vector<8x8xi32>
    %826 = vector.broadcast %814 : vector<8x1xi32> to vector<8x8xi32>
    %827 = arith.cmpi eq, %619, %826 : vector<8x8xi32>
    %c0_i32_347 = arith.constant 0 : i32
    %828 = vector.broadcast %c0_i32_347 : i32 to vector<8x8xi32>
    %829 = arith.select %827, %825, %828 : vector<8x8xi1>, vector<8x8xi32>
    %cst_348 = arith.constant dense<0> : vector<8xi32>
    %830 = vector.multi_reduction <add>, %829, %cst_348 [1] : vector<8x8xi32> to vector<8xi32>
    %831 = vector.shape_cast %830 : vector<8xi32> to vector<8x1xi32>
    %832 = vector.broadcast %820 : i32 to vector<8x1xi32>
    %833 = arith.cmpi slt, %832, %806 : vector<8x1xi32>
    %834 = arith.select %833, %831, %814 : vector<8x1xi1>, vector<8x1xi32>
    %835 = vector.broadcast %820 : i32 to vector<8x1xi32>
    %836 = arith.cmpi sgt, %835, %806 : vector<8x1xi32>
    %c-1_i32_349 = arith.constant -1 : i32
    %837 = vector.broadcast %c-1_i32_349 : i32 to vector<8x1xi32>
    %838 = arith.select %836, %837, %834 : vector<8x1xi1>, vector<8x1xi32>
    %c8_i32_350 = arith.constant 8 : i32
    %839 = arith.muli %820, %c8_i32_350 : i32
    %840 = tpu.assume_multiple %839, 8 : i32
    %841 = arith.index_cast %840 : i32 to index
    %c0_351 = arith.constant 0 : index
    %842 = vector.load %arg13[%841, %c0_351] : memref<64x1xi32, #tpu.memory_space<vmem>>, vector<8x1xi32>
    tpu.vector_store %arg13[%841, %c0_351], %838 {strides = array<i32>} : memref<64x1xi32, #tpu.memory_space<vmem>>, vector<8x1xi32>,
    %c1_i32_352 = arith.constant 1 : i32
    %c6_i32_353 = arith.constant 6 : i32
    %843 = arith.subi %c6_i32_353, %c1_i32_352 : i32
    %c1_i32_354 = arith.constant 1 : i32
    %844 = arith.addi %843, %c1_i32_354 : i32
    %c8_i32_355 = arith.constant 8 : i32
    %845 = arith.muli %844, %c8_i32_355 : i32
    %846 = tpu.assume_multiple %845, 8 : i32
    %847 = arith.index_cast %846 : i32 to index
    %c0_356 = arith.constant 0 : index
    %848 = vector.load %arg19[%847, %c0_356] : memref<64x8xi32, #tpu.memory_space<vmem>>, vector<8x8xi32>
    %849 = vector.broadcast %834 : vector<8x1xi32> to vector<8x8xi32>
    %850 = arith.cmpi eq, %619, %849 : vector<8x8xi32>
    %c0_i32_357 = arith.constant 0 : i32
    %851 = vector.broadcast %c0_i32_357 : i32 to vector<8x8xi32>
    %852 = arith.select %850, %848, %851 : vector<8x8xi1>, vector<8x8xi32>
    %cst_358 = arith.constant dense<0> : vector<8xi32>
    %853 = vector.multi_reduction <add>, %852, %cst_358 [1] : vector<8x8xi32> to vector<8xi32>
    %854 = vector.shape_cast %853 : vector<8xi32> to vector<8x1xi32>
    %855 = vector.broadcast %843 : i32 to vector<8x1xi32>
    %856 = arith.cmpi slt, %855, %806 : vector<8x1xi32>
    %857 = arith.select %856, %854, %834 : vector<8x1xi1>, vector<8x1xi32>
    %858 = vector.broadcast %843 : i32 to vector<8x1xi32>
    %859 = arith.cmpi sgt, %858, %806 : vector<8x1xi32>
    %c-1_i32_359 = arith.constant -1 : i32
    %860 = vector.broadcast %c-1_i32_359 : i32 to vector<8x1xi32>
    %861 = arith.select %859, %860, %857 : vector<8x1xi1>, vector<8x1xi32>
    %c8_i32_360 = arith.constant 8 : i32
    %862 = arith.muli %843, %c8_i32_360 : i32
    %863 = tpu.assume_multiple %862, 8 : i32
    %864 = arith.index_cast %863 : i32 to index
    %c0_361 = arith.constant 0 : index
    %865 = vector.load %arg13[%864, %c0_361] : memref<64x1xi32, #tpu.memory_space<vmem>>, vector<8x1xi32>
    tpu.vector_store %arg13[%864, %c0_361], %861 {strides = array<i32>} : memref<64x1xi32, #tpu.memory_space<vmem>>, vector<8x1xi32>,
    %c2_i32_362 = arith.constant 2 : i32
    %c6_i32_363 = arith.constant 6 : i32
    %866 = arith.subi %c6_i32_363, %c2_i32_362 : i32
    %c1_i32_364 = arith.constant 1 : i32
    %867 = arith.addi %866, %c1_i32_364 : i32
    %c8_i32_365 = arith.constant 8 : i32
    %868 = arith.muli %867, %c8_i32_365 : i32
    %869 = tpu.assume_multiple %868, 8 : i32
    %870 = arith.index_cast %869 : i32 to index
    %c0_366 = arith.constant 0 : index
    %871 = vector.load %arg19[%870, %c0_366] : memref<64x8xi32, #tpu.memory_space<vmem>>, vector<8x8xi32>
    %872 = vector.broadcast %857 : vector<8x1xi32> to vector<8x8xi32>
    %873 = arith.cmpi eq, %619, %872 : vector<8x8xi32>
    %c0_i32_367 = arith.constant 0 : i32
    %874 = vector.broadcast %c0_i32_367 : i32 to vector<8x8xi32>
    %875 = arith.select %873, %871, %874 : vector<8x8xi1>, vector<8x8xi32>
    %cst_368 = arith.constant dense<0> : vector<8xi32>
    %876 = vector.multi_reduction <add>, %875, %cst_368 [1] : vector<8x8xi32> to vector<8xi32>
    %877 = vector.shape_cast %876 : vector<8xi32> to vector<8x1xi32>
    %878 = vector.broadcast %866 : i32 to vector<8x1xi32>
    %879 = arith.cmpi slt, %878, %806 : vector<8x1xi32>
    %880 = arith.select %879, %877, %857 : vector<8x1xi1>, vector<8x1xi32>
    %881 = vector.broadcast %866 : i32 to vector<8x1xi32>
    %882 = arith.cmpi sgt, %881, %806 : vector<8x1xi32>
    %c-1_i32_369 = arith.constant -1 : i32
    %883 = vector.broadcast %c-1_i32_369 : i32 to vector<8x1xi32>
    %884 = arith.select %882, %883, %880 : vector<8x1xi1>, vector<8x1xi32>
    %c8_i32_370 = arith.constant 8 : i32
    %885 = arith.muli %866, %c8_i32_370 : i32
    %886 = tpu.assume_multiple %885, 8 : i32
    %887 = arith.index_cast %886 : i32 to index
    %c0_371 = arith.constant 0 : index
    %888 = vector.load %arg13[%887, %c0_371] : memref<64x1xi32, #tpu.memory_space<vmem>>, vector<8x1xi32>
    tpu.vector_store %arg13[%887, %c0_371], %884 {strides = array<i32>} : memref<64x1xi32, #tpu.memory_space<vmem>>, vector<8x1xi32>,
    %c3_i32_372 = arith.constant 3 : i32
    %c6_i32_373 = arith.constant 6 : i32
    %889 = arith.subi %c6_i32_373, %c3_i32_372 : i32
    %c1_i32_374 = arith.constant 1 : i32
    %890 = arith.addi %889, %c1_i32_374 : i32
    %c8_i32_375 = arith.constant 8 : i32
    %891 = arith.muli %890, %c8_i32_375 : i32
    %892 = tpu.assume_multiple %891, 8 : i32
    %893 = arith.index_cast %892 : i32 to index
    %c0_376 = arith.constant 0 : index
    %894 = vector.load %arg19[%893, %c0_376] : memref<64x8xi32, #tpu.memory_space<vmem>>, vector<8x8xi32>
    %895 = vector.broadcast %880 : vector<8x1xi32> to vector<8x8xi32>
    %896 = arith.cmpi eq, %619, %895 : vector<8x8xi32>
    %c0_i32_377 = arith.constant 0 : i32
    %897 = vector.broadcast %c0_i32_377 : i32 to vector<8x8xi32>
    %898 = arith.select %896, %894, %897 : vector<8x8xi1>, vector<8x8xi32>
    %cst_378 = arith.constant dense<0> : vector<8xi32>
    %899 = vector.multi_reduction <add>, %898, %cst_378 [1] : vector<8x8xi32> to vector<8xi32>
    %900 = vector.shape_cast %899 : vector<8xi32> to vector<8x1xi32>
    %901 = vector.broadcast %889 : i32 to vector<8x1xi32>
    %902 = arith.cmpi slt, %901, %806 : vector<8x1xi32>
    %903 = arith.select %902, %900, %880 : vector<8x1xi1>, vector<8x1xi32>
    %904 = vector.broadcast %889 : i32 to vector<8x1xi32>
    %905 = arith.cmpi sgt, %904, %806 : vector<8x1xi32>
    %c-1_i32_379 = arith.constant -1 : i32
    %906 = vector.broadcast %c-1_i32_379 : i32 to vector<8x1xi32>
    %907 = arith.select %905, %906, %903 : vector<8x1xi1>, vector<8x1xi32>
    %c8_i32_380 = arith.constant 8 : i32
    %908 = arith.muli %889, %c8_i32_380 : i32
    %909 = tpu.assume_multiple %908, 8 : i32
    %910 = arith.index_cast %909 : i32 to index
    %c0_381 = arith.constant 0 : index
    %911 = vector.load %arg13[%910, %c0_381] : memref<64x1xi32, #tpu.memory_space<vmem>>, vector<8x1xi32>
    tpu.vector_store %arg13[%910, %c0_381], %907 {strides = array<i32>} : memref<64x1xi32, #tpu.memory_space<vmem>>, vector<8x1xi32>,
    %c4_i32_382 = arith.constant 4 : i32
    %c6_i32_383 = arith.constant 6 : i32
    %912 = arith.subi %c6_i32_383, %c4_i32_382 : i32
    %c1_i32_384 = arith.constant 1 : i32
    %913 = arith.addi %912, %c1_i32_384 : i32
    %c8_i32_385 = arith.constant 8 : i32
    %914 = arith.muli %913, %c8_i32_385 : i32
    %915 = tpu.assume_multiple %914, 8 : i32
    %916 = arith.index_cast %915 : i32 to index
    %c0_386 = arith.constant 0 : index
    %917 = vector.load %arg19[%916, %c0_386] : memref<64x8xi32, #tpu.memory_space<vmem>>, vector<8x8xi32>
    %918 = vector.broadcast %903 : vector<8x1xi32> to vector<8x8xi32>
    %919 = arith.cmpi eq, %619, %918 : vector<8x8xi32>
    %c0_i32_387 = arith.constant 0 : i32
    %920 = vector.broadcast %c0_i32_387 : i32 to vector<8x8xi32>
    %921 = arith.select %919, %917, %920 : vector<8x8xi1>, vector<8x8xi32>
    %cst_388 = arith.constant dense<0> : vector<8xi32>
    %922 = vector.multi_reduction <add>, %921, %cst_388 [1] : vector<8x8xi32> to vector<8xi32>
    %923 = vector.shape_cast %922 : vector<8xi32> to vector<8x1xi32>
    %924 = vector.broadcast %912 : i32 to vector<8x1xi32>
    %925 = arith.cmpi slt, %924, %806 : vector<8x1xi32>
    %926 = arith.select %925, %923, %903 : vector<8x1xi1>, vector<8x1xi32>
    %927 = vector.broadcast %912 : i32 to vector<8x1xi32>
    %928 = arith.cmpi sgt, %927, %806 : vector<8x1xi32>
    %c-1_i32_389 = arith.constant -1 : i32
    %929 = vector.broadcast %c-1_i32_389 : i32 to vector<8x1xi32>
    %930 = arith.select %928, %929, %926 : vector<8x1xi1>, vector<8x1xi32>
    %c8_i32_390 = arith.constant 8 : i32
    %931 = arith.muli %912, %c8_i32_390 : i32
    %932 = tpu.assume_multiple %931, 8 : i32
    %933 = arith.index_cast %932 : i32 to index
    %c0_391 = arith.constant 0 : index
    %934 = vector.load %arg13[%933, %c0_391] : memref<64x1xi32, #tpu.memory_space<vmem>>, vector<8x1xi32>
    tpu.vector_store %arg13[%933, %c0_391], %930 {strides = array<i32>} : memref<64x1xi32, #tpu.memory_space<vmem>>, vector<8x1xi32>,
    %c5_i32_392 = arith.constant 5 : i32
    %c6_i32_393 = arith.constant 6 : i32
    %935 = arith.subi %c6_i32_393, %c5_i32_392 : i32
    %c1_i32_394 = arith.constant 1 : i32
    %936 = arith.addi %935, %c1_i32_394 : i32
    %c8_i32_395 = arith.constant 8 : i32
    %937 = arith.muli %936, %c8_i32_395 : i32
    %938 = tpu.assume_multiple %937, 8 : i32
    %939 = arith.index_cast %938 : i32 to index
    %c0_396 = arith.constant 0 : index
    %940 = vector.load %arg19[%939, %c0_396] : memref<64x8xi32, #tpu.memory_space<vmem>>, vector<8x8xi32>
    %941 = vector.broadcast %926 : vector<8x1xi32> to vector<8x8xi32>
    %942 = arith.cmpi eq, %619, %941 : vector<8x8xi32>
    %c0_i32_397 = arith.constant 0 : i32
    %943 = vector.broadcast %c0_i32_397 : i32 to vector<8x8xi32>
    %944 = arith.select %942, %940, %943 : vector<8x8xi1>, vector<8x8xi32>
    %cst_398 = arith.constant dense<0> : vector<8xi32>
    %945 = vector.multi_reduction <add>, %944, %cst_398 [1] : vector<8x8xi32> to vector<8xi32>
    %946 = vector.shape_cast %945 : vector<8xi32> to vector<8x1xi32>
    %947 = vector.broadcast %935 : i32 to vector<8x1xi32>
    %948 = arith.cmpi slt, %947, %806 : vector<8x1xi32>
    %949 = arith.select %948, %946, %926 : vector<8x1xi1>, vector<8x1xi32>
    %950 = vector.broadcast %935 : i32 to vector<8x1xi32>
    %951 = arith.cmpi sgt, %950, %806 : vector<8x1xi32>
    %c-1_i32_399 = arith.constant -1 : i32
    %952 = vector.broadcast %c-1_i32_399 : i32 to vector<8x1xi32>
    %953 = arith.select %951, %952, %949 : vector<8x1xi1>, vector<8x1xi32>
    %c8_i32_400 = arith.constant 8 : i32
    %954 = arith.muli %935, %c8_i32_400 : i32
    %955 = tpu.assume_multiple %954, 8 : i32
    %956 = arith.index_cast %955 : i32 to index
    %c0_401 = arith.constant 0 : index
    %957 = vector.load %arg13[%956, %c0_401] : memref<64x1xi32, #tpu.memory_space<vmem>>, vector<8x1xi32>
    tpu.vector_store %arg13[%956, %c0_401], %953 {strides = array<i32>} : memref<64x1xi32, #tpu.memory_space<vmem>>, vector<8x1xi32>,
    %c6_i32_402 = arith.constant 6 : i32
    %c6_i32_403 = arith.constant 6 : i32
    %958 = arith.subi %c6_i32_403, %c6_i32_402 : i32
    %c1_i32_404 = arith.constant 1 : i32
    %959 = arith.addi %958, %c1_i32_404 : i32
    %c8_i32_405 = arith.constant 8 : i32
    %960 = arith.muli %959, %c8_i32_405 : i32
    %961 = tpu.assume_multiple %960, 8 : i32
    %962 = arith.index_cast %961 : i32 to index
    %c0_406 = arith.constant 0 : index
    %963 = vector.load %arg19[%962, %c0_406] : memref<64x8xi32, #tpu.memory_space<vmem>>, vector<8x8xi32>
    %964 = vector.broadcast %949 : vector<8x1xi32> to vector<8x8xi32>
    %965 = arith.cmpi eq, %619, %964 : vector<8x8xi32>
    %c0_i32_407 = arith.constant 0 : i32
    %966 = vector.broadcast %c0_i32_407 : i32 to vector<8x8xi32>
    %967 = arith.select %965, %963, %966 : vector<8x8xi1>, vector<8x8xi32>
    %cst_408 = arith.constant dense<0> : vector<8xi32>
    %968 = vector.multi_reduction <add>, %967, %cst_408 [1] : vector<8x8xi32> to vector<8xi32>
    %969 = vector.shape_cast %968 : vector<8xi32> to vector<8x1xi32>
    %970 = vector.broadcast %958 : i32 to vector<8x1xi32>
    %971 = arith.cmpi slt, %970, %806 : vector<8x1xi32>
    %972 = arith.select %971, %969, %949 : vector<8x1xi1>, vector<8x1xi32>
    %973 = vector.broadcast %958 : i32 to vector<8x1xi32>
    %974 = arith.cmpi sgt, %973, %806 : vector<8x1xi32>
    %c-1_i32_409 = arith.constant -1 : i32
    %975 = vector.broadcast %c-1_i32_409 : i32 to vector<8x1xi32>
    %976 = arith.select %974, %975, %972 : vector<8x1xi1>, vector<8x1xi32>
    %c8_i32_410 = arith.constant 8 : i32
    %977 = arith.muli %958, %c8_i32_410 : i32
    %978 = tpu.assume_multiple %977, 8 : i32
    %979 = arith.index_cast %978 : i32 to index
    %c0_411 = arith.constant 0 : index
    %980 = vector.load %arg13[%979, %c0_411] : memref<64x1xi32, #tpu.memory_space<vmem>>, vector<8x1xi32>
    tpu.vector_store %arg13[%979, %c0_411], %976 {strides = array<i32>} : memref<64x1xi32, #tpu.memory_space<vmem>>, vector<8x1xi32>,
    %c7_i32_412 = arith.constant 7 : i32
    return
  }
}

</mosaic_0001>

<llo_original>
// kernel: ner_forward.1
$region0: #{ner_forward.1}
  #allocation0 [shape = 'u32[]', space=smem, size = 0x4, offset = 0x4, fixed_abs, tag = 'smem constant byte address 0x4 - core index']
  #allocation1 [shape = 'u32[72,128]{1,0:T(1,128)}', space=vmem, size = 0x9000, scoped, tag = 'internal scratch']
  #allocation2 [shape = 'f32[64,64]{1,0:T(8,128)}', space=vmem, size = 0x8000, scoped, tag = 'scratch operand']
  #allocation3 [shape = 'f32[64,64]{1,0:T(8,128)}', space=vmem, size = 0x8000, scoped, tag = 'scratch operand']
  #allocation4 [shape = 'f32[64,64]{1,0:T(8,128)}', space=vmem, size = 0x8000, scoped, tag = 'scratch operand']
  #allocation5 [shape = 'f32[64,256]{1,0:T(8,128)}', space=vmem, size = 0x10000, scoped, tag = 'scratch operand']
  #allocation6 [shape = 'f32[64,8]{1,0:T(8,128)}', space=vmem, size = 0x8000, scoped, tag = 'scratch operand']
  #allocation7 [shape = 's32[64,8]{1,0:T(8,128)}', space=vmem, size = 0x8000, scoped, tag = 'scratch operand']
  %s0 = inlined_call_operand.vmem [shape: f32[64,32], index: 0, kind: input, shape index: {}]
  %s1 = inlined_call_operand.vmem [shape: s32[64,1], index: 1, kind: input, shape index: {}]
  %s2 = inlined_call_operand.vmem [shape: bf16[64,256], index: 2, kind: input, shape index: {}]
  %s3 = inlined_call_operand.vmem [shape: bf16[64,256], index: 3, kind: input, shape index: {}]
  %s4 = inlined_call_operand.vmem [shape: f32[1,256], index: 4, kind: input, shape index: {}]
  %s5 = inlined_call_operand.vmem [shape: bf16[128,256], index: 5, kind: input, shape index: {}]
  %s6 = inlined_call_operand.vmem [shape: bf16[64,256], index: 6, kind: input, shape index: {}]
  %s7 = inlined_call_operand.vmem [shape: f32[1,256], index: 7, kind: input, shape index: {}]
  %s8 = inlined_call_operand.vmem [shape: bf16[64,8], index: 8, kind: input, shape index: {}]
  %s9 = inlined_call_operand.vmem [shape: f32[1,8], index: 9, kind: input, shape index: {}]
  %s10 = inlined_call_operand.vmem [shape: f32[8,8], index: 10, kind: input, shape index: {}]
  %s11 = inlined_call_operand.vmem [shape: f32[1,8], index: 11, kind: input, shape index: {}]
  %s12 = inlined_call_operand.vmem [shape: f32[1,8], index: 12, kind: input, shape index: {}]
  %s13 = inlined_call_operand.vmem [shape: s32[64,1], index: 13, kind: output, shape index: {}]
  %s14 = sld [smem:[#allocation0]]
  $region62: #{ner_forward.1} parent=0
    _
  %s16 = ssub.s32 1, %s14
  %s17 = scalar_select 0, %s16, %s14
  // Predicated region
  $region2: #{ner_forward.1} parent=0 // pred_check
    _
  $region3: #{ner_forward.1} parent=0 // pred_check_branch
    %19 = sbr.rel (0) target = $region5
  $region4: #{ner_forward.1} parent=0 // pred_region
    _
  $region5: #{ner_forward.1} parent=0 // pred_fallthru
    _
  // Predicated region
  $region6: #{ner_forward.1} parent=0 // pred_check
    _
  $region7: #{ner_forward.1} parent=0 // pred_check_branch
    %21 = sbr.rel (0) target = $region9
  $region8: #{ner_forward.1} parent=0 // pred_region
    _
  $region9: #{ner_forward.1} parent=0 // pred_fallthru
    _
  // Predicated region
  $region10: #{ner_forward.1} parent=0 // pred_check
    _
  $region11: #{ner_forward.1} parent=0 // pred_check_branch
    %23 = sbr.rel (0) target = $region13
  $region12: #{ner_forward.1} parent=0 // pred_region
    _
  $region13: #{ner_forward.1} parent=0 // pred_fallthru
    _
  // Predicated region
  $region14: #{ner_forward.1} parent=0 // pred_check
    _
  $region15: #{ner_forward.1} parent=0 // pred_check_branch
    %25 = sbr.rel (0) target = $region17
  $region16: #{ner_forward.1} parent=0 // pred_region
    _
  $region17: #{ner_forward.1} parent=0 // pred_fallthru
    _
  // Predicated region
  $region18: #{ner_forward.1} parent=0 // pred_check
    _
  $region19: #{ner_forward.1} parent=0 // pred_check_branch
    %27 = sbr.rel (0) target = $region21
  $region20: #{ner_forward.1} parent=0 // pred_region
    _
  $region21: #{ner_forward.1} parent=0 // pred_fallthru
    _
  // Predicated region
  $region22: #{ner_forward.1} parent=0 // pred_check
    _
  $region23: #{ner_forward.1} parent=0 // pred_check_branch
    %29 = sbr.rel (0) target = $region25
  $region24: #{ner_forward.1} parent=0 // pred_region
    _
  $region25: #{ner_forward.1} parent=0 // pred_fallthru
    _
  // Predicated region
  $region26: #{ner_forward.1} parent=0 // pred_check
    _
  $region27: #{ner_forward.1} parent=0 // pred_check_branch
    %31 = sbr.rel (0) target = $region29
  $region28: #{ner_forward.1} parent=0 // pred_region
    _
  $region29: #{ner_forward.1} parent=0 // pred_fallthru
    _
  // Predicated region
  $region30: #{ner_forward.1} parent=0 // pred_check
    _
  $region31: #{ner_forward.1} parent=0 // pred_check_branch
    %33 = sbr.rel (0) target = $region33
  $region32: #{ner_forward.1} parent=0 // pred_region
    _
  $region33: #{ner_forward.1} parent=0 // pred_fallthru
    _
  // Predicated region
  $region34: #{ner_forward.1} parent=0 // pred_check
    _
  $region35: #{ner_forward.1} parent=0 // pred_check_branch
    %35 = sbr.rel (0) target = $region37
  $region36: #{ner_forward.1} parent=0 // pred_region
    _
  $region37: #{ner_forward.1} parent=0 // pred_fallthru
    _
  // Predicated region
  $region38: #{ner_forward.1} parent=0 // pred_check
    _
  $region39: #{ner_forward.1} parent=0 // pred_check_branch
    %37 = sbr.rel (0) target = $region41
  $region40: #{ner_forward.1} parent=0 // pred_region
    _
  $region41: #{ner_forward.1} parent=0 // pred_fallthru
    _
  // Predicated region
  $region42: #{ner_forward.1} parent=0 // pred_check
    _
  $region43: #{ner_forward.1} parent=0 // pred_check_branch
    %39 = sbr.rel (0) target = $region45
  $region44: #{ner_forward.1} parent=0 // pred_region
    _
  $region45: #{ner_forward.1} parent=0 // pred_fallthru
    _
  // Predicated region
  $region46: #{ner_forward.1} parent=0 // pred_check
    _
  $region47: #{ner_forward.1} parent=0 // pred_check_branch
    %41 = sbr.rel (0) target = $region49
  $region48: #{ner_forward.1} parent=0 // pred_region
    _
  $region49: #{ner_forward.1} parent=0 // pred_fallthru
    _
  // Predicated region
  $region50: #{ner_forward.1} parent=0 // pred_check
    _
  $region51: #{ner_forward.1} parent=0 // pred_check_branch
    %43 = sbr.rel (0) target = $region53
  $region52: #{ner_forward.1} parent=0 // pred_region
    _
  $region53: #{ner_forward.1} parent=0 // pred_fallthru
    _
  %v45 = vld [vmem:[%s0 + $0x38] sm:$0xff]
  %vm46 = vcmask 261120
  %47 = vst.msk [vmem:[#allocation4] sm:$0xff] %vm46, %v45
  %v48 = vld [vmem:[%s0 + $0x30] sm:$0xff]
  %49 = vst.msk [vmem:[#allocation4 + $0x8] sm:$0xff] %vm46, %v48
  %v50 = vld [vmem:[%s0 + $0x28] sm:$0xff]
  %51 = vst.msk [vmem:[#allocation4 + $0x10] sm:$0xff] %vm46, %v50
  %v52 = vld [vmem:[%s0 + $0x20] sm:$0xff]
  %53 = vst.msk [vmem:[#allocation4 + $0x18] sm:$0xff] %vm46, %v52
  %v54 = vld [vmem:[%s0 + $0x18] sm:$0xff]
  %55 = vst.msk [vmem:[#allocation4 + $0x20] sm:$0xff] %vm46, %v54
  %v56 = vld [vmem:[%s0 + $0x10] sm:$0xff]
  %57 = vst.msk [vmem:[#allocation4 + $0x28] sm:$0xff] %vm46, %v56
  %v58 = vld [vmem:[%s0 + $0x8] sm:$0xff]
  %59 = vst.msk [vmem:[#allocation4 + $0x30] sm:$0xff] %vm46, %v58
  %v60 = vld [vmem:[%s0] sm:$0xff]
  %61 = vst.msk [vmem:[#allocation4 + $0x38] sm:$0xff] %vm46, %v60
  %v62 = vld [vmem:[%s0] sm:$0xff]
  %v63 = vld [vmem:[%s0 + $0x8] sm:$0xff]
  %v64 = vld [vmem:[%s0 + $0x10] sm:$0xff]
  %v65 = vld [vmem:[%s0 + $0x18] sm:$0xff]
  %v66 = vld [vmem:[%s0 + $0x20] sm:$0xff]
  %v67 = vld [vmem:[%s0 + $0x28] sm:$0xff]
  %v68 = vld [vmem:[%s0 + $0x30] sm:$0xff]
  %v69 = vld [vmem:[%s0 + $0x38] sm:$0xff]
  %v70 = vpack.c.bf16 %v63, %v62
  %v71 = vpack.c.bf16 %v65, %v64
  %v72 = vpack.c.bf16 %v67, %v66
  %v73 = vpack.c.bf16 %v69, %v68
  %v74 = vld [vmem:[#allocation4] sm:$0xff]
  %v75 = vld [vmem:[#allocation4 + $0x8] sm:$0xff]
  %v76 = vld [vmem:[#allocation4 + $0x10] sm:$0xff]
  %v77 = vld [vmem:[#allocation4 + $0x18] sm:$0xff]
  %v78 = vld [vmem:[#allocation4 + $0x20] sm:$0xff]
  %v79 = vld [vmem:[#allocation4 + $0x28] sm:$0xff]
  %v80 = vld [vmem:[#allocation4 + $0x30] sm:$0xff]
  %v81 = vld [vmem:[#allocation4 + $0x38] sm:$0xff]
  %v82 = vpack.c.bf16 %v75, %v74
  %v83 = vpack.c.bf16 %v77, %v76
  %v84 = vpack.c.bf16 %v79, %v78
  %v85 = vpack.c.bf16 %v81, %v80
  %v86 = vld [vmem:[%s2] sm:$0xff]
  %v87 = vld [vmem:[%s2 + $0x8] sm:$0xff]
  %v88 = vld [vmem:[%s2 + $0x10] sm:$0xff]
  %v89 = vld [vmem:[%s2 + $0x18] sm:$0xff]
  %v90 = vld [vmem:[%s2 + $0x20] sm:$0xff]
  %v91 = vld [vmem:[%s2 + $0x28] sm:$0xff]
  %v92 = vld [vmem:[%s2 + $0x30] sm:$0xff]
  %v93 = vld [vmem:[%s2 + $0x38] sm:$0xff]
  %v98 = vunpack.c.l.b16 %v90
  %v99 = vunpack.c.h.b16 %v90
  %v100 = vunpack.c.l.b16 %v91
  %v101 = vunpack.c.h.b16 %v91
  %v102 = vunpack.c.l.b16 %v92
  %v103 = vunpack.c.h.b16 %v92
  %v104 = vunpack.c.l.b16 %v93
  %v105 = vunpack.c.h.b16 %v93
  %v106 = vpack.c.b16 %v100, %v98
  %v107 = vpack.c.b16 %v101, %v99
  %v108 = vpack.c.b16 %v104, %v102
  %v109 = vpack.c.b16 %v105, %v103
  %v115 = vsel %vm46, %v82, 0
  %v118 = vsel %vm46, %v83, 0
  %v121 = vsel %vm46, %v84, 0
  %v124 = vsel %vm46, %v85, 0
  %126 = vmatpush.bf16.msra.mxu0 0
  %127 = vmatpush.bf16.msra.mxu0 0
  %128 = vmatpush.bf16.msra.mxu0 0
  %129 = vmatpush.bf16.msra.mxu0 0
  %130 = vmatpush.bf16.msra.mxu0 0
  %131 = vmatpush.bf16.msra.mxu0 0
  %132 = vmatpush.bf16.msra.mxu0 %v108
  %133 = vmatpush.bf16.msra.mxu0 %v106
  %134 = vmatmul.bf16.gmra.mxu0 %v115
  %v135 = vpop.f32.mrf.mxu0
  %v136 = vadd.f32 0.0, %v135
  %v137 = vpop.f32.mrf.mxu0
  %v138 = vadd.f32 0.0, %v137
  %139 = vmatmul.bf16.gmra.mxu0 %v118
  %v140 = vpop.f32.mrf.mxu0
  %v141 = vadd.f32 0.0, %v140
  %v142 = vpop.f32.mrf.mxu0
  %v143 = vadd.f32 0.0, %v142
  %144 = vmatmul.bf16.gmra.mxu0 %v121
  %v145 = vpop.f32.mrf.mxu0
  %v146 = vadd.f32 0.0, %v145
  %v147 = vpop.f32.mrf.mxu0
  %v148 = vadd.f32 0.0, %v147
  %149 = vmatmul.bf16.gmra.mxu0 %v124
  %v150 = vpop.f32.mrf.mxu0
  %v151 = vadd.f32 0.0, %v150
  %v152 = vpop.f32.mrf.mxu0
  %v153 = vadd.f32 0.0, %v152
  %154 = vdwg.mxu0
  %155 = vmatpush.bf16.msra.mxu0 0
  %156 = vmatpush.bf16.msra.mxu0 0
  %157 = vmatpush.bf16.msra.mxu0 0
  %158 = vmatpush.bf16.msra.mxu0 0
  %159 = vmatpush.bf16.msra.mxu0 0
  %160 = vmatpush.bf16.msra.mxu0 0
  %161 = vmatpush.bf16.msra.mxu0 %v109
  %162 = vmatpush.bf16.msra.mxu0 %v107
  %163 = vmatmul.bf16.gmra.mxu0 %v115
  %v164 = vpop.f32.mrf.mxu0
  %v165 = vadd.f32 0.0, %v164
  %v166 = vpop.f32.mrf.mxu0
  %v167 = vadd.f32 0.0, %v166
  %168 = vmatmul.bf16.gmra.mxu0 %v118
  %v169 = vpop.f32.mrf.mxu0
  %v170 = vadd.f32 0.0, %v169
  %v171 = vpop.f32.mrf.mxu0
  %v172 = vadd.f32 0.0, %v171
  %173 = vmatmul.bf16.gmra.mxu0 %v121
  %v174 = vpop.f32.mrf.mxu0
  %v175 = vadd.f32 0.0, %v174
  %v176 = vpop.f32.mrf.mxu0
  %v177 = vadd.f32 0.0, %v176
  %178 = vmatmul.bf16.gmra.mxu0 %v124
  %v179 = vpop.f32.mrf.mxu0
  %v180 = vadd.f32 0.0, %v179
  %v181 = vpop.f32.mrf.mxu0
  %v182 = vadd.f32 0.0, %v181
  %183 = vdwg.mxu0
  %v188 = vunpack.c.l.b16 %v86
  %v189 = vunpack.c.h.b16 %v86
  %v190 = vunpack.c.l.b16 %v87
  %v191 = vunpack.c.h.b16 %v87
  %v192 = vunpack.c.l.b16 %v88
  %v193 = vunpack.c.h.b16 %v88
  %v194 = vunpack.c.l.b16 %v89
  %v195 = vunpack.c.h.b16 %v89
  %v196 = vpack.c.b16 %v190, %v188
  %v197 = vpack.c.b16 %v191, %v189
  %v198 = vpack.c.b16 %v194, %v192
  %v199 = vpack.c.b16 %v195, %v193
  %v205 = vsel %vm46, %v70, 0
  %v208 = vsel %vm46, %v71, 0
  %v211 = vsel %vm46, %v72, 0
  %v214 = vsel %vm46, %v73, 0
  %216 = vmatpush.bf16.msra.mxu0 0
  %217 = vmatpush.bf16.msra.mxu0 0
  %218 = vmatpush.bf16.msra.mxu0 0
  %219 = vmatpush.bf16.msra.mxu0 0
  %220 = vmatpush.bf16.msra.mxu0 0
  %221 = vmatpush.bf16.msra.mxu0 0
  %222 = vmatpush.bf16.msra.mxu0 %v198
  %223 = vmatpush.bf16.msra.mxu0 %v196
  %224 = vmatmul.bf16.gmra.mxu0 %v205
  %v225 = vpop.f32.mrf.mxu0
  %v226 = vadd.f32 %v136, %v225
  %v227 = vpop.f32.mrf.mxu0
  %v228 = vadd.f32 %v138, %v227
  %229 = vmatmul.bf16.gmra.mxu0 %v208
  %v230 = vpop.f32.mrf.mxu0
  %v231 = vadd.f32 %v141, %v230
  %v232 = vpop.f32.mrf.mxu0
  %v233 = vadd.f32 %v143, %v232
  %234 = vmatmul.bf16.gmra.mxu0 %v211
  %v235 = vpop.f32.mrf.mxu0
  %v236 = vadd.f32 %v146, %v235
  %v237 = vpop.f32.mrf.mxu0
  %v238 = vadd.f32 %v148, %v237
  %239 = vmatmul.bf16.gmra.mxu0 %v214
  %v240 = vpop.f32.mrf.mxu0
  %v241 = vadd.f32 %v151, %v240
  %v242 = vpop.f32.mrf.mxu0
  %v243 = vadd.f32 %v153, %v242
  %244 = vdwg.mxu0
  %245 = vmatpush.bf16.msra.mxu0 0
  %246 = vmatpush.bf16.msra.mxu0 0
  %247 = vmatpush.bf16.msra.mxu0 0
  %248 = vmatpush.bf16.msra.mxu0 0
  %249 = vmatpush.bf16.msra.mxu0 0
  %250 = vmatpush.bf16.msra.mxu0 0
  %251 = vmatpush.bf16.msra.mxu0 %v199
  %252 = vmatpush.bf16.msra.mxu0 %v197
  %253 = vmatmul.bf16.gmra.mxu0 %v205
  %v254 = vpop.f32.mrf.mxu0
  %v255 = vadd.f32 %v165, %v254
  %v256 = vpop.f32.mrf.mxu0
  %v257 = vadd.f32 %v167, %v256
  %258 = vmatmul.bf16.gmra.mxu0 %v208
  %v259 = vpop.f32.mrf.mxu0
  %v260 = vadd.f32 %v170, %v259
  %v261 = vpop.f32.mrf.mxu0
  %v262 = vadd.f32 %v172, %v261
  %263 = vmatmul.bf16.gmra.mxu0 %v211
  %v264 = vpop.f32.mrf.mxu0
  %v265 = vadd.f32 %v175, %v264
  %v266 = vpop.f32.mrf.mxu0
  %v267 = vadd.f32 %v177, %v266
  %268 = vmatmul.bf16.gmra.mxu0 %v214
  %v269 = vpop.f32.mrf.mxu0
  %v270 = vadd.f32 %v180, %v269
  %v271 = vpop.f32.mrf.mxu0
  %v272 = vadd.f32 %v182, %v271
  %273 = vdwg.mxu0
  %v274 = vld [vmem:[%s4] sm:$0x3]
  %v276 = vperm.slane %v274, 0
  %v277 = vperm.slane %v274, 1
  %v280 = vadd.f32 %v226, %v276
  %v281 = vadd.f32 %v255, %v277
  %v282 = vadd.f32 %v228, %v276
  %v283 = vadd.f32 %v257, %v277
  %v284 = vadd.f32 %v231, %v276
  %v285 = vadd.f32 %v260, %v277
  %v286 = vadd.f32 %v233, %v276
  %v287 = vadd.f32 %v262, %v277
  %v288 = vadd.f32 %v236, %v276
  %v289 = vadd.f32 %v265, %v277
  %v290 = vadd.f32 %v238, %v276
  %v291 = vadd.f32 %v267, %v277
  %v292 = vadd.f32 %v241, %v276
  %v293 = vadd.f32 %v270, %v277
  %v294 = vadd.f32 %v243, %v276
  %v295 = vadd.f32 %v272, %v277
  %296 = vst [vmem:[#allocation5] sm:$0xff] %v280
  %297 = vst [vmem:[#allocation5 + $0x8] sm:$0xff] %v281
  %298 = vst [vmem:[#allocation5 + $0x10] sm:$0xff] %v282
  %299 = vst [vmem:[#allocation5 + $0x18] sm:$0xff] %v283
  %300 = vst [vmem:[#allocation5 + $0x20] sm:$0xff] %v284
  %301 = vst [vmem:[#allocation5 + $0x28] sm:$0xff] %v285
  %302 = vst [vmem:[#allocation5 + $0x30] sm:$0xff] %v286
  %303 = vst [vmem:[#allocation5 + $0x38] sm:$0xff] %v287
  %304 = vst [vmem:[#allocation5 + $0x40] sm:$0xff] %v288
  %305 = vst [vmem:[#allocation5 + $0x48] sm:$0xff] %v289
  %306 = vst [vmem:[#allocation5 + $0x50] sm:$0xff] %v290
  %307 = vst [vmem:[#allocation5 + $0x58] sm:$0xff] %v291
  %308 = vst [vmem:[#allocation5 + $0x60] sm:$0xff] %v292
  %309 = vst [vmem:[#allocation5 + $0x68] sm:$0xff] %v293
  %310 = vst [vmem:[#allocation5 + $0x70] sm:$0xff] %v294
  %311 = vst [vmem:[#allocation5 + $0x78] sm:$0xff] %v295
  %v312 = vld [vmem:[%s3] sm:$0xff]
  %v313 = vld [vmem:[%s3 + $0x8] sm:$0xff]
  %v314 = vld [vmem:[%s3 + $0x10] sm:$0xff]
  %v315 = vld [vmem:[%s3 + $0x18] sm:$0xff]
  %v316 = vld [vmem:[%s3 + $0x20] sm:$0xff]
  %v317 = vld [vmem:[%s3 + $0x28] sm:$0xff]
  %v318 = vld [vmem:[%s3 + $0x30] sm:$0xff]
  %v319 = vld [vmem:[%s3 + $0x38] sm:$0xff]
  %s320 = smul.u32 0, 2
  %s321 = smul.addr %s320, 8
  %s322 = scalar_lea.vmem [#allocation5], %s321
  %v323 = vld [vmem:[%s322] sm:$0xff]
  %v324 = vld [vmem:[%s322 + $0x8] sm:$0xff]
  %v333 = vunpack.c.l.b16 %v312
  %v334 = vunpack.c.h.b16 %v312
  %v335 = vunpack.c.l.b16 %v313
  %v336 = vunpack.c.h.b16 %v313
  %v337 = vunpack.c.l.b16 %v314
  %v338 = vunpack.c.h.b16 %v314
  %v339 = vunpack.c.l.b16 %v315
  %v340 = vunpack.c.h.b16 %v315
  %v341 = vunpack.c.l.b16 %v316
  %v342 = vunpack.c.h.b16 %v316
  %v343 = vunpack.c.l.b16 %v317
  %v344 = vunpack.c.h.b16 %v317
  %v345 = vunpack.c.l.b16 %v318
  %v346 = vunpack.c.h.b16 %v318
  %v347 = vunpack.c.l.b16 %v319
  %v348 = vunpack.c.h.b16 %v319
  %v349 = vpack.c.b16 %v335, %v333
  %v350 = vpack.c.b16 %v336, %v334
  %v351 = vpack.c.b16 %v339, %v337
  %v352 = vpack.c.b16 %v340, %v338
  %v353 = vpack.c.b16 %v343, %v341
  %v354 = vpack.c.b16 %v344, %v342
  %v355 = vpack.c.b16 %v347, %v345
  %v356 = vpack.c.b16 %v348, %v346
  %vm365 = vcmask 523264
  %v367 = vsel %vm365, 0, 0
  %369 = vmatpush.bf16.msra.mxu0 0
  %370 = vmatpush.bf16.msra.mxu0 0
  %371 = vmatpush.bf16.msra.mxu0 0
  %372 = vmatpush.bf16.msra.mxu0 0
  %373 = vmatpush.bf16.msra.mxu0 %v355
  %374 = vmatpush.bf16.msra.mxu0 %v353
  %375 = vmatpush.bf16.msra.mxu0 %v351
  %376 = vmatpush.bf16.msra.mxu0 %v349
  %377 = vmatmul.bf16.gmra.mxu0 %v367
  %v378 = vpop.f32.mrf.mxu0
  %v379 = vadd.f32 0.0, %v378
  %v380 = vpop.f32.mrf.mxu0
  %381 = vdwg.mxu0
  %382 = vmatpush.bf16.msra.mxu0 0
  %383 = vmatpush.bf16.msra.mxu0 0
  %384 = vmatpush.bf16.msra.mxu0 0
  %385 = vmatpush.bf16.msra.mxu0 0
  %386 = vmatpush.bf16.msra.mxu0 %v356
  %387 = vmatpush.bf16.msra.mxu0 %v354
  %388 = vmatpush.bf16.msra.mxu0 %v352
  %389 = vmatpush.bf16.msra.mxu0 %v350
  %390 = vmatmul.bf16.gmra.mxu0 %v367
  %v391 = vpop.f32.mrf.mxu0
  %v392 = vadd.f32 0.0, %v391
  %v393 = vpop.f32.mrf.mxu0
  %394 = vdwg.mxu0
  %v395 = vadd.f32 %v323, %v379
  %v396 = vadd.f32 %v324, %v392
  %v397 = vmul.f32 %v395, 0.5
  %v398 = vmul.f32 %v396, 0.5
  %v399 = vtanh.pop %v397
  %v400 = vtanh.pop %v398
  %v401 = vmul.f32 %v399, 0.5
  %v402 = vmul.f32 %v400, 0.5
  %v403 = vadd.f32 %v401, 0.5
  %v404 = vadd.f32 %v402, 0.5
  %v405 = vtanh.pop %v396
  %v406 = vmul.f32 %v403, 0.0
  %408 = vrot.lane.b32.xlu0 %v405, 64
  %v409 = vpop.permute.xlu0 %408
  %v411 = vmul.f32 %v403, %v409
  %413 = vrot.lane.b32.xlu0 %v411, 64
  %v414 = vpop.permute.xlu0 %413
  %v416 = vadd.f32 %v406, %v414
  %v417 = vtanh.pop %v416
  %419 = vrot.lane.b32.xlu0 %v417, 64
  %v420 = vpop.permute.xlu0 %419
  %v422 = vmul.f32 %v404, %v420
  %423 = vst.msk [vmem:[#allocation2] sm:$0xff] %vm46, %v422
  %s424 = scalar_lea.vmem [#allocation2], 56
  %vm425 = vcmask 523520
  %426 = vst.msk [vmem:[%s424] sm:$0xff] %vm425, %v422
  %s427 = smul.u32 1, 2
  %s428 = smul.addr %s427, 8
  %s429 = scalar_lea.vmem [#allocation5], %s428
  %v430 = vld [vmem:[%s429] sm:$0xff]
  %v431 = vld [vmem:[%s429 + $0x8] sm:$0xff]
  %v432 = vpack.c.bf16 %v422, %v422
  %v434 = vsel %vm365, %v432, 0
  %436 = vmatpush.bf16.msra.mxu0 0
  %437 = vmatpush.bf16.msra.mxu0 0
  %438 = vmatpush.bf16.msra.mxu0 0
  %439 = vmatpush.bf16.msra.mxu0 0
  %440 = vmatpush.bf16.msra.mxu0 %v355
  %441 = vmatpush.bf16.msra.mxu0 %v353
  %442 = vmatpush.bf16.msra.mxu0 %v351
  %443 = vmatpush.bf16.msra.mxu0 %v349
  %444 = vmatmul.bf16.gmra.mxu0 %v434
  %v445 = vpop.f32.mrf.mxu0
  %v446 = vadd.f32 0.0, %v445
  %v447 = vpop.f32.mrf.mxu0
  %448 = vdwg.mxu0
  %449 = vmatpush.bf16.msra.mxu0 0
  %450 = vmatpush.bf16.msra.mxu0 0
  %451 = vmatpush.bf16.msra.mxu0 0
  %452 = vmatpush.bf16.msra.mxu0 0
  %453 = vmatpush.bf16.msra.mxu0 %v356
  %454 = vmatpush.bf16.msra.mxu0 %v354
  %455 = vmatpush.bf16.msra.mxu0 %v352
  %456 = vmatpush.bf16.msra.mxu0 %v350
  %457 = vmatmul.bf16.gmra.mxu0 %v434
  %v458 = vpop.f32.mrf.mxu0
  %v459 = vadd.f32 0.0, %v458
  %v460 = vpop.f32.mrf.mxu0
  %461 = vdwg.mxu0
  %v462 = vadd.f32 %v430, %v446
  %v463 = vadd.f32 %v431, %v459
  %v464 = vmul.f32 %v462, 0.5
  %v465 = vmul.f32 %v463, 0.5
  %v466 = vtanh.pop %v464
  %v467 = vtanh.pop %v465
  %v468 = vmul.f32 %v466, 0.5
  %v469 = vmul.f32 %v467, 0.5
  %v470 = vadd.f32 %v468, 0.5
  %v471 = vadd.f32 %v469, 0.5
  %v472 = vtanh.pop %v463
  %v473 = vmul.f32 %v470, %v416
  %475 = vrot.lane.b32.xlu0 %v472, 64
  %v476 = vpop.permute.xlu0 %475
  %v478 = vmul.f32 %v470, %v476
  %480 = vrot.lane.b32.xlu0 %v478, 64
  %v481 = vpop.permute.xlu0 %480
  %v483 = vadd.f32 %v473, %v481
  %v484 = vtanh.pop %v483
  %486 = vrot.lane.b32.xlu0 %v484, 64
  %v487 = vpop.permute.xlu0 %486
  %v489 = vmul.f32 %v471, %v487
  %s490 = scalar_lea.vmem [#allocation2], 8
  %491 = vst.msk [vmem:[%s490] sm:$0xff] %vm46, %v489
  %s492 = scalar_lea.vmem [#allocation2], 48
  %493 = vst.msk [vmem:[%s492] sm:$0xff] %vm425, %v489
  %s494 = smul.u32 2, 2
  %s495 = smul.addr %s494, 8
  %s496 = scalar_lea.vmem [#allocation5], %s495
  %v497 = vld [vmem:[%s496] sm:$0xff]
  %v498 = vld [vmem:[%s496 + $0x8] sm:$0xff]
  %v499 = vpack.c.bf16 %v489, %v489
  %v501 = vsel %vm365, %v499, 0
  %503 = vmatpush.bf16.msra.mxu0 0
  %504 = vmatpush.bf16.msra.mxu0 0
  %505 = vmatpush.bf16.msra.mxu0 0
  %506 = vmatpush.bf16.msra.mxu0 0
  %507 = vmatpush.bf16.msra.mxu0 %v355
  %508 = vmatpush.bf16.msra.mxu0 %v353
  %509 = vmatpush.bf16.msra.mxu0 %v351
  %510 = vmatpush.bf16.msra.mxu0 %v349
  %511 = vmatmul.bf16.gmra.mxu0 %v501
  %v512 = vpop.f32.mrf.mxu0
  %v513 = vadd.f32 0.0, %v512
  %v514 = vpop.f32.mrf.mxu0
  %515 = vdwg.mxu0
  %516 = vmatpush.bf16.msra.mxu0 0
  %517 = vmatpush.bf16.msra.mxu0 0
  %518 = vmatpush.bf16.msra.mxu0 0
  %519 = vmatpush.bf16.msra.mxu0 0
  %520 = vmatpush.bf16.msra.mxu0 %v356
  %521 = vmatpush.bf16.msra.mxu0 %v354
  %522 = vmatpush.bf16.msra.mxu0 %v352
  %523 = vmatpush.bf16.msra.mxu0 %v350
  %524 = vmatmul.bf16.gmra.mxu0 %v501
  %v525 = vpop.f32.mrf.mxu0
  %v526 = vadd.f32 0.0, %v525
  %v527 = vpop.f32.mrf.mxu0
  %528 = vdwg.mxu0
  %v529 = vadd.f32 %v497, %v513
  %v530 = vadd.f32 %v498, %v526
  %v531 = vmul.f32 %v529, 0.5
  %v532 = vmul.f32 %v530, 0.5
  %v533 = vtanh.pop %v531
  %v534 = vtanh.pop %v532
  %v535 = vmul.f32 %v533, 0.5
  %v536 = vmul.f32 %v534, 0.5
  %v537 = vadd.f32 %v535, 0.5
  %v538 = vadd.f32 %v536, 0.5
  %v539 = vtanh.pop %v530
  %v540 = vmul.f32 %v537, %v483
  %542 = vrot.lane.b32.xlu0 %v539, 64
  %v543 = vpop.permute.xlu0 %542
  %v545 = vmul.f32 %v537, %v543
  %547 = vrot.lane.b32.xlu0 %v545, 64
  %v548 = vpop.permute.xlu0 %547
  %v550 = vadd.f32 %v540, %v548
  %v551 = vtanh.pop %v550
  %553 = vrot.lane.b32.xlu0 %v551, 64
  %v554 = vpop.permute.xlu0 %553
  %v556 = vmul.f32 %v538, %v554
  %s557 = scalar_lea.vmem [#allocation2], 16
  %558 = vst.msk [vmem:[%s557] sm:$0xff] %vm46, %v556
  %s559 = scalar_lea.vmem [#allocation2], 40
  %560 = vst.msk [vmem:[%s559] sm:$0xff] %vm425, %v556
  %s561 = smul.u32 3, 2
  %s562 = smul.addr %s561, 8
  %s563 = scalar_lea.vmem [#allocation5], %s562
  %v564 = vld [vmem:[%s563] sm:$0xff]
  %v565 = vld [vmem:[%s563 + $0x8] sm:$0xff]
  %v566 = vpack.c.bf16 %v556, %v556
  %v568 = vsel %vm365, %v566, 0
  %570 = vmatpush.bf16.msra.mxu0 0
  %571 = vmatpush.bf16.msra.mxu0 0
  %572 = vmatpush.bf16.msra.mxu0 0
  %573 = vmatpush.bf16.msra.mxu0 0
  %574 = vmatpush.bf16.msra.mxu0 %v355
  %575 = vmatpush.bf16.msra.mxu0 %v353
  %576 = vmatpush.bf16.msra.mxu0 %v351
  %577 = vmatpush.bf16.msra.mxu0 %v349
  %578 = vmatmul.bf16.gmra.mxu0 %v568
  %v579 = vpop.f32.mrf.mxu0
  %v580 = vadd.f32 0.0, %v579
  %v581 = vpop.f32.mrf.mxu0
  %582 = vdwg.mxu0
  %583 = vmatpush.bf16.msra.mxu0 0
  %584 = vmatpush.bf16.msra.mxu0 0
  %585 = vmatpush.bf16.msra.mxu0 0
  %586 = vmatpush.bf16.msra.mxu0 0
  %587 = vmatpush.bf16.msra.mxu0 %v356
  %588 = vmatpush.bf16.msra.mxu0 %v354
  %589 = vmatpush.bf16.msra.mxu0 %v352
  %590 = vmatpush.bf16.msra.mxu0 %v350
  %591 = vmatmul.bf16.gmra.mxu0 %v568
  %v592 = vpop.f32.mrf.mxu0
  %v593 = vadd.f32 0.0, %v592
  %v594 = vpop.f32.mrf.mxu0
  %595 = vdwg.mxu0
  %v596 = vadd.f32 %v564, %v580
  %v597 = vadd.f32 %v565, %v593
  %v598 = vmul.f32 %v596, 0.5
  %v599 = vmul.f32 %v597, 0.5
  %v600 = vtanh.pop %v598
  %v601 = vtanh.pop %v599
  %v602 = vmul.f32 %v600, 0.5
  %v603 = vmul.f32 %v601, 0.5
  %v604 = vadd.f32 %v602, 0.5
  %v605 = vadd.f32 %v603, 0.5
  %v606 = vtanh.pop %v597
  %v607 = vmul.f32 %v604, %v550
  %609 = vrot.lane.b32.xlu0 %v606, 64
  %v610 = vpop.permute.xlu0 %609
  %v612 = vmul.f32 %v604, %v610
  %614 = vrot.lane.b32.xlu0 %v612, 64
  %v615 = vpop.permute.xlu0 %614
  %v617 = vadd.f32 %v607, %v615
  %v618 = vtanh.pop %v617
  %620 = vrot.lane.b32.xlu0 %v618, 64
  %v621 = vpop.permute.xlu0 %620
  %v623 = vmul.f32 %v605, %v621
  %s624 = scalar_lea.vmem [#allocation2], 24
  %625 = vst.msk [vmem:[%s624] sm:$0xff] %vm46, %v623
  %s626 = scalar_lea.vmem [#allocation2], 32
  %627 = vst.msk [vmem:[%s626] sm:$0xff] %vm425, %v623
  %s628 = smul.u32 4, 2
  %s629 = smul.addr %s628, 8
  %s630 = scalar_lea.vmem [#allocation5], %s629
  %v631 = vld [vmem:[%s630] sm:$0xff]
  %v632 = vld [vmem:[%s630 + $0x8] sm:$0xff]
  %v633 = vpack.c.bf16 %v623, %v623
  %v635 = vsel %vm365, %v633, 0
  %637 = vmatpush.bf16.msra.mxu0 0
  %638 = vmatpush.bf16.msra.mxu0 0
  %639 = vmatpush.bf16.msra.mxu0 0
  %640 = vmatpush.bf16.msra.mxu0 0
  %641 = vmatpush.bf16.msra.mxu0 %v355
  %642 = vmatpush.bf16.msra.mxu0 %v353
  %643 = vmatpush.bf16.msra.mxu0 %v351
  %644 = vmatpush.bf16.msra.mxu0 %v349
  %645 = vmatmul.bf16.gmra.mxu0 %v635
  %v646 = vpop.f32.mrf.mxu0
  %v647 = vadd.f32 0.0, %v646
  %v648 = vpop.f32.mrf.mxu0
  %649 = vdwg.mxu0
  %650 = vmatpush.bf16.msra.mxu0 0
  %651 = vmatpush.bf16.msra.mxu0 0
  %652 = vmatpush.bf16.msra.mxu0 0
  %653 = vmatpush.bf16.msra.mxu0 0
  %654 = vmatpush.bf16.msra.mxu0 %v356
  %655 = vmatpush.bf16.msra.mxu0 %v354
  %656 = vmatpush.bf16.msra.mxu0 %v352
  %657 = vmatpush.bf16.msra.mxu0 %v350
  %658 = vmatmul.bf16.gmra.mxu0 %v635
  %v659 = vpop.f32.mrf.mxu0
  %v660 = vadd.f32 0.0, %v659
  %v661 = vpop.f32.mrf.mxu0
  %662 = vdwg.mxu0
  %v663 = vadd.f32 %v631, %v647
  %v664 = vadd.f32 %v632, %v660
  %v665 = vmul.f32 %v663, 0.5
  %v666 = vmul.f32 %v664, 0.5
  %v667 = vtanh.pop %v665
  %v668 = vtanh.pop %v666
  %v669 = vmul.f32 %v667, 0.5
  %v670 = vmul.f32 %v668, 0.5
  %v671 = vadd.f32 %v669, 0.5
  %v672 = vadd.f32 %v670, 0.5
  %v673 = vtanh.pop %v664
  %v674 = vmul.f32 %v671, %v617
  %676 = vrot.lane.b32.xlu0 %v673, 64
  %v677 = vpop.permute.xlu0 %676
  %v679 = vmul.f32 %v671, %v677
  %681 = vrot.lane.b32.xlu0 %v679, 64
  %v682 = vpop.permute.xlu0 %681
  %v684 = vadd.f32 %v674, %v682
  %v685 = vtanh.pop %v684
  %687 = vrot.lane.b32.xlu0 %v685, 64
  %v688 = vpop.permute.xlu0 %687
  %v690 = vmul.f32 %v672, %v688
  %691 = vst.msk [vmem:[%s626] sm:$0xff] %vm46, %v690
  %692 = vst.msk [vmem:[%s624] sm:$0xff] %vm425, %v690
  %s693 = smul.u32 5, 2
  %s694 = smul.addr %s693, 8
  %s695 = scalar_lea.vmem [#allocation5], %s694
  %v696 = vld [vmem:[%s695] sm:$0xff]
  %v697 = vld [vmem:[%s695 + $0x8] sm:$0xff]
  %v698 = vpack.c.bf16 %v690, %v690
  %v700 = vsel %vm365, %v698, 0
  %702 = vmatpush.bf16.msra.mxu0 0
  %703 = vmatpush.bf16.msra.mxu0 0
  %704 = vmatpush.bf16.msra.mxu0 0
  %705 = vmatpush.bf16.msra.mxu0 0
  %706 = vmatpush.bf16.msra.mxu0 %v355
  %707 = vmatpush.bf16.msra.mxu0 %v353
  %708 = vmatpush.bf16.msra.mxu0 %v351
  %709 = vmatpush.bf16.msra.mxu0 %v349
  %710 = vmatmul.bf16.gmra.mxu0 %v700
  %v711 = vpop.f32.mrf.mxu0
  %v712 = vadd.f32 0.0, %v711
  %v713 = vpop.f32.mrf.mxu0
  %714 = vdwg.mxu0
  %715 = vmatpush.bf16.msra.mxu0 0
  %716 = vmatpush.bf16.msra.mxu0 0
  %717 = vmatpush.bf16.msra.mxu0 0
  %718 = vmatpush.bf16.msra.mxu0 0
  %719 = vmatpush.bf16.msra.mxu0 %v356
  %720 = vmatpush.bf16.msra.mxu0 %v354
  %721 = vmatpush.bf16.msra.mxu0 %v352
  %722 = vmatpush.bf16.msra.mxu0 %v350
  %723 = vmatmul.bf16.gmra.mxu0 %v700
  %v724 = vpop.f32.mrf.mxu0
  %v725 = vadd.f32 0.0, %v724
  %v726 = vpop.f32.mrf.mxu0
  %727 = vdwg.mxu0
  %v728 = vadd.f32 %v696, %v712
  %v729 = vadd.f32 %v697, %v725
  %v730 = vmul.f32 %v728, 0.5
  %v731 = vmul.f32 %v729, 0.5
  %v732 = vtanh.pop %v730
  %v733 = vtanh.pop %v731
  %v734 = vmul.f32 %v732, 0.5
  %v735 = vmul.f32 %v733, 0.5
  %v736 = vadd.f32 %v734, 0.5
  %v737 = vadd.f32 %v735, 0.5
  %v738 = vtanh.pop %v729
  %v739 = vmul.f32 %v736, %v684
  %741 = vrot.lane.b32.xlu0 %v738, 64
  %v742 = vpop.permute.xlu0 %741
  %v744 = vmul.f32 %v736, %v742
  %746 = vrot.lane.b32.xlu0 %v744, 64
  %v747 = vpop.permute.xlu0 %746
  %v749 = vadd.f32 %v739, %v747
  %v750 = vtanh.pop %v749
  %752 = vrot.lane.b32.xlu0 %v750, 64
  %v753 = vpop.permute.xlu0 %752
  %v755 = vmul.f32 %v737, %v753
  %756 = vst.msk [vmem:[%s559] sm:$0xff] %vm46, %v755
  %757 = vst.msk [vmem:[%s557] sm:$0xff] %vm425, %v755
  %s758 = smul.u32 6, 2
  %s759 = smul.addr %s758, 8
  %s760 = scalar_lea.vmem [#allocation5], %s759
  %v761 = vld [vmem:[%s760] sm:$0xff]
  %v762 = vld [vmem:[%s760 + $0x8] sm:$0xff]
  %v763 = vpack.c.bf16 %v755, %v755
  %v765 = vsel %vm365, %v763, 0
  %767 = vmatpush.bf16.msra.mxu0 0
  %768 = vmatpush.bf16.msra.mxu0 0
  %769 = vmatpush.bf16.msra.mxu0 0
  %770 = vmatpush.bf16.msra.mxu0 0
  %771 = vmatpush.bf16.msra.mxu0 %v355
  %772 = vmatpush.bf16.msra.mxu0 %v353
  %773 = vmatpush.bf16.msra.mxu0 %v351
  %774 = vmatpush.bf16.msra.mxu0 %v349
  %775 = vmatmul.bf16.gmra.mxu0 %v765
  %v776 = vpop.f32.mrf.mxu0
  %v777 = vadd.f32 0.0, %v776
  %v778 = vpop.f32.mrf.mxu0
  %779 = vdwg.mxu0
  %780 = vmatpush.bf16.msra.mxu0 0
  %781 = vmatpush.bf16.msra.mxu0 0
  %782 = vmatpush.bf16.msra.mxu0 0
  %783 = vmatpush.bf16.msra.mxu0 0
  %784 = vmatpush.bf16.msra.mxu0 %v356
  %785 = vmatpush.bf16.msra.mxu0 %v354
  %786 = vmatpush.bf16.msra.mxu0 %v352
  %787 = vmatpush.bf16.msra.mxu0 %v350
  %788 = vmatmul.bf16.gmra.mxu0 %v765
  %v789 = vpop.f32.mrf.mxu0
  %v790 = vadd.f32 0.0, %v789
  %v791 = vpop.f32.mrf.mxu0
  %792 = vdwg.mxu0
  %v793 = vadd.f32 %v761, %v777
  %v794 = vadd.f32 %v762, %v790
  %v795 = vmul.f32 %v793, 0.5
  %v796 = vmul.f32 %v794, 0.5
  %v797 = vtanh.pop %v795
  %v798 = vtanh.pop %v796
  %v799 = vmul.f32 %v797, 0.5
  %v800 = vmul.f32 %v798, 0.5
  %v801 = vadd.f32 %v799, 0.5
  %v802 = vadd.f32 %v800, 0.5
  %v803 = vtanh.pop %v794
  %v804 = vmul.f32 %v801, %v749
  %806 = vrot.lane.b32.xlu0 %v803, 64
  %v807 = vpop.permute.xlu0 %806
  %v809 = vmul.f32 %v801, %v807
  %811 = vrot.lane.b32.xlu0 %v809, 64
  %v812 = vpop.permute.xlu0 %811
  %v814 = vadd.f32 %v804, %v812
  %v815 = vtanh.pop %v814
  %817 = vrot.lane.b32.xlu0 %v815, 64
  %v818 = vpop.permute.xlu0 %817
  %v820 = vmul.f32 %v802, %v818
  %821 = vst.msk [vmem:[%s492] sm:$0xff] %vm46, %v820
  %822 = vst.msk [vmem:[%s490] sm:$0xff] %vm425, %v820
  %s823 = smul.u32 7, 2
  %s824 = smul.addr %s823, 8
  %s825 = scalar_lea.vmem [#allocation5], %s824
  %v826 = vld [vmem:[%s825] sm:$0xff]
  %v827 = vld [vmem:[%s825 + $0x8] sm:$0xff]
  %v828 = vpack.c.bf16 %v820, %v820
  %v830 = vsel %vm365, %v828, 0
  %832 = vmatpush.bf16.msra.mxu0 0
  %833 = vmatpush.bf16.msra.mxu0 0
  %834 = vmatpush.bf16.msra.mxu0 0
  %835 = vmatpush.bf16.msra.mxu0 0
  %836 = vmatpush.bf16.msra.mxu0 %v355
  %837 = vmatpush.bf16.msra.mxu0 %v353
  %838 = vmatpush.bf16.msra.mxu0 %v351
  %839 = vmatpush.bf16.msra.mxu0 %v349
  %840 = vmatmul.bf16.gmra.mxu0 %v830
  %v841 = vpop.f32.mrf.mxu0
  %v842 = vadd.f32 0.0, %v841
  %v843 = vpop.f32.mrf.mxu0
  %844 = vdwg.mxu0
  %845 = vmatpush.bf16.msra.mxu0 0
  %846 = vmatpush.bf16.msra.mxu0 0
  %847 = vmatpush.bf16.msra.mxu0 0
  %848 = vmatpush.bf16.msra.mxu0 0
  %849 = vmatpush.bf16.msra.mxu0 %v356
  %850 = vmatpush.bf16.msra.mxu0 %v354
  %851 = vmatpush.bf16.msra.mxu0 %v352
  %852 = vmatpush.bf16.msra.mxu0 %v350
  %853 = vmatmul.bf16.gmra.mxu0 %v830
  %v854 = vpop.f32.mrf.mxu0
  %v855 = vadd.f32 0.0, %v854
  %v856 = vpop.f32.mrf.mxu0
  %857 = vdwg.mxu0
  %v858 = vadd.f32 %v826, %v842
  %v859 = vadd.f32 %v827, %v855
  %v860 = vmul.f32 %v858, 0.5
  %v861 = vmul.f32 %v859, 0.5
  %v862 = vtanh.pop %v860
  %v863 = vtanh.pop %v861
  %v864 = vmul.f32 %v862, 0.5
  %v865 = vmul.f32 %v863, 0.5
  %v866 = vadd.f32 %v864, 0.5
  %v867 = vadd.f32 %v865, 0.5
  %v868 = vtanh.pop %v859
  %v869 = vmul.f32 %v866, %v814
  %871 = vrot.lane.b32.xlu0 %v868, 64
  %v872 = vpop.permute.xlu0 %871
  %v874 = vmul.f32 %v866, %v872
  %876 = vrot.lane.b32.xlu0 %v874, 64
  %v877 = vpop.permute.xlu0 %876
  %v879 = vadd.f32 %v869, %v877
  %v880 = vtanh.pop %v879
  %882 = vrot.lane.b32.xlu0 %v880, 64
  %v883 = vpop.permute.xlu0 %882
  %v885 = vmul.f32 %v867, %v883
  %886 = vst.msk [vmem:[%s424] sm:$0xff] %vm46, %v885
  %887 = vst.msk [vmem:[#allocation2] sm:$0xff] %vm425, %v885
  %v888 = vld [vmem:[#allocation2 + $0x38] sm:$0xff]
  %889 = vst.msk [vmem:[#allocation4] sm:$0xff] %vm365, %v888
  %v890 = vld [vmem:[#allocation2 + $0x30] sm:$0xff]
  %891 = vst.msk [vmem:[#allocation4 + $0x8] sm:$0xff] %vm365, %v890
  %v892 = vld [vmem:[#allocation2 + $0x28] sm:$0xff]
  %893 = vst.msk [vmem:[#allocation4 + $0x10] sm:$0xff] %vm365, %v892
  %v894 = vld [vmem:[#allocation2 + $0x20] sm:$0xff]
  %895 = vst.msk [vmem:[#allocation4 + $0x18] sm:$0xff] %vm365, %v894
  %v896 = vld [vmem:[#allocation2 + $0x18] sm:$0xff]
  %897 = vst.msk [vmem:[#allocation4 + $0x20] sm:$0xff] %vm365, %v896
  %v898 = vld [vmem:[#allocation2 + $0x10] sm:$0xff]
  %899 = vst.msk [vmem:[#allocation4 + $0x28] sm:$0xff] %vm365, %v898
  %v900 = vld [vmem:[#allocation2 + $0x8] sm:$0xff]
  %901 = vst.msk [vmem:[#allocation4 + $0x30] sm:$0xff] %vm365, %v900
  %v902 = vld [vmem:[#allocation2] sm:$0xff]
  %903 = vst.msk [vmem:[#allocation4 + $0x38] sm:$0xff] %vm365, %v902
  %v904 = vld [vmem:[#allocation2] sm:$0xff]
  %v905 = vld [vmem:[#allocation2 + $0x8] sm:$0xff]
  %v906 = vld [vmem:[#allocation2 + $0x10] sm:$0xff]
  %v907 = vld [vmem:[#allocation2 + $0x18] sm:$0xff]
  %v908 = vld [vmem:[#allocation2 + $0x20] sm:$0xff]
  %v909 = vld [vmem:[#allocation2 + $0x28] sm:$0xff]
  %v910 = vld [vmem:[#allocation2 + $0x30] sm:$0xff]
  %v911 = vld [vmem:[#allocation2 + $0x38] sm:$0xff]
  %v912 = vpack.c.bf16 %v905, %v904
  %v913 = vpack.c.bf16 %v907, %v906
  %v914 = vpack.c.bf16 %v909, %v908
  %v915 = vpack.c.bf16 %v911, %v910
  %v916 = vld [vmem:[#allocation4] sm:$0xff]
  %v917 = vld [vmem:[#allocation4 + $0x8] sm:$0xff]
  %v918 = vld [vmem:[#allocation4 + $0x10] sm:$0xff]
  %v919 = vld [vmem:[#allocation4 + $0x18] sm:$0xff]
  %v920 = vld [vmem:[#allocation4 + $0x20] sm:$0xff]
  %v921 = vld [vmem:[#allocation4 + $0x28] sm:$0xff]
  %v922 = vld [vmem:[#allocation4 + $0x30] sm:$0xff]
  %v923 = vld [vmem:[#allocation4 + $0x38] sm:$0xff]
  %v924 = vpack.c.bf16 %v917, %v916
  %v925 = vpack.c.bf16 %v919, %v918
  %v926 = vpack.c.bf16 %v921, %v920
  %v927 = vpack.c.bf16 %v923, %v922
  %v928 = vld [vmem:[%s5] sm:$0xff]
  %v929 = vld [vmem:[%s5 + $0x8] sm:$0xff]
  %v930 = vld [vmem:[%s5 + $0x10] sm:$0xff]
  %v931 = vld [vmem:[%s5 + $0x18] sm:$0xff]
  %v932 = vld [vmem:[%s5 + $0x20] sm:$0xff]
  %v933 = vld [vmem:[%s5 + $0x28] sm:$0xff]
  %v934 = vld [vmem:[%s5 + $0x30] sm:$0xff]
  %v935 = vld [vmem:[%s5 + $0x38] sm:$0xff]
  %v936 = vld [vmem:[%s5 + $0x40] sm:$0xff]
  %v937 = vld [vmem:[%s5 + $0x48] sm:$0xff]
  %v938 = vld [vmem:[%s5 + $0x50] sm:$0xff]
  %v939 = vld [vmem:[%s5 + $0x58] sm:$0xff]
  %v940 = vld [vmem:[%s5 + $0x60] sm:$0xff]
  %v941 = vld [vmem:[%s5 + $0x68] sm:$0xff]
  %v942 = vld [vmem:[%s5 + $0x70] sm:$0xff]
  %v943 = vld [vmem:[%s5 + $0x78] sm:$0xff]
  %v952 = vunpack.c.l.b16 %v936
  %v953 = vunpack.c.h.b16 %v936
  %v954 = vunpack.c.l.b16 %v937
  %v955 = vunpack.c.h.b16 %v937
  %v956 = vunpack.c.l.b16 %v938
  %v957 = vunpack.c.h.b16 %v938
  %v958 = vunpack.c.l.b16 %v939
  %v959 = vunpack.c.h.b16 %v939
  %v960 = vunpack.c.l.b16 %v940
  %v961 = vunpack.c.h.b16 %v940
  %v962 = vunpack.c.l.b16 %v941
  %v963 = vunpack.c.h.b16 %v941
  %v964 = vunpack.c.l.b16 %v942
  %v965 = vunpack.c.h.b16 %v942
  %v966 = vunpack.c.l.b16 %v943
  %v967 = vunpack.c.h.b16 %v943
  %v968 = vpack.c.b16 %v954, %v952
  %v969 = vpack.c.b16 %v955, %v953
  %v970 = vpack.c.b16 %v958, %v956
  %v971 = vpack.c.b16 %v959, %v957
  %v972 = vpack.c.b16 %v962, %v960
  %v973 = vpack.c.b16 %v963, %v961
  %v974 = vpack.c.b16 %v966, %v964
  %v975 = vpack.c.b16 %v967, %v965
  %v985 = vsel %vm365, %v924, 0
  %v988 = vsel %vm365, %v925, 0
  %v991 = vsel %vm365, %v926, 0
  %v994 = vsel %vm365, %v927, 0
  %996 = vmatpush.bf16.msra.mxu0 0
  %997 = vmatpush.bf16.msra.mxu0 0
  %998 = vmatpush.bf16.msra.mxu0 0
  %999 = vmatpush.bf16.msra.mxu0 0
  %1000 = vmatpush.bf16.msra.mxu0 %v974
  %1001 = vmatpush.bf16.msra.mxu0 %v972
  %1002 = vmatpush.bf16.msra.mxu0 %v970
  %1003 = vmatpush.bf16.msra.mxu0 %v968
  %1004 = vmatmul.bf16.gmra.mxu0 %v985
  %v1005 = vpop.f32.mrf.mxu0
  %v1006 = vadd.f32 0.0, %v1005
  %v1007 = vpop.f32.mrf.mxu0
  %v1008 = vadd.f32 0.0, %v1007
  %1009 = vmatmul.bf16.gmra.mxu0 %v988
  %v1010 = vpop.f32.mrf.mxu0
  %v1011 = vadd.f32 0.0, %v1010
  %v1012 = vpop.f32.mrf.mxu0
  %v1013 = vadd.f32 0.0, %v1012
  %1014 = vmatmul.bf16.gmra.mxu0 %v991
  %v1015 = vpop.f32.mrf.mxu0
  %v1016 = vadd.f32 0.0, %v1015
  %v1017 = vpop.f32.mrf.mxu0
  %v1018 = vadd.f32 0.0, %v1017
  %1019 = vmatmul.bf16.gmra.mxu0 %v994
  %v1020 = vpop.f32.mrf.mxu0
  %v1021 = vadd.f32 0.0, %v1020
  %v1022 = vpop.f32.mrf.mxu0
  %v1023 = vadd.f32 0.0, %v1022
  %1024 = vdwg.mxu0
  %1025 = vmatpush.bf16.msra.mxu0 0
  %1026 = vmatpush.bf16.msra.mxu0 0
  %1027 = vmatpush.bf16.msra.mxu0 0
  %1028 = vmatpush.bf16.msra.mxu0 0
  %1029 = vmatpush.bf16.msra.mxu0 %v975
  %1030 = vmatpush.bf16.msra.mxu0 %v973
  %1031 = vmatpush.bf16.msra.mxu0 %v971
  %1032 = vmatpush.bf16.msra.mxu0 %v969
  %1033 = vmatmul.bf16.gmra.mxu0 %v985
  %v1034 = vpop.f32.mrf.mxu0
  %v1035 = vadd.f32 0.0, %v1034
  %v1036 = vpop.f32.mrf.mxu0
  %v1037 = vadd.f32 0.0, %v1036
  %1038 = vmatmul.bf16.gmra.mxu0 %v988
  %v1039 = vpop.f32.mrf.mxu0
  %v1040 = vadd.f32 0.0, %v1039
  %v1041 = vpop.f32.mrf.mxu0
  %v1042 = vadd.f32 0.0, %v1041
  %1043 = vmatmul.bf16.gmra.mxu0 %v991
  %v1044 = vpop.f32.mrf.mxu0
  %v1045 = vadd.f32 0.0, %v1044
  %v1046 = vpop.f32.mrf.mxu0
  %v1047 = vadd.f32 0.0, %v1046
  %1048 = vmatmul.bf16.gmra.mxu0 %v994
  %v1049 = vpop.f32.mrf.mxu0
  %v1050 = vadd.f32 0.0, %v1049
  %v1051 = vpop.f32.mrf.mxu0
  %v1052 = vadd.f32 0.0, %v1051
  %1053 = vdwg.mxu0
  %v1062 = vunpack.c.l.b16 %v928
  %v1063 = vunpack.c.h.b16 %v928
  %v1064 = vunpack.c.l.b16 %v929
  %v1065 = vunpack.c.h.b16 %v929
  %v1066 = vunpack.c.l.b16 %v930
  %v1067 = vunpack.c.h.b16 %v930
  %v1068 = vunpack.c.l.b16 %v931
  %v1069 = vunpack.c.h.b16 %v931
  %v1070 = vunpack.c.l.b16 %v932
  %v1071 = vunpack.c.h.b16 %v932
  %v1072 = vunpack.c.l.b16 %v933
  %v1073 = vunpack.c.h.b16 %v933
  %v1074 = vunpack.c.l.b16 %v934
  %v1075 = vunpack.c.h.b16 %v934
  %v1076 = vunpack.c.l.b16 %v935
  %v1077 = vunpack.c.h.b16 %v935
  %v1078 = vpack.c.b16 %v1064, %v1062
  %v1079 = vpack.c.b16 %v1065, %v1063
  %v1080 = vpack.c.b16 %v1068, %v1066
  %v1081 = vpack.c.b16 %v1069, %v1067
  %v1082 = vpack.c.b16 %v1072, %v1070
  %v1083 = vpack.c.b16 %v1073, %v1071
  %v1084 = vpack.c.b16 %v1076, %v1074
  %v1085 = vpack.c.b16 %v1077, %v1075
  %v1095 = vsel %vm365, %v912, 0
  %v1098 = vsel %vm365, %v913, 0
  %v1101 = vsel %vm365, %v914, 0
  %v1104 = vsel %vm365, %v915, 0
  %1106 = vmatpush.bf16.msra.mxu0 0
  %1107 = vmatpush.bf16.msra.mxu0 0
  %1108 = vmatpush.bf16.msra.mxu0 0
  %1109 = vmatpush.bf16.msra.mxu0 0
  %1110 = vmatpush.bf16.msra.mxu0 %v1084
  %1111 = vmatpush.bf16.msra.mxu0 %v1082
  %1112 = vmatpush.bf16.msra.mxu0 %v1080
  %1113 = vmatpush.bf16.msra.mxu0 %v1078
  %1114 = vmatmul.bf16.gmra.mxu0 %v1095
  %v1115 = vpop.f32.mrf.mxu0
  %v1116 = vadd.f32 %v1006, %v1115
  %v1117 = vpop.f32.mrf.mxu0
  %v1118 = vadd.f32 %v1008, %v1117
  %1119 = vmatmul.bf16.gmra.mxu0 %v1098
  %v1120 = vpop.f32.mrf.mxu0
  %v1121 = vadd.f32 %v1011, %v1120
  %v1122 = vpop.f32.mrf.mxu0
  %v1123 = vadd.f32 %v1013, %v1122
  %1124 = vmatmul.bf16.gmra.mxu0 %v1101
  %v1125 = vpop.f32.mrf.mxu0
  %v1126 = vadd.f32 %v1016, %v1125
  %v1127 = vpop.f32.mrf.mxu0
  %v1128 = vadd.f32 %v1018, %v1127
  %1129 = vmatmul.bf16.gmra.mxu0 %v1104
  %v1130 = vpop.f32.mrf.mxu0
  %v1131 = vadd.f32 %v1021, %v1130
  %v1132 = vpop.f32.mrf.mxu0
  %v1133 = vadd.f32 %v1023, %v1132
  %1134 = vdwg.mxu0
  %1135 = vmatpush.bf16.msra.mxu0 0
  %1136 = vmatpush.bf16.msra.mxu0 0
  %1137 = vmatpush.bf16.msra.mxu0 0
  %1138 = vmatpush.bf16.msra.mxu0 0
  %1139 = vmatpush.bf16.msra.mxu0 %v1085
  %1140 = vmatpush.bf16.msra.mxu0 %v1083
  %1141 = vmatpush.bf16.msra.mxu0 %v1081
  %1142 = vmatpush.bf16.msra.mxu0 %v1079
  %1143 = vmatmul.bf16.gmra.mxu0 %v1095
  %v1144 = vpop.f32.mrf.mxu0
  %v1145 = vadd.f32 %v1035, %v1144
  %v1146 = vpop.f32.mrf.mxu0
  %v1147 = vadd.f32 %v1037, %v1146
  %1148 = vmatmul.bf16.gmra.mxu0 %v1098
  %v1149 = vpop.f32.mrf.mxu0
  %v1150 = vadd.f32 %v1040, %v1149
  %v1151 = vpop.f32.mrf.mxu0
  %v1152 = vadd.f32 %v1042, %v1151
  %1153 = vmatmul.bf16.gmra.mxu0 %v1101
  %v1154 = vpop.f32.mrf.mxu0
  %v1155 = vadd.f32 %v1045, %v1154
  %v1156 = vpop.f32.mrf.mxu0
  %v1157 = vadd.f32 %v1047, %v1156
  %1158 = vmatmul.bf16.gmra.mxu0 %v1104
  %v1159 = vpop.f32.mrf.mxu0
  %v1160 = vadd.f32 %v1050, %v1159
  %v1161 = vpop.f32.mrf.mxu0
  %v1162 = vadd.f32 %v1052, %v1161
  %1163 = vdwg.mxu0
  %v1164 = vld [vmem:[%s7] sm:$0x3]
  %v1166 = vperm.slane %v1164, 0
  %v1167 = vperm.slane %v1164, 1
  %v1170 = vadd.f32 %v1116, %v1166
  %v1171 = vadd.f32 %v1145, %v1167
  %v1172 = vadd.f32 %v1118, %v1166
  %v1173 = vadd.f32 %v1147, %v1167
  %v1174 = vadd.f32 %v1121, %v1166
  %v1175 = vadd.f32 %v1150, %v1167
  %v1176 = vadd.f32 %v1123, %v1166
  %v1177 = vadd.f32 %v1152, %v1167
  %v1178 = vadd.f32 %v1126, %v1166
  %v1179 = vadd.f32 %v1155, %v1167
  %v1180 = vadd.f32 %v1128, %v1166
  %v1181 = vadd.f32 %v1157, %v1167
  %v1182 = vadd.f32 %v1131, %v1166
  %v1183 = vadd.f32 %v1160, %v1167
  %v1184 = vadd.f32 %v1133, %v1166
  %v1185 = vadd.f32 %v1162, %v1167
  %1186 = vst [vmem:[#allocation5] sm:$0xff] %v1170
  %1187 = vst [vmem:[#allocation5 + $0x8] sm:$0xff] %v1171
  %1188 = vst [vmem:[#allocation5 + $0x10] sm:$0xff] %v1172
  %1189 = vst [vmem:[#allocation5 + $0x18] sm:$0xff] %v1173
  %1190 = vst [vmem:[#allocation5 + $0x20] sm:$0xff] %v1174
  %1191 = vst [vmem:[#allocation5 + $0x28] sm:$0xff] %v1175
  %1192 = vst [vmem:[#allocation5 + $0x30] sm:$0xff] %v1176
  %1193 = vst [vmem:[#allocation5 + $0x38] sm:$0xff] %v1177
  %1194 = vst [vmem:[#allocation5 + $0x40] sm:$0xff] %v1178
  %1195 = vst [vmem:[#allocation5 + $0x48] sm:$0xff] %v1179
  %1196 = vst [vmem:[#allocation5 + $0x50] sm:$0xff] %v1180
  %1197 = vst [vmem:[#allocation5 + $0x58] sm:$0xff] %v1181
  %1198 = vst [vmem:[#allocation5 + $0x60] sm:$0xff] %v1182
  %1199 = vst [vmem:[#allocation5 + $0x68] sm:$0xff] %v1183
  %1200 = vst [vmem:[#allocation5 + $0x70] sm:$0xff] %v1184
  %1201 = vst [vmem:[#allocation5 + $0x78] sm:$0xff] %v1185
  %v1202 = vld [vmem:[%s6] sm:$0xff]
  %v1203 = vld [vmem:[%s6 + $0x8] sm:$0xff]
  %v1204 = vld [vmem:[%s6 + $0x10] sm:$0xff]
  %v1205 = vld [vmem:[%s6 + $0x18] sm:$0xff]
  %v1206 = vld [vmem:[%s6 + $0x20] sm:$0xff]
  %v1207 = vld [vmem:[%s6 + $0x28] sm:$0xff]
  %v1208 = vld [vmem:[%s6 + $0x30] sm:$0xff]
  %v1209 = vld [vmem:[%s6 + $0x38] sm:$0xff]
  %v1210 = vld [vmem:[%s322] sm:$0xff]
  %v1211 = vld [vmem:[%s322 + $0x8] sm:$0xff]
  %v1220 = vunpack.c.l.b16 %v1202
  %v1221 = vunpack.c.h.b16 %v1202
  %v1222 = vunpack.c.l.b16 %v1203
  %v1223 = vunpack.c.h.b16 %v1203
  %v1224 = vunpack.c.l.b16 %v1204
  %v1225 = vunpack.c.h.b16 %v1204
  %v1226 = vunpack.c.l.b16 %v1205
  %v1227 = vunpack.c.h.b16 %v1205
  %v1228 = vunpack.c.l.b16 %v1206
  %v1229 = vunpack.c.h.b16 %v1206
  %v1230 = vunpack.c.l.b16 %v1207
  %v1231 = vunpack.c.h.b16 %v1207
  %v1232 = vunpack.c.l.b16 %v1208
  %v1233 = vunpack.c.h.b16 %v1208
  %v1234 = vunpack.c.l.b16 %v1209
  %v1235 = vunpack.c.h.b16 %v1209
  %v1236 = vpack.c.b16 %v1222, %v1220
  %v1237 = vpack.c.b16 %v1223, %v1221
  %v1238 = vpack.c.b16 %v1226, %v1224
  %v1239 = vpack.c.b16 %v1227, %v1225
  %v1240 = vpack.c.b16 %v1230, %v1228
  %v1241 = vpack.c.b16 %v1231, %v1229
  %v1242 = vpack.c.b16 %v1234, %v1232
  %v1243 = vpack.c.b16 %v1235, %v1233
  %1252 = vmatpush.bf16.msra.mxu0 0
  %1253 = vmatpush.bf16.msra.mxu0 0
  %1254 = vmatpush.bf16.msra.mxu0 0
  %1255 = vmatpush.bf16.msra.mxu0 0
  %1256 = vmatpush.bf16.msra.mxu0 %v1242
  %1257 = vmatpush.bf16.msra.mxu0 %v1240
  %1258 = vmatpush.bf16.msra.mxu0 %v1238
  %1259 = vmatpush.bf16.msra.mxu0 %v1236
  %1260 = vmatmul.bf16.gmra.mxu0 %v367
  %v1261 = vpop.f32.mrf.mxu0
  %v1262 = vadd.f32 0.0, %v1261
  %v1263 = vpop.f32.mrf.mxu0
  %1264 = vdwg.mxu0
  %1265 = vmatpush.bf16.msra.mxu0 0
  %1266 = vmatpush.bf16.msra.mxu0 0
  %1267 = vmatpush.bf16.msra.mxu0 0
  %1268 = vmatpush.bf16.msra.mxu0 0
  %1269 = vmatpush.bf16.msra.mxu0 %v1243
  %1270 = vmatpush.bf16.msra.mxu0 %v1241
  %1271 = vmatpush.bf16.msra.mxu0 %v1239
  %1272 = vmatpush.bf16.msra.mxu0 %v1237
  %1273 = vmatmul.bf16.gmra.mxu0 %v367
  %v1274 = vpop.f32.mrf.mxu0
  %v1275 = vadd.f32 0.0, %v1274
  %v1276 = vpop.f32.mrf.mxu0
  %1277 = vdwg.mxu0
  %v1278 = vadd.f32 %v1210, %v1262
  %v1279 = vadd.f32 %v1211, %v1275
  %v1280 = vmul.f32 %v1278, 0.5
  %v1281 = vmul.f32 %v1279, 0.5
  %v1282 = vtanh.pop %v1280
  %v1283 = vtanh.pop %v1281
  %v1284 = vmul.f32 %v1282, 0.5
  %v1285 = vmul.f32 %v1283, 0.5
  %v1286 = vadd.f32 %v1284, 0.5
  %v1287 = vadd.f32 %v1285, 0.5
  %v1288 = vtanh.pop %v1279
  %v1289 = vmul.f32 %v1286, 0.0
  %1291 = vrot.lane.b32.xlu0 %v1288, 64
  %v1292 = vpop.permute.xlu0 %1291
  %v1294 = vmul.f32 %v1286, %v1292
  %1296 = vrot.lane.b32.xlu0 %v1294, 64
  %v1297 = vpop.permute.xlu0 %1296
  %v1299 = vadd.f32 %v1289, %v1297
  %v1300 = vtanh.pop %v1299
  %1302 = vrot.lane.b32.xlu0 %v1300, 64
  %v1303 = vpop.permute.xlu0 %1302
  %v1305 = vmul.f32 %v1287, %v1303
  %1306 = vst.msk [vmem:[#allocation3] sm:$0xff] %vm46, %v1305
  %s1307 = scalar_lea.vmem [#allocation3], 56
  %1308 = vst.msk [vmem:[%s1307] sm:$0xff] %vm425, %v1305
  %v1309 = vld [vmem:[%s429] sm:$0xff]
  %v1310 = vld [vmem:[%s429 + $0x8] sm:$0xff]
  %v1311 = vpack.c.bf16 %v1305, %v1305
  %v1313 = vsel %vm365, %v1311, 0
  %1315 = vmatpush.bf16.msra.mxu0 0
  %1316 = vmatpush.bf16.msra.mxu0 0
  %1317 = vmatpush.bf16.msra.mxu0 0
  %1318 = vmatpush.bf16.msra.mxu0 0
  %1319 = vmatpush.bf16.msra.mxu0 %v1242
  %1320 = vmatpush.bf16.msra.mxu0 %v1240
  %1321 = vmatpush.bf16.msra.mxu0 %v1238
  %1322 = vmatpush.bf16.msra.mxu0 %v1236
  %1323 = vmatmul.bf16.gmra.mxu0 %v1313
  %v1324 = vpop.f32.mrf.mxu0
  %v1325 = vadd.f32 0.0, %v1324
  %v1326 = vpop.f32.mrf.mxu0
  %1327 = vdwg.mxu0
  %1328 = vmatpush.bf16.msra.mxu0 0
  %1329 = vmatpush.bf16.msra.mxu0 0
  %1330 = vmatpush.bf16.msra.mxu0 0
  %1331 = vmatpush.bf16.msra.mxu0 0
  %1332 = vmatpush.bf16.msra.mxu0 %v1243
  %1333 = vmatpush.bf16.msra.mxu0 %v1241
  %1334 = vmatpush.bf16.msra.mxu0 %v1239
  %1335 = vmatpush.bf16.msra.mxu0 %v1237
  %1336 = vmatmul.bf16.gmra.mxu0 %v1313
  %v1337 = vpop.f32.mrf.mxu0
  %v1338 = vadd.f32 0.0, %v1337
  %v1339 = vpop.f32.mrf.mxu0
  %1340 = vdwg.mxu0
  %v1341 = vadd.f32 %v1309, %v1325
  %v1342 = vadd.f32 %v1310, %v1338
  %v1343 = vmul.f32 %v1341, 0.5
  %v1344 = vmul.f32 %v1342, 0.5
  %v1345 = vtanh.pop %v1343
  %v1346 = vtanh.pop %v1344
  %v1347 = vmul.f32 %v1345, 0.5
  %v1348 = vmul.f32 %v1346, 0.5
  %v1349 = vadd.f32 %v1347, 0.5
  %v1350 = vadd.f32 %v1348, 0.5
  %v1351 = vtanh.pop %v1342
  %v1352 = vmul.f32 %v1349, %v1299
  %1354 = vrot.lane.b32.xlu0 %v1351, 64
  %v1355 = vpop.permute.xlu0 %1354
  %v1357 = vmul.f32 %v1349, %v1355
  %1359 = vrot.lane.b32.xlu0 %v1357, 64
  %v1360 = vpop.permute.xlu0 %1359
  %v1362 = vadd.f32 %v1352, %v1360
  %v1363 = vtanh.pop %v1362
  %1365 = vrot.lane.b32.xlu0 %v1363, 64
  %v1366 = vpop.permute.xlu0 %1365
  %v1368 = vmul.f32 %v1350, %v1366
  %s1369 = scalar_lea.vmem [#allocation3], 8
  %1370 = vst.msk [vmem:[%s1369] sm:$0xff] %vm46, %v1368
  %s1371 = scalar_lea.vmem [#allocation3], 48
  %1372 = vst.msk [vmem:[%s1371] sm:$0xff] %vm425, %v1368
  %v1373 = vld [vmem:[%s496] sm:$0xff]
  %v1374 = vld [vmem:[%s496 + $0x8] sm:$0xff]
  %v1375 = vpack.c.bf16 %v1368, %v1368
  %v1377 = vsel %vm365, %v1375, 0
  %1379 = vmatpush.bf16.msra.mxu0 0
  %1380 = vmatpush.bf16.msra.mxu0 0
  %1381 = vmatpush.bf16.msra.mxu0 0
  %1382 = vmatpush.bf16.msra.mxu0 0
  %1383 = vmatpush.bf16.msra.mxu0 %v1242
  %1384 = vmatpush.bf16.msra.mxu0 %v1240
  %1385 = vmatpush.bf16.msra.mxu0 %v1238
  %1386 = vmatpush.bf16.msra.mxu0 %v1236
  %1387 = vmatmul.bf16.gmra.mxu0 %v1377
  %v1388 = vpop.f32.mrf.mxu0
  %v1389 = vadd.f32 0.0, %v1388
  %v1390 = vpop.f32.mrf.mxu0
  %1391 = vdwg.mxu0
  %1392 = vmatpush.bf16.msra.mxu0 0
  %1393 = vmatpush.bf16.msra.mxu0 0
  %1394 = vmatpush.bf16.msra.mxu0 0
  %1395 = vmatpush.bf16.msra.mxu0 0
  %1396 = vmatpush.bf16.msra.mxu0 %v1243
  %1397 = vmatpush.bf16.msra.mxu0 %v1241
  %1398 = vmatpush.bf16.msra.mxu0 %v1239
  %1399 = vmatpush.bf16.msra.mxu0 %v1237
  %1400 = vmatmul.bf16.gmra.mxu0 %v1377
  %v1401 = vpop.f32.mrf.mxu0
  %v1402 = vadd.f32 0.0, %v1401
  %v1403 = vpop.f32.mrf.mxu0
  %1404 = vdwg.mxu0
  %v1405 = vadd.f32 %v1373, %v1389
  %v1406 = vadd.f32 %v1374, %v1402
  %v1407 = vmul.f32 %v1405, 0.5
  %v1408 = vmul.f32 %v1406, 0.5
  %v1409 = vtanh.pop %v1407
  %v1410 = vtanh.pop %v1408
  %v1411 = vmul.f32 %v1409, 0.5
  %v1412 = vmul.f32 %v1410, 0.5
  %v1413 = vadd.f32 %v1411, 0.5
  %v1414 = vadd.f32 %v1412, 0.5
  %v1415 = vtanh.pop %v1406
  %v1416 = vmul.f32 %v1413, %v1362
  %1418 = vrot.lane.b32.xlu0 %v1415, 64
  %v1419 = vpop.permute.xlu0 %1418
  %v1421 = vmul.f32 %v1413, %v1419
  %1423 = vrot.lane.b32.xlu0 %v1421, 64
  %v1424 = vpop.permute.xlu0 %1423
  %v1426 = vadd.f32 %v1416, %v1424
  %v1427 = vtanh.pop %v1426
  %1429 = vrot.lane.b32.xlu0 %v1427, 64
  %v1430 = vpop.permute.xlu0 %1429
  %v1432 = vmul.f32 %v1414, %v1430
  %s1433 = scalar_lea.vmem [#allocation3], 16
  %1434 = vst.msk [vmem:[%s1433] sm:$0xff] %vm46, %v1432
  %s1435 = scalar_lea.vmem [#allocation3], 40
  %1436 = vst.msk [vmem:[%s1435] sm:$0xff] %vm425, %v1432
  %v1437 = vld [vmem:[%s563] sm:$0xff]
  %v1438 = vld [vmem:[%s563 + $0x8] sm:$0xff]
  %v1439 = vpack.c.bf16 %v1432, %v1432
  %v1441 = vsel %vm365, %v1439, 0
  %1443 = vmatpush.bf16.msra.mxu0 0
  %1444 = vmatpush.bf16.msra.mxu0 0
  %1445 = vmatpush.bf16.msra.mxu0 0
  %1446 = vmatpush.bf16.msra.mxu0 0
  %1447 = vmatpush.bf16.msra.mxu0 %v1242
  %1448 = vmatpush.bf16.msra.mxu0 %v1240
  %1449 = vmatpush.bf16.msra.mxu0 %v1238
  %1450 = vmatpush.bf16.msra.mxu0 %v1236
  %1451 = vmatmul.bf16.gmra.mxu0 %v1441
  %v1452 = vpop.f32.mrf.mxu0
  %v1453 = vadd.f32 0.0, %v1452
  %v1454 = vpop.f32.mrf.mxu0
  %1455 = vdwg.mxu0
  %1456 = vmatpush.bf16.msra.mxu0 0
  %1457 = vmatpush.bf16.msra.mxu0 0
  %1458 = vmatpush.bf16.msra.mxu0 0
  %1459 = vmatpush.bf16.msra.mxu0 0
  %1460 = vmatpush.bf16.msra.mxu0 %v1243
  %1461 = vmatpush.bf16.msra.mxu0 %v1241
  %1462 = vmatpush.bf16.msra.mxu0 %v1239
  %1463 = vmatpush.bf16.msra.mxu0 %v1237
  %1464 = vmatmul.bf16.gmra.mxu0 %v1441
  %v1465 = vpop.f32.mrf.mxu0
  %v1466 = vadd.f32 0.0, %v1465
  %v1467 = vpop.f32.mrf.mxu0
  %1468 = vdwg.mxu0
  %v1469 = vadd.f32 %v1437, %v1453
  %v1470 = vadd.f32 %v1438, %v1466
  %v1471 = vmul.f32 %v1469, 0.5
  %v1472 = vmul.f32 %v1470, 0.5
  %v1473 = vtanh.pop %v1471
  %v1474 = vtanh.pop %v1472
  %v1475 = vmul.f32 %v1473, 0.5
  %v1476 = vmul.f32 %v1474, 0.5
  %v1477 = vadd.f32 %v1475, 0.5
  %v1478 = vadd.f32 %v1476, 0.5
  %v1479 = vtanh.pop %v1470
  %v1480 = vmul.f32 %v1477, %v1426
  %1482 = vrot.lane.b32.xlu0 %v1479, 64
  %v1483 = vpop.permute.xlu0 %1482
  %v1485 = vmul.f32 %v1477, %v1483
  %1487 = vrot.lane.b32.xlu0 %v1485, 64
  %v1488 = vpop.permute.xlu0 %1487
  %v1490 = vadd.f32 %v1480, %v1488
  %v1491 = vtanh.pop %v1490
  %1493 = vrot.lane.b32.xlu0 %v1491, 64
  %v1494 = vpop.permute.xlu0 %1493
  %v1496 = vmul.f32 %v1478, %v1494
  %s1497 = scalar_lea.vmem [#allocation3], 24
  %1498 = vst.msk [vmem:[%s1497] sm:$0xff] %vm46, %v1496
  %s1499 = scalar_lea.vmem [#allocation3], 32
  %1500 = vst.msk [vmem:[%s1499] sm:$0xff] %vm425, %v1496
  %v1501 = vld [vmem:[%s630] sm:$0xff]
  %v1502 = vld [vmem:[%s630 + $0x8] sm:$0xff]
  %v1503 = vpack.c.bf16 %v1496, %v1496
  %v1505 = vsel %vm365, %v1503, 0
  %1507 = vmatpush.bf16.msra.mxu0 0
  %1508 = vmatpush.bf16.msra.mxu0 0
  %1509 = vmatpush.bf16.msra.mxu0 0
  %1510 = vmatpush.bf16.msra.mxu0 0
  %1511 = vmatpush.bf16.msra.mxu0 %v1242
  %1512 = vmatpush.bf16.msra.mxu0 %v1240
  %1513 = vmatpush.bf16.msra.mxu0 %v1238
  %1514 = vmatpush.bf16.msra.mxu0 %v1236
  %1515 = vmatmul.bf16.gmra.mxu0 %v1505
  %v1516 = vpop.f32.mrf.mxu0
  %v1517 = vadd.f32 0.0, %v1516
  %v1518 = vpop.f32.mrf.mxu0
  %1519 = vdwg.mxu0
  %1520 = vmatpush.bf16.msra.mxu0 0
  %1521 = vmatpush.bf16.msra.mxu0 0
  %1522 = vmatpush.bf16.msra.mxu0 0
  %1523 = vmatpush.bf16.msra.mxu0 0
  %1524 = vmatpush.bf16.msra.mxu0 %v1243
  %1525 = vmatpush.bf16.msra.mxu0 %v1241
  %1526 = vmatpush.bf16.msra.mxu0 %v1239
  %1527 = vmatpush.bf16.msra.mxu0 %v1237
  %1528 = vmatmul.bf16.gmra.mxu0 %v1505
  %v1529 = vpop.f32.mrf.mxu0
  %v1530 = vadd.f32 0.0, %v1529
  %v1531 = vpop.f32.mrf.mxu0
  %1532 = vdwg.mxu0
  %v1533 = vadd.f32 %v1501, %v1517
  %v1534 = vadd.f32 %v1502, %v1530
  %v1535 = vmul.f32 %v1533, 0.5
  %v1536 = vmul.f32 %v1534, 0.5
  %v1537 = vtanh.pop %v1535
  %v1538 = vtanh.pop %v1536
  %v1539 = vmul.f32 %v1537, 0.5
  %v1540 = vmul.f32 %v1538, 0.5
  %v1541 = vadd.f32 %v1539, 0.5
  %v1542 = vadd.f32 %v1540, 0.5
  %v1543 = vtanh.pop %v1534
  %v1544 = vmul.f32 %v1541, %v1490
  %1546 = vrot.lane.b32.xlu0 %v1543, 64
  %v1547 = vpop.permute.xlu0 %1546
  %v1549 = vmul.f32 %v1541, %v1547
  %1551 = vrot.lane.b32.xlu0 %v1549, 64
  %v1552 = vpop.permute.xlu0 %1551
  %v1554 = vadd.f32 %v1544, %v1552
  %v1555 = vtanh.pop %v1554
  %1557 = vrot.lane.b32.xlu0 %v1555, 64
  %v1558 = vpop.permute.xlu0 %1557
  %v1560 = vmul.f32 %v1542, %v1558
  %1561 = vst.msk [vmem:[%s1499] sm:$0xff] %vm46, %v1560
  %1562 = vst.msk [vmem:[%s1497] sm:$0xff] %vm425, %v1560
  %v1563 = vld [vmem:[%s695] sm:$0xff]
  %v1564 = vld [vmem:[%s695 + $0x8] sm:$0xff]
  %v1565 = vpack.c.bf16 %v1560, %v1560
  %v1567 = vsel %vm365, %v1565, 0
  %1569 = vmatpush.bf16.msra.mxu0 0
  %1570 = vmatpush.bf16.msra.mxu0 0
  %1571 = vmatpush.bf16.msra.mxu0 0
  %1572 = vmatpush.bf16.msra.mxu0 0
  %1573 = vmatpush.bf16.msra.mxu0 %v1242
  %1574 = vmatpush.bf16.msra.mxu0 %v1240
  %1575 = vmatpush.bf16.msra.mxu0 %v1238
  %1576 = vmatpush.bf16.msra.mxu0 %v1236
  %1577 = vmatmul.bf16.gmra.mxu0 %v1567
  %v1578 = vpop.f32.mrf.mxu0
  %v1579 = vadd.f32 0.0, %v1578
  %v1580 = vpop.f32.mrf.mxu0
  %1581 = vdwg.mxu0
  %1582 = vmatpush.bf16.msra.mxu0 0
  %1583 = vmatpush.bf16.msra.mxu0 0
  %1584 = vmatpush.bf16.msra.mxu0 0
  %1585 = vmatpush.bf16.msra.mxu0 0
  %1586 = vmatpush.bf16.msra.mxu0 %v1243
  %1587 = vmatpush.bf16.msra.mxu0 %v1241
  %1588 = vmatpush.bf16.msra.mxu0 %v1239
  %1589 = vmatpush.bf16.msra.mxu0 %v1237
  %1590 = vmatmul.bf16.gmra.mxu0 %v1567
  %v1591 = vpop.f32.mrf.mxu0
  %v1592 = vadd.f32 0.0, %v1591
  %v1593 = vpop.f32.mrf.mxu0
  %1594 = vdwg.mxu0
  %v1595 = vadd.f32 %v1563, %v1579
  %v1596 = vadd.f32 %v1564, %v1592
  %v1597 = vmul.f32 %v1595, 0.5
  %v1598 = vmul.f32 %v1596, 0.5
  %v1599 = vtanh.pop %v1597
  %v1600 = vtanh.pop %v1598
  %v1601 = vmul.f32 %v1599, 0.5
  %v1602 = vmul.f32 %v1600, 0.5
  %v1603 = vadd.f32 %v1601, 0.5
  %v1604 = vadd.f32 %v1602, 0.5
  %v1605 = vtanh.pop %v1596
  %v1606 = vmul.f32 %v1603, %v1554
  %1608 = vrot.lane.b32.xlu0 %v1605, 64
  %v1609 = vpop.permute.xlu0 %1608
  %v1611 = vmul.f32 %v1603, %v1609
  %1613 = vrot.lane.b32.xlu0 %v1611, 64
  %v1614 = vpop.permute.xlu0 %1613
  %v1616 = vadd.f32 %v1606, %v1614
  %v1617 = vtanh.pop %v1616
  %1619 = vrot.lane.b32.xlu0 %v1617, 64
  %v1620 = vpop.permute.xlu0 %1619
  %v1622 = vmul.f32 %v1604, %v1620
  %1623 = vst.msk [vmem:[%s1435] sm:$0xff] %vm46, %v1622
  %1624 = vst.msk [vmem:[%s1433] sm:$0xff] %vm425, %v1622
  %v1625 = vld [vmem:[%s760] sm:$0xff]
  %v1626 = vld [vmem:[%s760 + $0x8] sm:$0xff]
  %v1627 = vpack.c.bf16 %v1622, %v1622
  %v1629 = vsel %vm365, %v1627, 0
  %1631 = vmatpush.bf16.msra.mxu0 0
  %1632 = vmatpush.bf16.msra.mxu0 0
  %1633 = vmatpush.bf16.msra.mxu0 0
  %1634 = vmatpush.bf16.msra.mxu0 0
  %1635 = vmatpush.bf16.msra.mxu0 %v1242
  %1636 = vmatpush.bf16.msra.mxu0 %v1240
  %1637 = vmatpush.bf16.msra.mxu0 %v1238
  %1638 = vmatpush.bf16.msra.mxu0 %v1236
  %1639 = vmatmul.bf16.gmra.mxu0 %v1629
  %v1640 = vpop.f32.mrf.mxu0
  %v1641 = vadd.f32 0.0, %v1640
  %v1642 = vpop.f32.mrf.mxu0
  %1643 = vdwg.mxu0
  %1644 = vmatpush.bf16.msra.mxu0 0
  %1645 = vmatpush.bf16.msra.mxu0 0
  %1646 = vmatpush.bf16.msra.mxu0 0
  %1647 = vmatpush.bf16.msra.mxu0 0
  %1648 = vmatpush.bf16.msra.mxu0 %v1243
  %1649 = vmatpush.bf16.msra.mxu0 %v1241
  %1650 = vmatpush.bf16.msra.mxu0 %v1239
  %1651 = vmatpush.bf16.msra.mxu0 %v1237
  %1652 = vmatmul.bf16.gmra.mxu0 %v1629
  %v1653 = vpop.f32.mrf.mxu0
  %v1654 = vadd.f32 0.0, %v1653
  %v1655 = vpop.f32.mrf.mxu0
  %1656 = vdwg.mxu0
  %v1657 = vadd.f32 %v1625, %v1641
  %v1658 = vadd.f32 %v1626, %v1654
  %v1659 = vmul.f32 %v1657, 0.5
  %v1660 = vmul.f32 %v1658, 0.5
  %v1661 = vtanh.pop %v1659
  %v1662 = vtanh.pop %v1660
  %v1663 = vmul.f32 %v1661, 0.5
  %v1664 = vmul.f32 %v1662, 0.5
  %v1665 = vadd.f32 %v1663, 0.5
  %v1666 = vadd.f32 %v1664, 0.5
  %v1667 = vtanh.pop %v1658
  %v1668 = vmul.f32 %v1665, %v1616
  %1670 = vrot.lane.b32.xlu0 %v1667, 64
  %v1671 = vpop.permute.xlu0 %1670
  %v1673 = vmul.f32 %v1665, %v1671
  %1675 = vrot.lane.b32.xlu0 %v1673, 64
  %v1676 = vpop.permute.xlu0 %1675
  %v1678 = vadd.f32 %v1668, %v1676
  %v1679 = vtanh.pop %v1678
  %1681 = vrot.lane.b32.xlu0 %v1679, 64
  %v1682 = vpop.permute.xlu0 %1681
  %v1684 = vmul.f32 %v1666, %v1682
  %1685 = vst.msk [vmem:[%s1371] sm:$0xff] %vm46, %v1684
  %1686 = vst.msk [vmem:[%s1369] sm:$0xff] %vm425, %v1684
  %v1687 = vld [vmem:[%s825] sm:$0xff]
  %v1688 = vld [vmem:[%s825 + $0x8] sm:$0xff]
  %v1689 = vpack.c.bf16 %v1684, %v1684
  %v1691 = vsel %vm365, %v1689, 0
  %1693 = vmatpush.bf16.msra.mxu0 0
  %1694 = vmatpush.bf16.msra.mxu0 0
  %1695 = vmatpush.bf16.msra.mxu0 0
  %1696 = vmatpush.bf16.msra.mxu0 0
  %1697 = vmatpush.bf16.msra.mxu0 %v1242
  %1698 = vmatpush.bf16.msra.mxu0 %v1240
  %1699 = vmatpush.bf16.msra.mxu0 %v1238
  %1700 = vmatpush.bf16.msra.mxu0 %v1236
  %1701 = vmatmul.bf16.gmra.mxu0 %v1691
  %v1702 = vpop.f32.mrf.mxu0
  %v1703 = vadd.f32 0.0, %v1702
  %v1704 = vpop.f32.mrf.mxu0
  %1705 = vdwg.mxu0
  %1706 = vmatpush.bf16.msra.mxu0 0
  %1707 = vmatpush.bf16.msra.mxu0 0
  %1708 = vmatpush.bf16.msra.mxu0 0
  %1709 = vmatpush.bf16.msra.mxu0 0
  %1710 = vmatpush.bf16.msra.mxu0 %v1243
  %1711 = vmatpush.bf16.msra.mxu0 %v1241
  %1712 = vmatpush.bf16.msra.mxu0 %v1239
  %1713 = vmatpush.bf16.msra.mxu0 %v1237
  %1714 = vmatmul.bf16.gmra.mxu0 %v1691
  %v1715 = vpop.f32.mrf.mxu0
  %v1716 = vadd.f32 0.0, %v1715
  %v1717 = vpop.f32.mrf.mxu0
  %1718 = vdwg.mxu0
  %v1719 = vadd.f32 %v1687, %v1703
  %v1720 = vadd.f32 %v1688, %v1716
  %v1721 = vmul.f32 %v1719, 0.5
  %v1722 = vmul.f32 %v1720, 0.5
  %v1723 = vtanh.pop %v1721
  %v1724 = vtanh.pop %v1722
  %v1725 = vmul.f32 %v1723, 0.5
  %v1726 = vmul.f32 %v1724, 0.5
  %v1727 = vadd.f32 %v1725, 0.5
  %v1728 = vadd.f32 %v1726, 0.5
  %v1729 = vtanh.pop %v1720
  %v1730 = vmul.f32 %v1727, %v1678
  %1732 = vrot.lane.b32.xlu0 %v1729, 64
  %v1733 = vpop.permute.xlu0 %1732
  %v1735 = vmul.f32 %v1727, %v1733
  %1737 = vrot.lane.b32.xlu0 %v1735, 64
  %v1738 = vpop.permute.xlu0 %1737
  %v1740 = vadd.f32 %v1730, %v1738
  %v1741 = vtanh.pop %v1740
  %1743 = vrot.lane.b32.xlu0 %v1741, 64
  %v1744 = vpop.permute.xlu0 %1743
  %v1746 = vmul.f32 %v1728, %v1744
  %1747 = vst.msk [vmem:[%s1307] sm:$0xff] %vm46, %v1746
  %1748 = vst.msk [vmem:[#allocation3] sm:$0xff] %vm425, %v1746
  %v1749 = vld [vmem:[#allocation3] sm:$0xff]
  %v1750 = vld [vmem:[#allocation3 + $0x8] sm:$0xff]
  %v1751 = vld [vmem:[#allocation3 + $0x10] sm:$0xff]
  %v1752 = vld [vmem:[#allocation3 + $0x18] sm:$0xff]
  %v1753 = vld [vmem:[#allocation3 + $0x20] sm:$0xff]
  %v1754 = vld [vmem:[#allocation3 + $0x28] sm:$0xff]
  %v1755 = vld [vmem:[#allocation3 + $0x30] sm:$0xff]
  %v1756 = vld [vmem:[#allocation3 + $0x38] sm:$0xff]
  %v1757 = vpack.c.bf16 %v1750, %v1749
  %v1758 = vpack.c.bf16 %v1752, %v1751
  %v1759 = vpack.c.bf16 %v1754, %v1753
  %v1760 = vpack.c.bf16 %v1756, %v1755
  %v1761 = vld [vmem:[%s8] sm:$0xf]
  %v1762 = vld [vmem:[%s8 + $0x4] sm:$0xf]
  %v1763 = vld [vmem:[%s8 + $0x8] sm:$0xf]
  %v1764 = vld [vmem:[%s8 + $0xc] sm:$0xf]
  %v1765 = vld [vmem:[%s8 + $0x10] sm:$0xf]
  %v1766 = vld [vmem:[%s8 + $0x14] sm:$0xf]
  %v1767 = vld [vmem:[%s8 + $0x18] sm:$0xf]
  %v1768 = vld [vmem:[%s8 + $0x1c] sm:$0xf]
  %v1769 = vld [vmem:[%s9] sm:$0x1]
  %v1771 = vperm.slane %v1769, 0
  %v1781 = vunpack.c.l.b16 %v1761
  %v1782 = vunpack.c.l.b16 %v1762
  %v1783 = vunpack.c.l.b16 %v1763
  %v1784 = vunpack.c.l.b16 %v1764
  %v1785 = vunpack.c.l.b16 %v1765
  %v1786 = vunpack.c.l.b16 %v1766
  %v1787 = vunpack.c.l.b16 %v1767
  %v1788 = vunpack.c.l.b16 %v1768
  %v1789 = vpack.c.b16 %v1782, %v1781
  %v1790 = vpack.c.b16 %v1784, %v1783
  %v1791 = vpack.c.b16 %v1786, %v1785
  %v1792 = vpack.c.b16 %v1788, %v1787
  %v1798 = vsel %vm365, %v1757, 0
  %v1801 = vsel %vm365, %v1758, 0
  %v1804 = vsel %vm365, %v1759, 0
  %v1807 = vsel %vm365, %v1760, 0
  %1809 = vmatpush.bf16.msra.mxu0 0
  %1810 = vmatpush.bf16.msra.mxu0 0
  %1811 = vmatpush.bf16.msra.mxu0 0
  %1812 = vmatpush.bf16.msra.mxu0 0
  %1813 = vmatpush.bf16.msra.mxu0 %v1792
  %1814 = vmatpush.bf16.msra.mxu0 %v1791
  %1815 = vmatpush.bf16.msra.mxu0 %v1790
  %1816 = vmatpush.bf16.msra.mxu0 %v1789
  %1817 = vmatmul.bf16.gmra.mxu0 %v1798
  %v1818 = vpop.f32.mrf.mxu0
  %v1819 = vadd.f32 %v1771, %v1818
  %v1820 = vpop.f32.mrf.mxu0
  %v1821 = vadd.f32 %v1771, %v1820
  %1822 = vmatmul.bf16.gmra.mxu0 %v1801
  %v1823 = vpop.f32.mrf.mxu0
  %v1824 = vadd.f32 %v1771, %v1823
  %v1825 = vpop.f32.mrf.mxu0
  %v1826 = vadd.f32 %v1771, %v1825
  %1827 = vmatmul.bf16.gmra.mxu0 %v1804
  %v1828 = vpop.f32.mrf.mxu0
  %v1829 = vadd.f32 %v1771, %v1828
  %v1830 = vpop.f32.mrf.mxu0
  %v1831 = vadd.f32 %v1771, %v1830
  %1832 = vmatmul.bf16.gmra.mxu0 %v1807
  %v1833 = vpop.f32.mrf.mxu0
  %v1834 = vadd.f32 %v1771, %v1833
  %v1835 = vpop.f32.mrf.mxu0
  %v1836 = vadd.f32 %v1771, %v1835
  %1837 = vdwg.mxu0
  %vm1838 = vcmask 64512
  %1839 = vst.msk [vmem:[#allocation6] sm:$0xff] %vm1838, %v1819
  %1840 = vst.msk [vmem:[#allocation6 + $0x8] sm:$0xff] %vm1838, %v1821
  %1841 = vst.msk [vmem:[#allocation6 + $0x10] sm:$0xff] %vm1838, %v1824
  %1842 = vst.msk [vmem:[#allocation6 + $0x18] sm:$0xff] %vm1838, %v1826
  %1843 = vst.msk [vmem:[#allocation6 + $0x20] sm:$0xff] %vm1838, %v1829
  %1844 = vst.msk [vmem:[#allocation6 + $0x28] sm:$0xff] %vm1838, %v1831
  %1845 = vst.msk [vmem:[#allocation6 + $0x30] sm:$0xff] %vm1838, %v1834
  %1846 = vst.msk [vmem:[#allocation6 + $0x38] sm:$0xff] %vm1838, %v1836
  %v1847 = vld [vmem:[%s10] sm:$0xff]
  %v1848 = vlaneseq
  %v1849 = vand.u32 %v1848, 127
  %v1850 = vld [vmem:[%s11] sm:$0x1]
  %v1851 = vld [vmem:[#allocation6] sm:$0xff]
  %v1853 = vperm.slane %v1850, 0
  %v1855 = vadd.f32 %v1853, %v1851
  %v1856 = vld [vmem:[%s1] sm:$0xff]
  %s1857 = scalar_lea.vmem [#allocation6], 8
  %v1858 = vld [vmem:[%s1857] sm:$0xff]
  %s1859 = scalar_lea.vmem %s1, 8
  %v1860 = vld [vmem:[%s1859] sm:$0xff]
  %v1862 = vrot.slane %v1855, 1
  %v1863 = vrot.slane %v1855, 2
  %v1864 = vrot.slane %v1855, 3
  %v1865 = vrot.slane %v1855, 4
  %v1866 = vrot.slane %v1855, 5
  %v1867 = vrot.slane %v1855, 6
  %v1868 = vrot.slane %v1855, 7
  %v1869 = vperm.slane %v1855, 0
  %v1870 = vperm.slane %v1862, 0
  %v1871 = vperm.slane %v1863, 0
  %v1872 = vperm.slane %v1864, 0
  %v1873 = vperm.slane %v1865, 0
  %v1874 = vperm.slane %v1866, 0
  %v1875 = vperm.slane %v1867, 0
  %v1876 = vperm.slane %v1868, 0
  %v1885 = vadd.f32 %v1869, %v1847
  %v1886 = vadd.f32 %v1870, %v1847
  %v1887 = vadd.f32 %v1871, %v1847
  %v1888 = vadd.f32 %v1872, %v1847
  %v1889 = vadd.f32 %v1873, %v1847
  %v1890 = vadd.f32 %v1874, %v1847
  %v1891 = vadd.f32 %v1875, %v1847
  %v1892 = vadd.f32 %v1876, %v1847
  %v1893 = vsel %vm1838, %v1885, -inf
  %1894 = vmax.xlane.f32.xlu0 %v1893
  %v1895 = vpop.xlane.xlu0 %1894
  %v1896 = vsel %vm1838, %v1886, -inf
  %1897 = vmax.xlane.f32.xlu0 %v1896
  %v1898 = vpop.xlane.xlu0 %1897
  %v1899 = vsel %vm1838, %v1887, -inf
  %1900 = vmax.xlane.f32.xlu0 %v1899
  %v1901 = vpop.xlane.xlu0 %1900
  %v1902 = vsel %vm1838, %v1888, -inf
  %1903 = vmax.xlane.f32.xlu0 %v1902
  %v1904 = vpop.xlane.xlu0 %1903
  %v1905 = vsel %vm1838, %v1889, -inf
  %1906 = vmax.xlane.f32.xlu0 %v1905
  %v1907 = vpop.xlane.xlu0 %1906
  %v1908 = vsel %vm1838, %v1890, -inf
  %1909 = vmax.xlane.f32.xlu0 %v1908
  %v1910 = vpop.xlane.xlu0 %1909
  %v1911 = vsel %vm1838, %v1891, -inf
  %1912 = vmax.xlane.f32.xlu0 %v1911
  %v1913 = vpop.xlane.xlu0 %1912
  %v1914 = vsel %vm1838, %v1892, -inf
  %1915 = vmax.xlane.f32.xlu0 %v1914
  %v1916 = vpop.xlane.xlu0 %1915
  %vm1917 = vcmp.ge.f32.partialorder %v1885, %v1895
  %vm1918 = vcmp.ge.f32.partialorder %v1886, %v1898
  %vm1919 = vcmp.ge.f32.partialorder %v1887, %v1901
  %vm1920 = vcmp.ge.f32.partialorder %v1888, %v1904
  %vm1921 = vcmp.ge.f32.partialorder %v1889, %v1907
  %vm1922 = vcmp.ge.f32.partialorder %v1890, %v1910
  %vm1923 = vcmp.ge.f32.partialorder %v1891, %v1913
  %vm1924 = vcmp.ge.f32.partialorder %v1892, %v1916
  %v1925 = vsel %vm1917, %v1849, 8
  %v1926 = vsel %vm1918, %v1849, 8
  %v1927 = vsel %vm1919, %v1849, 8
  %v1928 = vsel %vm1920, %v1849, 8
  %v1929 = vsel %vm1921, %v1849, 8
  %v1930 = vsel %vm1922, %v1849, 8
  %v1931 = vsel %vm1923, %v1849, 8
  %v1932 = vsel %vm1924, %v1849, 8
  %v1933 = vsel %vm1838, %v1925, 2147483647
  %v1934 = vand.u32 %v1933, 65535
  %v1935 = vshra.s32 %v1933, 16
  %v1936 = vcvt.s32.f32 %v1934
  %v1937 = vcvt.s32.f32 %v1935
  %1938 = vmin.xlane.f32.xlu0 %v1937
  %v1939 = vpop.xlane.xlu0 %1938
  %vm1940 = vcmp.eq.f32.partialorder %v1937, %v1939
  %v1941 = vsel %vm1940, %v1936, inf
  %1942 = vmin.xlane.f32.xlu0 %v1941
  %v1943 = vpop.xlane.xlu0 %1942
  %v1944 = vcvt.f32.s32 %v1943
  %v1945 = vcvt.f32.s32 %v1939
  %v1946 = vshll.u32 %v1945, 16
  %v1947 = vadd.s32 %v1946, %v1944
  %v1948 = vsel %vm1838, %v1926, 2147483647
  %v1949 = vand.u32 %v1948, 65535
  %v1950 = vshra.s32 %v1948, 16
  %v1951 = vcvt.s32.f32 %v1949
  %v1952 = vcvt.s32.f32 %v1950
  %1953 = vmin.xlane.f32.xlu0 %v1952
  %v1954 = vpop.xlane.xlu0 %1953
  %vm1955 = vcmp.eq.f32.partialorder %v1952, %v1954
  %v1956 = vsel %vm1955, %v1951, inf
  %1957 = vmin.xlane.f32.xlu0 %v1956
  %v1958 = vpop.xlane.xlu0 %1957
  %v1959 = vcvt.f32.s32 %v1958
  %v1960 = vcvt.f32.s32 %v1954
  %v1961 = vshll.u32 %v1960, 16
  %v1962 = vadd.s32 %v1961, %v1959
  %v1963 = vsel %vm1838, %v1927, 2147483647
  %v1964 = vand.u32 %v1963, 65535
  %v1965 = vshra.s32 %v1963, 16
  %v1966 = vcvt.s32.f32 %v1964
  %v1967 = vcvt.s32.f32 %v1965
  %1968 = vmin.xlane.f32.xlu0 %v1967
  %v1969 = vpop.xlane.xlu0 %1968
  %vm1970 = vcmp.eq.f32.partialorder %v1967, %v1969
  %v1971 = vsel %vm1970, %v1966, inf
  %1972 = vmin.xlane.f32.xlu0 %v1971
  %v1973 = vpop.xlane.xlu0 %1972
  %v1974 = vcvt.f32.s32 %v1973
  %v1975 = vcvt.f32.s32 %v1969
  %v1976 = vshll.u32 %v1975, 16
  %v1977 = vadd.s32 %v1976, %v1974
  %v1978 = vsel %vm1838, %v1928, 2147483647
  %v1979 = vand.u32 %v1978, 65535
  %v1980 = vshra.s32 %v1978, 16
  %v1981 = vcvt.s32.f32 %v1979
  %v1982 = vcvt.s32.f32 %v1980
  %1983 = vmin.xlane.f32.xlu0 %v1982
  %v1984 = vpop.xlane.xlu0 %1983
  %vm1985 = vcmp.eq.f32.partialorder %v1982, %v1984
  %v1986 = vsel %vm1985, %v1981, inf
  %1987 = vmin.xlane.f32.xlu0 %v1986
  %v1988 = vpop.xlane.xlu0 %1987
  %v1989 = vcvt.f32.s32 %v1988
  %v1990 = vcvt.f32.s32 %v1984
  %v1991 = vshll.u32 %v1990, 16
  %v1992 = vadd.s32 %v1991, %v1989
  %v1993 = vsel %vm1838, %v1929, 2147483647
  %v1994 = vand.u32 %v1993, 65535
  %v1995 = vshra.s32 %v1993, 16
  %v1996 = vcvt.s32.f32 %v1994
  %v1997 = vcvt.s32.f32 %v1995
  %1998 = vmin.xlane.f32.xlu0 %v1997
  %v1999 = vpop.xlane.xlu0 %1998
  %vm2000 = vcmp.eq.f32.partialorder %v1997, %v1999
  %v2001 = vsel %vm2000, %v1996, inf
  %2002 = vmin.xlane.f32.xlu0 %v2001
  %v2003 = vpop.xlane.xlu0 %2002
  %v2004 = vcvt.f32.s32 %v2003
  %v2005 = vcvt.f32.s32 %v1999
  %v2006 = vshll.u32 %v2005, 16
  %v2007 = vadd.s32 %v2006, %v2004
  %v2008 = vsel %vm1838, %v1930, 2147483647
  %v2009 = vand.u32 %v2008, 65535
  %v2010 = vshra.s32 %v2008, 16
  %v2011 = vcvt.s32.f32 %v2009
  %v2012 = vcvt.s32.f32 %v2010
  %2013 = vmin.xlane.f32.xlu0 %v2012
  %v2014 = vpop.xlane.xlu0 %2013
  %vm2015 = vcmp.eq.f32.partialorder %v2012, %v2014
  %v2016 = vsel %vm2015, %v2011, inf
  %2017 = vmin.xlane.f32.xlu0 %v2016
  %v2018 = vpop.xlane.xlu0 %2017
  %v2019 = vcvt.f32.s32 %v2018
  %v2020 = vcvt.f32.s32 %v2014
  %v2021 = vshll.u32 %v2020, 16
  %v2022 = vadd.s32 %v2021, %v2019
  %v2023 = vsel %vm1838, %v1931, 2147483647
  %v2024 = vand.u32 %v2023, 65535
  %v2025 = vshra.s32 %v2023, 16
  %v2026 = vcvt.s32.f32 %v2024
  %v2027 = vcvt.s32.f32 %v2025
  %2028 = vmin.xlane.f32.xlu0 %v2027
  %v2029 = vpop.xlane.xlu0 %2028
  %vm2030 = vcmp.eq.f32.partialorder %v2027, %v2029
  %v2031 = vsel %vm2030, %v2026, inf
  %2032 = vmin.xlane.f32.xlu0 %v2031
  %v2033 = vpop.xlane.xlu0 %2032
  %v2034 = vcvt.f32.s32 %v2033
  %v2035 = vcvt.f32.s32 %v2029
  %v2036 = vshll.u32 %v2035, 16
  %v2037 = vadd.s32 %v2036, %v2034
  %v2038 = vsel %vm1838, %v1932, 2147483647
  %v2039 = vand.u32 %v2038, 65535
  %v2040 = vshra.s32 %v2038, 16
  %v2041 = vcvt.s32.f32 %v2039
  %v2042 = vcvt.s32.f32 %v2040
  %2043 = vmin.xlane.f32.xlu0 %v2042
  %v2044 = vpop.xlane.xlu0 %2043
  %vm2045 = vcmp.eq.f32.partialorder %v2042, %v2044
  %v2046 = vsel %vm2045, %v2041, inf
  %2047 = vmin.xlane.f32.xlu0 %v2046
  %v2048 = vpop.xlane.xlu0 %2047
  %v2049 = vcvt.f32.s32 %v2048
  %v2050 = vcvt.f32.s32 %v2044
  %v2051 = vshll.u32 %v2050, 16
  %v2052 = vadd.s32 %v2051, %v2049
  %v2053 = vperm.slane %v1947, %v1849
  %v2054 = vperm.slane %v1962, %v1849
  %v2055 = vperm.slane %v1977, %v1849
  %v2056 = vperm.slane %v1992, %v1849
  %v2057 = vperm.slane %v2007, %v1849
  %v2058 = vperm.slane %v2022, %v1849
  %v2059 = vperm.slane %v2037, %v1849
  %v2060 = vperm.slane %v2052, %v1849
  %vm2061 = vcmask 1041409
  %v2062 = vsel %vm2061, %v2054, %v2053
  %vm2063 = vcmask 1042434
  %v2064 = vsel %vm2063, %v2055, %v2062
  %vm2065 = vcmask 1043459
  %v2066 = vsel %vm2065, %v2056, %v2064
  %vm2067 = vcmask 1044484
  %v2068 = vsel %vm2067, %v2057, %v2066
  %vm2069 = vcmask 1045509
  %v2070 = vsel %vm2069, %v2058, %v2068
  %vm2071 = vcmask 1046534
  %v2072 = vsel %vm2071, %v2059, %v2070
  %vm2073 = vcmask 1047559
  %v2074 = vsel %vm2073, %v2060, %v2072
  %s2075 = scalar_lea.vmem [#allocation7], 8
  %2076 = vst.msk [vmem:[%s2075] sm:$0xff] %vm1838, %v2074
  %vm2077 = vcmp.ne.s32.totalorder %v1860, 0
  %v2079 = vperm.slane %v1858, 0
  %v2080 = vlaneseq
  %v2081 = vshrl.u32 %v2080, 7
  %2083 = vset.pattern.permute.xlu0 %v2081
  %2084 = vperm.xlu0 %2083, %v2079
  %v2085 = vpop.permute.xlu0 %2084
  %v2086 = vperm.slane %v1858, 1
  %v2087 = vlaneseq
  %v2088 = vshrl.u32 %v2087, 7
  %2090 = vset.pattern.permute.xlu0 %v2088
  %2091 = vperm.xlu0 %2090, %v2086
  %v2092 = vpop.permute.xlu0 %2091
  %v2093 = vperm.slane %v1858, 2
  %v2094 = vlaneseq
  %v2095 = vshrl.u32 %v2094, 7
  %2097 = vset.pattern.permute.xlu0 %v2095
  %2098 = vperm.xlu0 %2097, %v2093
  %v2099 = vpop.permute.xlu0 %2098
  %v2100 = vperm.slane %v1858, 3
  %v2101 = vlaneseq
  %v2102 = vshrl.u32 %v2101, 7
  %2104 = vset.pattern.permute.xlu0 %v2102
  %2105 = vperm.xlu0 %2104, %v2100
  %v2106 = vpop.permute.xlu0 %2105
  %v2107 = vperm.slane %v1858, 4
  %v2108 = vlaneseq
  %v2109 = vshrl.u32 %v2108, 7
  %2111 = vset.pattern.permute.xlu0 %v2109
  %2112 = vperm.xlu0 %2111, %v2107
  %v2113 = vpop.permute.xlu0 %2112
  %v2114 = vperm.slane %v1858, 5
  %v2115 = vlaneseq
  %v2116 = vshrl.u32 %v2115, 7
  %2118 = vset.pattern.permute.xlu0 %v2116
  %2119 = vperm.xlu0 %2118, %v2114
  %v2120 = vpop.permute.xlu0 %2119
  %v2121 = vperm.slane %v1858, 6
  %v2122 = vlaneseq
  %v2123 = vshrl.u32 %v2122, 7
  %2125 = vset.pattern.permute.xlu0 %v2123
  %2126 = vperm.xlu0 %2125, %v2121
  %v2127 = vpop.permute.xlu0 %2126
  %v2128 = vperm.slane %v1858, 7
  %v2129 = vlaneseq
  %v2130 = vshrl.u32 %v2129, 7
  %2132 = vset.pattern.permute.xlu0 %v2130
  %2133 = vperm.xlu0 %2132, %v2128
  %v2134 = vpop.permute.xlu0 %2133
  %v2143 = vadd.f32 %v1895, %v2085
  %v2144 = vadd.f32 %v1898, %v2092
  %v2145 = vadd.f32 %v1901, %v2099
  %v2146 = vadd.f32 %v1904, %v2106
  %v2147 = vadd.f32 %v1907, %v2113
  %v2148 = vadd.f32 %v1910, %v2120
  %v2149 = vadd.f32 %v1913, %v2127
  %v2150 = vadd.f32 %v1916, %v2134
  %v2151 = vsel %vm2077, 1, 0
  %2152 = vset.pattern.permute.xlu0 0
  %2153 = vperm.xlu0 %2152, %v2151
  %v2154 = vpop.permute.xlu0 %2153
  %vm2155 = vcmp.eq.s32.totalorder %v2154, 1
  %2164 = vset.pattern.permute.xlu0 0
  %2165 = vperm.xlu0 %2164, %v2143
  %v2166 = vpop.permute.xlu0 %2165
  %2167 = vset.pattern.permute.xlu0 0
  %2168 = vperm.xlu0 %2167, %v2144
  %v2169 = vpop.permute.xlu0 %2168
  %2170 = vset.pattern.permute.xlu0 0
  %2171 = vperm.xlu0 %2170, %v2145
  %v2172 = vpop.permute.xlu0 %2171
  %2173 = vset.pattern.permute.xlu0 0
  %2174 = vperm.xlu0 %2173, %v2146
  %v2175 = vpop.permute.xlu0 %2174
  %2176 = vset.pattern.permute.xlu0 0
  %2177 = vperm.xlu0 %2176, %v2147
  %v2178 = vpop.permute.xlu0 %2177
  %2179 = vset.pattern.permute.xlu0 0
  %2180 = vperm.xlu0 %2179, %v2148
  %v2181 = vpop.permute.xlu0 %2180
  %2182 = vset.pattern.permute.xlu0 0
  %2183 = vperm.xlu0 %2182, %v2149
  %v2184 = vpop.permute.xlu0 %2183
  %2185 = vset.pattern.permute.xlu0 0
  %2186 = vperm.xlu0 %2185, %v2150
  %v2187 = vpop.permute.xlu0 %2186
  %v2188 = vperm.slane %v2166, %v1849
  %v2189 = vperm.slane %v2169, %v1849
  %v2190 = vperm.slane %v2172, %v1849
  %v2191 = vperm.slane %v2175, %v1849
  %v2192 = vperm.slane %v2178, %v1849
  %v2193 = vperm.slane %v2181, %v1849
  %v2194 = vperm.slane %v2184, %v1849
  %v2195 = vperm.slane %v2187, %v1849
  %v2196 = vsel %vm2061, %v2189, %v2188
  %v2197 = vsel %vm2063, %v2190, %v2196
  %v2198 = vsel %vm2065, %v2191, %v2197
  %v2199 = vsel %vm2067, %v2192, %v2198
  %v2200 = vsel %vm2069, %v2193, %v2199
  %v2201 = vsel %vm2071, %v2194, %v2200
  %v2202 = vsel %vm2073, %v2195, %v2201
  %v2204 = vsel %vm2155, %v2202, %v1855
  %v2205 = vadd.s32 %v1856, %v1860
  %s2206 = scalar_lea.vmem [#allocation6], 16
  %v2207 = vld [vmem:[%s2206] sm:$0xff]
  %s2208 = scalar_lea.vmem %s1, 16
  %v2209 = vld [vmem:[%s2208] sm:$0xff]
  %v2211 = vrot.slane %v2204, 1
  %v2212 = vrot.slane %v2204, 2
  %v2213 = vrot.slane %v2204, 3
  %v2214 = vrot.slane %v2204, 4
  %v2215 = vrot.slane %v2204, 5
  %v2216 = vrot.slane %v2204, 6
  %v2217 = vrot.slane %v2204, 7
  %v2218 = vperm.slane %v2204, 0
  %v2219 = vperm.slane %v2211, 0
  %v2220 = vperm.slane %v2212, 0
  %v2221 = vperm.slane %v2213, 0
  %v2222 = vperm.slane %v2214, 0
  %v2223 = vperm.slane %v2215, 0
  %v2224 = vperm.slane %v2216, 0
  %v2225 = vperm.slane %v2217, 0
  %v2234 = vadd.f32 %v2218, %v1847
  %v2235 = vadd.f32 %v2219, %v1847
  %v2236 = vadd.f32 %v2220, %v1847
  %v2237 = vadd.f32 %v2221, %v1847
  %v2238 = vadd.f32 %v2222, %v1847
  %v2239 = vadd.f32 %v2223, %v1847
  %v2240 = vadd.f32 %v2224, %v1847
  %v2241 = vadd.f32 %v2225, %v1847
  %v2242 = vsel %vm1838, %v2234, -inf
  %2243 = vmax.xlane.f32.xlu0 %v2242
  %v2244 = vpop.xlane.xlu0 %2243
  %v2245 = vsel %vm1838, %v2235, -inf
  %2246 = vmax.xlane.f32.xlu0 %v2245
  %v2247 = vpop.xlane.xlu0 %2246
  %v2248 = vsel %vm1838, %v2236, -inf
  %2249 = vmax.xlane.f32.xlu0 %v2248
  %v2250 = vpop.xlane.xlu0 %2249
  %v2251 = vsel %vm1838, %v2237, -inf
  %2252 = vmax.xlane.f32.xlu0 %v2251
  %v2253 = vpop.xlane.xlu0 %2252
  %v2254 = vsel %vm1838, %v2238, -inf
  %2255 = vmax.xlane.f32.xlu0 %v2254
  %v2256 = vpop.xlane.xlu0 %2255
  %v2257 = vsel %vm1838, %v2239, -inf
  %2258 = vmax.xlane.f32.xlu0 %v2257
  %v2259 = vpop.xlane.xlu0 %2258
  %v2260 = vsel %vm1838, %v2240, -inf
  %2261 = vmax.xlane.f32.xlu0 %v2260
  %v2262 = vpop.xlane.xlu0 %2261
  %v2263 = vsel %vm1838, %v2241, -inf
  %2264 = vmax.xlane.f32.xlu0 %v2263
  %v2265 = vpop.xlane.xlu0 %2264
  %vm2266 = vcmp.ge.f32.partialorder %v2234, %v2244
  %vm2267 = vcmp.ge.f32.partialorder %v2235, %v2247
  %vm2268 = vcmp.ge.f32.partialorder %v2236, %v2250
  %vm2269 = vcmp.ge.f32.partialorder %v2237, %v2253
  %vm2270 = vcmp.ge.f32.partialorder %v2238, %v2256
  %vm2271 = vcmp.ge.f32.partialorder %v2239, %v2259
  %vm2272 = vcmp.ge.f32.partialorder %v2240, %v2262
  %vm2273 = vcmp.ge.f32.partialorder %v2241, %v2265
  %v2274 = vsel %vm2266, %v1849, 8
  %v2275 = vsel %vm2267, %v1849, 8
  %v2276 = vsel %vm2268, %v1849, 8
  %v2277 = vsel %vm2269, %v1849, 8
  %v2278 = vsel %vm2270, %v1849, 8
  %v2279 = vsel %vm2271, %v1849, 8
  %v2280 = vsel %vm2272, %v1849, 8
  %v2281 = vsel %vm2273, %v1849, 8
  %v2282 = vsel %vm1838, %v2274, 2147483647
  %v2283 = vand.u32 %v2282, 65535
  %v2284 = vshra.s32 %v2282, 16
  %v2285 = vcvt.s32.f32 %v2283
  %v2286 = vcvt.s32.f32 %v2284
  %2287 = vmin.xlane.f32.xlu0 %v2286
  %v2288 = vpop.xlane.xlu0 %2287
  %vm2289 = vcmp.eq.f32.partialorder %v2286, %v2288
  %v2290 = vsel %vm2289, %v2285, inf
  %2291 = vmin.xlane.f32.xlu0 %v2290
  %v2292 = vpop.xlane.xlu0 %2291
  %v2293 = vcvt.f32.s32 %v2292
  %v2294 = vcvt.f32.s32 %v2288
  %v2295 = vshll.u32 %v2294, 16
  %v2296 = vadd.s32 %v2295, %v2293
  %v2297 = vsel %vm1838, %v2275, 2147483647
  %v2298 = vand.u32 %v2297, 65535
  %v2299 = vshra.s32 %v2297, 16
  %v2300 = vcvt.s32.f32 %v2298
  %v2301 = vcvt.s32.f32 %v2299
  %2302 = vmin.xlane.f32.xlu0 %v2301
  %v2303 = vpop.xlane.xlu0 %2302
  %vm2304 = vcmp.eq.f32.partialorder %v2301, %v2303
  %v2305 = vsel %vm2304, %v2300, inf
  %2306 = vmin.xlane.f32.xlu0 %v2305
  %v2307 = vpop.xlane.xlu0 %2306
  %v2308 = vcvt.f32.s32 %v2307
  %v2309 = vcvt.f32.s32 %v2303
  %v2310 = vshll.u32 %v2309, 16
  %v2311 = vadd.s32 %v2310, %v2308
  %v2312 = vsel %vm1838, %v2276, 2147483647
  %v2313 = vand.u32 %v2312, 65535
  %v2314 = vshra.s32 %v2312, 16
  %v2315 = vcvt.s32.f32 %v2313
  %v2316 = vcvt.s32.f32 %v2314
  %2317 = vmin.xlane.f32.xlu0 %v2316
  %v2318 = vpop.xlane.xlu0 %2317
  %vm2319 = vcmp.eq.f32.partialorder %v2316, %v2318
  %v2320 = vsel %vm2319, %v2315, inf
  %2321 = vmin.xlane.f32.xlu0 %v2320
  %v2322 = vpop.xlane.xlu0 %2321
  %v2323 = vcvt.f32.s32 %v2322
  %v2324 = vcvt.f32.s32 %v2318
  %v2325 = vshll.u32 %v2324, 16
  %v2326 = vadd.s32 %v2325, %v2323
  %v2327 = vsel %vm1838, %v2277, 2147483647
  %v2328 = vand.u32 %v2327, 65535
  %v2329 = vshra.s32 %v2327, 16
  %v2330 = vcvt.s32.f32 %v2328
  %v2331 = vcvt.s32.f32 %v2329
  %2332 = vmin.xlane.f32.xlu0 %v2331
  %v2333 = vpop.xlane.xlu0 %2332
  %vm2334 = vcmp.eq.f32.partialorder %v2331, %v2333
  %v2335 = vsel %vm2334, %v2330, inf
  %2336 = vmin.xlane.f32.xlu0 %v2335
  %v2337 = vpop.xlane.xlu0 %2336
  %v2338 = vcvt.f32.s32 %v2337
  %v2339 = vcvt.f32.s32 %v2333
  %v2340 = vshll.u32 %v2339, 16
  %v2341 = vadd.s32 %v2340, %v2338
  %v2342 = vsel %vm1838, %v2278, 2147483647
  %v2343 = vand.u32 %v2342, 65535
  %v2344 = vshra.s32 %v2342, 16
  %v2345 = vcvt.s32.f32 %v2343
  %v2346 = vcvt.s32.f32 %v2344
  %2347 = vmin.xlane.f32.xlu0 %v2346
  %v2348 = vpop.xlane.xlu0 %2347
  %vm2349 = vcmp.eq.f32.partialorder %v2346, %v2348
  %v2350 = vsel %vm2349, %v2345, inf
  %2351 = vmin.xlane.f32.xlu0 %v2350
  %v2352 = vpop.xlane.xlu0 %2351
  %v2353 = vcvt.f32.s32 %v2352
  %v2354 = vcvt.f32.s32 %v2348
  %v2355 = vshll.u32 %v2354, 16
  %v2356 = vadd.s32 %v2355, %v2353
  %v2357 = vsel %vm1838, %v2279, 2147483647
  %v2358 = vand.u32 %v2357, 65535
  %v2359 = vshra.s32 %v2357, 16
  %v2360 = vcvt.s32.f32 %v2358
  %v2361 = vcvt.s32.f32 %v2359
  %2362 = vmin.xlane.f32.xlu0 %v2361
  %v2363 = vpop.xlane.xlu0 %2362
  %vm2364 = vcmp.eq.f32.partialorder %v2361, %v2363
  %v2365 = vsel %vm2364, %v2360, inf
  %2366 = vmin.xlane.f32.xlu0 %v2365
  %v2367 = vpop.xlane.xlu0 %2366
  %v2368 = vcvt.f32.s32 %v2367
  %v2369 = vcvt.f32.s32 %v2363
  %v2370 = vshll.u32 %v2369, 16
  %v2371 = vadd.s32 %v2370, %v2368
  %v2372 = vsel %vm1838, %v2280, 2147483647
  %v2373 = vand.u32 %v2372, 65535
  %v2374 = vshra.s32 %v2372, 16
  %v2375 = vcvt.s32.f32 %v2373
  %v2376 = vcvt.s32.f32 %v2374
  %2377 = vmin.xlane.f32.xlu0 %v2376
  %v2378 = vpop.xlane.xlu0 %2377
  %vm2379 = vcmp.eq.f32.partialorder %v2376, %v2378
  %v2380 = vsel %vm2379, %v2375, inf
  %2381 = vmin.xlane.f32.xlu0 %v2380
  %v2382 = vpop.xlane.xlu0 %2381
  %v2383 = vcvt.f32.s32 %v2382
  %v2384 = vcvt.f32.s32 %v2378
  %v2385 = vshll.u32 %v2384, 16
  %v2386 = vadd.s32 %v2385, %v2383
  %v2387 = vsel %vm1838, %v2281, 2147483647
  %v2388 = vand.u32 %v2387, 65535
  %v2389 = vshra.s32 %v2387, 16
  %v2390 = vcvt.s32.f32 %v2388
  %v2391 = vcvt.s32.f32 %v2389
  %2392 = vmin.xlane.f32.xlu0 %v2391
  %v2393 = vpop.xlane.xlu0 %2392
  %vm2394 = vcmp.eq.f32.partialorder %v2391, %v2393
  %v2395 = vsel %vm2394, %v2390, inf
  %2396 = vmin.xlane.f32.xlu0 %v2395
  %v2397 = vpop.xlane.xlu0 %2396
  %v2398 = vcvt.f32.s32 %v2397
  %v2399 = vcvt.f32.s32 %v2393
  %v2400 = vshll.u32 %v2399, 16
  %v2401 = vadd.s32 %v2400, %v2398
  %v2402 = vperm.slane %v2296, %v1849
  %v2403 = vperm.slane %v2311, %v1849
  %v2404 = vperm.slane %v2326, %v1849
  %v2405 = vperm.slane %v2341, %v1849
  %v2406 = vperm.slane %v2356, %v1849
  %v2407 = vperm.slane %v2371, %v1849
  %v2408 = vperm.slane %v2386, %v1849
  %v2409 = vperm.slane %v2401, %v1849
  %v2410 = vsel %vm2061, %v2403, %v2402
  %v2411 = vsel %vm2063, %v2404, %v2410
  %v2412 = vsel %vm2065, %v2405, %v2411
  %v2413 = vsel %vm2067, %v2406, %v2412
  %v2414 = vsel %vm2069, %v2407, %v2413
  %v2415 = vsel %vm2071, %v2408, %v2414
  %v2416 = vsel %vm2073, %v2409, %v2415
  %s2417 = scalar_lea.vmem [#allocation7], 16
  %2418 = vst.msk [vmem:[%s2417] sm:$0xff] %vm1838, %v2416
  %vm2419 = vcmp.ne.s32.totalorder %v2209, 0
  %v2421 = vperm.slane %v2207, 0
  %v2422 = vlaneseq
  %v2423 = vshrl.u32 %v2422, 7
  %2425 = vset.pattern.permute.xlu0 %v2423
  %2426 = vperm.xlu0 %2425, %v2421
  %v2427 = vpop.permute.xlu0 %2426
  %v2428 = vperm.slane %v2207, 1
  %v2429 = vlaneseq
  %v2430 = vshrl.u32 %v2429, 7
  %2432 = vset.pattern.permute.xlu0 %v2430
  %2433 = vperm.xlu0 %2432, %v2428
  %v2434 = vpop.permute.xlu0 %2433
  %v2435 = vperm.slane %v2207, 2
  %v2436 = vlaneseq
  %v2437 = vshrl.u32 %v2436, 7
  %2439 = vset.pattern.permute.xlu0 %v2437
  %2440 = vperm.xlu0 %2439, %v2435
  %v2441 = vpop.permute.xlu0 %2440
  %v2442 = vperm.slane %v2207, 3
  %v2443 = vlaneseq
  %v2444 = vshrl.u32 %v2443, 7
  %2446 = vset.pattern.permute.xlu0 %v2444
  %2447 = vperm.xlu0 %2446, %v2442
  %v2448 = vpop.permute.xlu0 %2447
  %v2449 = vperm.slane %v2207, 4
  %v2450 = vlaneseq
  %v2451 = vshrl.u32 %v2450, 7
  %2453 = vset.pattern.permute.xlu0 %v2451
  %2454 = vperm.xlu0 %2453, %v2449
  %v2455 = vpop.permute.xlu0 %2454
  %v2456 = vperm.slane %v2207, 5
  %v2457 = vlaneseq
  %v2458 = vshrl.u32 %v2457, 7
  %2460 = vset.pattern.permute.xlu0 %v2458
  %2461 = vperm.xlu0 %2460, %v2456
  %v2462 = vpop.permute.xlu0 %2461
  %v2463 = vperm.slane %v2207, 6
  %v2464 = vlaneseq
  %v2465 = vshrl.u32 %v2464, 7
  %2467 = vset.pattern.permute.xlu0 %v2465
  %2468 = vperm.xlu0 %2467, %v2463
  %v2469 = vpop.permute.xlu0 %2468
  %v2470 = vperm.slane %v2207, 7
  %v2471 = vlaneseq
  %v2472 = vshrl.u32 %v2471, 7
  %2474 = vset.pattern.permute.xlu0 %v2472
  %2475 = vperm.xlu0 %2474, %v2470
  %v2476 = vpop.permute.xlu0 %2475
  %v2485 = vadd.f32 %v2244, %v2427
  %v2486 = vadd.f32 %v2247, %v2434
  %v2487 = vadd.f32 %v2250, %v2441
  %v2488 = vadd.f32 %v2253, %v2448
  %v2489 = vadd.f32 %v2256, %v2455
  %v2490 = vadd.f32 %v2259, %v2462
  %v2491 = vadd.f32 %v2262, %v2469
  %v2492 = vadd.f32 %v2265, %v2476
  %v2493 = vsel %vm2419, 1, 0
  %2494 = vset.pattern.permute.xlu0 0
  %2495 = vperm.xlu0 %2494, %v2493
  %v2496 = vpop.permute.xlu0 %2495
  %vm2497 = vcmp.eq.s32.totalorder %v2496, 1
  %2506 = vset.pattern.permute.xlu0 0
  %2507 = vperm.xlu0 %2506, %v2485
  %v2508 = vpop.permute.xlu0 %2507
  %2509 = vset.pattern.permute.xlu0 0
  %2510 = vperm.xlu0 %2509, %v2486
  %v2511 = vpop.permute.xlu0 %2510
  %2512 = vset.pattern.permute.xlu0 0
  %2513 = vperm.xlu0 %2512, %v2487
  %v2514 = vpop.permute.xlu0 %2513
  %2515 = vset.pattern.permute.xlu0 0
  %2516 = vperm.xlu0 %2515, %v2488
  %v2517 = vpop.permute.xlu0 %2516
  %2518 = vset.pattern.permute.xlu0 0
  %2519 = vperm.xlu0 %2518, %v2489
  %v2520 = vpop.permute.xlu0 %2519
  %2521 = vset.pattern.permute.xlu0 0
  %2522 = vperm.xlu0 %2521, %v2490
  %v2523 = vpop.permute.xlu0 %2522
  %2524 = vset.pattern.permute.xlu0 0
  %2525 = vperm.xlu0 %2524, %v2491
  %v2526 = vpop.permute.xlu0 %2525
  %2527 = vset.pattern.permute.xlu0 0
  %2528 = vperm.xlu0 %2527, %v2492
  %v2529 = vpop.permute.xlu0 %2528
  %v2530 = vperm.slane %v2508, %v1849
  %v2531 = vperm.slane %v2511, %v1849
  %v2532 = vperm.slane %v2514, %v1849
  %v2533 = vperm.slane %v2517, %v1849
  %v2534 = vperm.slane %v2520, %v1849
  %v2535 = vperm.slane %v2523, %v1849
  %v2536 = vperm.slane %v2526, %v1849
  %v2537 = vperm.slane %v2529, %v1849
  %v2538 = vsel %vm2061, %v2531, %v2530
  %v2539 = vsel %vm2063, %v2532, %v2538
  %v2540 = vsel %vm2065, %v2533, %v2539
  %v2541 = vsel %vm2067, %v2534, %v2540
  %v2542 = vsel %vm2069, %v2535, %v2541
  %v2543 = vsel %vm2071, %v2536, %v2542
  %v2544 = vsel %vm2073, %v2537, %v2543
  %v2546 = vsel %vm2497, %v2544, %v2204
  %v2547 = vadd.s32 %v2205, %v2209
  %s2548 = scalar_lea.vmem [#allocation6], 24
  %v2549 = vld [vmem:[%s2548] sm:$0xff]
  %s2550 = scalar_lea.vmem %s1, 24
  %v2551 = vld [vmem:[%s2550] sm:$0xff]
  %v2553 = vrot.slane %v2546, 1
  %v2554 = vrot.slane %v2546, 2
  %v2555 = vrot.slane %v2546, 3
  %v2556 = vrot.slane %v2546, 4
  %v2557 = vrot.slane %v2546, 5
  %v2558 = vrot.slane %v2546, 6
  %v2559 = vrot.slane %v2546, 7
  %v2560 = vperm.slane %v2546, 0
  %v2561 = vperm.slane %v2553, 0
  %v2562 = vperm.slane %v2554, 0
  %v2563 = vperm.slane %v2555, 0
  %v2564 = vperm.slane %v2556, 0
  %v2565 = vperm.slane %v2557, 0
  %v2566 = vperm.slane %v2558, 0
  %v2567 = vperm.slane %v2559, 0
  %v2576 = vadd.f32 %v2560, %v1847
  %v2577 = vadd.f32 %v2561, %v1847
  %v2578 = vadd.f32 %v2562, %v1847
  %v2579 = vadd.f32 %v2563, %v1847
  %v2580 = vadd.f32 %v2564, %v1847
  %v2581 = vadd.f32 %v2565, %v1847
  %v2582 = vadd.f32 %v2566, %v1847
  %v2583 = vadd.f32 %v2567, %v1847
  %v2584 = vsel %vm1838, %v2576, -inf
  %2585 = vmax.xlane.f32.xlu0 %v2584
  %v2586 = vpop.xlane.xlu0 %2585
  %v2587 = vsel %vm1838, %v2577, -inf
  %2588 = vmax.xlane.f32.xlu0 %v2587
  %v2589 = vpop.xlane.xlu0 %2588
  %v2590 = vsel %vm1838, %v2578, -inf
  %2591 = vmax.xlane.f32.xlu0 %v2590
  %v2592 = vpop.xlane.xlu0 %2591
  %v2593 = vsel %vm1838, %v2579, -inf
  %2594 = vmax.xlane.f32.xlu0 %v2593
  %v2595 = vpop.xlane.xlu0 %2594
  %v2596 = vsel %vm1838, %v2580, -inf
  %2597 = vmax.xlane.f32.xlu0 %v2596
  %v2598 = vpop.xlane.xlu0 %2597
  %v2599 = vsel %vm1838, %v2581, -inf
  %2600 = vmax.xlane.f32.xlu0 %v2599
  %v2601 = vpop.xlane.xlu0 %2600
  %v2602 = vsel %vm1838, %v2582, -inf
  %2603 = vmax.xlane.f32.xlu0 %v2602
  %v2604 = vpop.xlane.xlu0 %2603
  %v2605 = vsel %vm1838, %v2583, -inf
  %2606 = vmax.xlane.f32.xlu0 %v2605
  %v2607 = vpop.xlane.xlu0 %2606
  %vm2608 = vcmp.ge.f32.partialorder %v2576, %v2586
  %vm2609 = vcmp.ge.f32.partialorder %v2577, %v2589
  %vm2610 = vcmp.ge.f32.partialorder %v2578, %v2592
  %vm2611 = vcmp.ge.f32.partialorder %v2579, %v2595
  %vm2612 = vcmp.ge.f32.partialorder %v2580, %v2598
  %vm2613 = vcmp.ge.f32.partialorder %v2581, %v2601
  %vm2614 = vcmp.ge.f32.partialorder %v2582, %v2604
  %vm2615 = vcmp.ge.f32.partialorder %v2583, %v2607
  %v2616 = vsel %vm2608, %v1849, 8
  %v2617 = vsel %vm2609, %v1849, 8
  %v2618 = vsel %vm2610, %v1849, 8
  %v2619 = vsel %vm2611, %v1849, 8
  %v2620 = vsel %vm2612, %v1849, 8
  %v2621 = vsel %vm2613, %v1849, 8
  %v2622 = vsel %vm2614, %v1849, 8
  %v2623 = vsel %vm2615, %v1849, 8
  %v2624 = vsel %vm1838, %v2616, 2147483647
  %v2625 = vand.u32 %v2624, 65535
  %v2626 = vshra.s32 %v2624, 16
  %v2627 = vcvt.s32.f32 %v2625
  %v2628 = vcvt.s32.f32 %v2626
  %2629 = vmin.xlane.f32.xlu0 %v2628
  %v2630 = vpop.xlane.xlu0 %2629
  %vm2631 = vcmp.eq.f32.partialorder %v2628, %v2630
  %v2632 = vsel %vm2631, %v2627, inf
  %2633 = vmin.xlane.f32.xlu0 %v2632
  %v2634 = vpop.xlane.xlu0 %2633
  %v2635 = vcvt.f32.s32 %v2634
  %v2636 = vcvt.f32.s32 %v2630
  %v2637 = vshll.u32 %v2636, 16
  %v2638 = vadd.s32 %v2637, %v2635
  %v2639 = vsel %vm1838, %v2617, 2147483647
  %v2640 = vand.u32 %v2639, 65535
  %v2641 = vshra.s32 %v2639, 16
  %v2642 = vcvt.s32.f32 %v2640
  %v2643 = vcvt.s32.f32 %v2641
  %2644 = vmin.xlane.f32.xlu0 %v2643
  %v2645 = vpop.xlane.xlu0 %2644
  %vm2646 = vcmp.eq.f32.partialorder %v2643, %v2645
  %v2647 = vsel %vm2646, %v2642, inf
  %2648 = vmin.xlane.f32.xlu0 %v2647
  %v2649 = vpop.xlane.xlu0 %2648
  %v2650 = vcvt.f32.s32 %v2649
  %v2651 = vcvt.f32.s32 %v2645
  %v2652 = vshll.u32 %v2651, 16
  %v2653 = vadd.s32 %v2652, %v2650
  %v2654 = vsel %vm1838, %v2618, 2147483647
  %v2655 = vand.u32 %v2654, 65535
  %v2656 = vshra.s32 %v2654, 16
  %v2657 = vcvt.s32.f32 %v2655
  %v2658 = vcvt.s32.f32 %v2656
  %2659 = vmin.xlane.f32.xlu0 %v2658
  %v2660 = vpop.xlane.xlu0 %2659
  %vm2661 = vcmp.eq.f32.partialorder %v2658, %v2660
  %v2662 = vsel %vm2661, %v2657, inf
  %2663 = vmin.xlane.f32.xlu0 %v2662
  %v2664 = vpop.xlane.xlu0 %2663
  %v2665 = vcvt.f32.s32 %v2664
  %v2666 = vcvt.f32.s32 %v2660
  %v2667 = vshll.u32 %v2666, 16
  %v2668 = vadd.s32 %v2667, %v2665
  %v2669 = vsel %vm1838, %v2619, 2147483647
  %v2670 = vand.u32 %v2669, 65535
  %v2671 = vshra.s32 %v2669, 16
  %v2672 = vcvt.s32.f32 %v2670
  %v2673 = vcvt.s32.f32 %v2671
  %2674 = vmin.xlane.f32.xlu0 %v2673
  %v2675 = vpop.xlane.xlu0 %2674
  %vm2676 = vcmp.eq.f32.partialorder %v2673, %v2675
  %v2677 = vsel %vm2676, %v2672, inf
  %2678 = vmin.xlane.f32.xlu0 %v2677
  %v2679 = vpop.xlane.xlu0 %2678
  %v2680 = vcvt.f32.s32 %v2679
  %v2681 = vcvt.f32.s32 %v2675
  %v2682 = vshll.u32 %v2681, 16
  %v2683 = vadd.s32 %v2682, %v2680
  %v2684 = vsel %vm1838, %v2620, 2147483647
  %v2685 = vand.u32 %v2684, 65535
  %v2686 = vshra.s32 %v2684, 16
  %v2687 = vcvt.s32.f32 %v2685
  %v2688 = vcvt.s32.f32 %v2686
  %2689 = vmin.xlane.f32.xlu0 %v2688
  %v2690 = vpop.xlane.xlu0 %2689
  %vm2691 = vcmp.eq.f32.partialorder %v2688, %v2690
  %v2692 = vsel %vm2691, %v2687, inf
  %2693 = vmin.xlane.f32.xlu0 %v2692
  %v2694 = vpop.xlane.xlu0 %2693
  %v2695 = vcvt.f32.s32 %v2694
  %v2696 = vcvt.f32.s32 %v2690
  %v2697 = vshll.u32 %v2696, 16
  %v2698 = vadd.s32 %v2697, %v2695
  %v2699 = vsel %vm1838, %v2621, 2147483647
  %v2700 = vand.u32 %v2699, 65535
  %v2701 = vshra.s32 %v2699, 16
  %v2702 = vcvt.s32.f32 %v2700
  %v2703 = vcvt.s32.f32 %v2701
  %2704 = vmin.xlane.f32.xlu0 %v2703
  %v2705 = vpop.xlane.xlu0 %2704
  %vm2706 = vcmp.eq.f32.partialorder %v2703, %v2705
  %v2707 = vsel %vm2706, %v2702, inf
  %2708 = vmin.xlane.f32.xlu0 %v2707
  %v2709 = vpop.xlane.xlu0 %2708
  %v2710 = vcvt.f32.s32 %v2709
  %v2711 = vcvt.f32.s32 %v2705
  %v2712 = vshll.u32 %v2711, 16
  %v2713 = vadd.s32 %v2712, %v2710
  %v2714 = vsel %vm1838, %v2622, 2147483647
  %v2715 = vand.u32 %v2714, 65535
  %v2716 = vshra.s32 %v2714, 16
  %v2717 = vcvt.s32.f32 %v2715
  %v2718 = vcvt.s32.f32 %v2716
  %2719 = vmin.xlane.f32.xlu0 %v2718
  %v2720 = vpop.xlane.xlu0 %2719
  %vm2721 = vcmp.eq.f32.partialorder %v2718, %v2720
  %v2722 = vsel %vm2721, %v2717, inf
  %2723 = vmin.xlane.f32.xlu0 %v2722
  %v2724 = vpop.xlane.xlu0 %2723
  %v2725 = vcvt.f32.s32 %v2724
  %v2726 = vcvt.f32.s32 %v2720
  %v2727 = vshll.u32 %v2726, 16
  %v2728 = vadd.s32 %v2727, %v2725
  %v2729 = vsel %vm1838, %v2623, 2147483647
  %v2730 = vand.u32 %v2729, 65535
  %v2731 = vshra.s32 %v2729, 16
  %v2732 = vcvt.s32.f32 %v2730
  %v2733 = vcvt.s32.f32 %v2731
  %2734 = vmin.xlane.f32.xlu0 %v2733
  %v2735 = vpop.xlane.xlu0 %2734
  %vm2736 = vcmp.eq.f32.partialorder %v2733, %v2735
  %v2737 = vsel %vm2736, %v2732, inf
  %2738 = vmin.xlane.f32.xlu0 %v2737
  %v2739 = vpop.xlane.xlu0 %2738
  %v2740 = vcvt.f32.s32 %v2739
  %v2741 = vcvt.f32.s32 %v2735
  %v2742 = vshll.u32 %v2741, 16
  %v2743 = vadd.s32 %v2742, %v2740
  %v2744 = vperm.slane %v2638, %v1849
  %v2745 = vperm.slane %v2653, %v1849
  %v2746 = vperm.slane %v2668, %v1849
  %v2747 = vperm.slane %v2683, %v1849
  %v2748 = vperm.slane %v2698, %v1849
  %v2749 = vperm.slane %v2713, %v1849
  %v2750 = vperm.slane %v2728, %v1849
  %v2751 = vperm.slane %v2743, %v1849
  %v2752 = vsel %vm2061, %v2745, %v2744
  %v2753 = vsel %vm2063, %v2746, %v2752
  %v2754 = vsel %vm2065, %v2747, %v2753
  %v2755 = vsel %vm2067, %v2748, %v2754
  %v2756 = vsel %vm2069, %v2749, %v2755
  %v2757 = vsel %vm2071, %v2750, %v2756
  %v2758 = vsel %vm2073, %v2751, %v2757
  %s2759 = scalar_lea.vmem [#allocation7], 24
  %2760 = vst.msk [vmem:[%s2759] sm:$0xff] %vm1838, %v2758
  %vm2761 = vcmp.ne.s32.totalorder %v2551, 0
  %v2763 = vperm.slane %v2549, 0
  %v2764 = vlaneseq
  %v2765 = vshrl.u32 %v2764, 7
  %2767 = vset.pattern.permute.xlu0 %v2765
  %2768 = vperm.xlu0 %2767, %v2763
  %v2769 = vpop.permute.xlu0 %2768
  %v2770 = vperm.slane %v2549, 1
  %v2771 = vlaneseq
  %v2772 = vshrl.u32 %v2771, 7
  %2774 = vset.pattern.permute.xlu0 %v2772
  %2775 = vperm.xlu0 %2774, %v2770
  %v2776 = vpop.permute.xlu0 %2775
  %v2777 = vperm.slane %v2549, 2
  %v2778 = vlaneseq
  %v2779 = vshrl.u32 %v2778, 7
  %2781 = vset.pattern.permute.xlu0 %v2779
  %2782 = vperm.xlu0 %2781, %v2777
  %v2783 = vpop.permute.xlu0 %2782
  %v2784 = vperm.slane %v2549, 3
  %v2785 = vlaneseq
  %v2786 = vshrl.u32 %v2785, 7
  %2788 = vset.pattern.permute.xlu0 %v2786
  %2789 = vperm.xlu0 %2788, %v2784
  %v2790 = vpop.permute.xlu0 %2789
  %v2791 = vperm.slane %v2549, 4
  %v2792 = vlaneseq
  %v2793 = vshrl.u32 %v2792, 7
  %2795 = vset.pattern.permute.xlu0 %v2793
  %2796 = vperm.xlu0 %2795, %v2791
  %v2797 = vpop.permute.xlu0 %2796
  %v2798 = vperm.slane %v2549, 5
  %v2799 = vlaneseq
  %v2800 = vshrl.u32 %v2799, 7
  %2802 = vset.pattern.permute.xlu0 %v2800
  %2803 = vperm.xlu0 %2802, %v2798
  %v2804 = vpop.permute.xlu0 %2803
  %v2805 = vperm.slane %v2549, 6
  %v2806 = vlaneseq
  %v2807 = vshrl.u32 %v2806, 7
  %2809 = vset.pattern.permute.xlu0 %v2807
  %2810 = vperm.xlu0 %2809, %v2805
  %v2811 = vpop.permute.xlu0 %2810
  %v2812 = vperm.slane %v2549, 7
  %v2813 = vlaneseq
  %v2814 = vshrl.u32 %v2813, 7
  %2816 = vset.pattern.permute.xlu0 %v2814
  %2817 = vperm.xlu0 %2816, %v2812
  %v2818 = vpop.permute.xlu0 %2817
  %v2827 = vadd.f32 %v2586, %v2769
  %v2828 = vadd.f32 %v2589, %v2776
  %v2829 = vadd.f32 %v2592, %v2783
  %v2830 = vadd.f32 %v2595, %v2790
  %v2831 = vadd.f32 %v2598, %v2797
  %v2832 = vadd.f32 %v2601, %v2804
  %v2833 = vadd.f32 %v2604, %v2811
  %v2834 = vadd.f32 %v2607, %v2818
  %v2835 = vsel %vm2761, 1, 0
  %2836 = vset.pattern.permute.xlu0 0
  %2837 = vperm.xlu0 %2836, %v2835
  %v2838 = vpop.permute.xlu0 %2837
  %vm2839 = vcmp.eq.s32.totalorder %v2838, 1
  %2848 = vset.pattern.permute.xlu0 0
  %2849 = vperm.xlu0 %2848, %v2827
  %v2850 = vpop.permute.xlu0 %2849
  %2851 = vset.pattern.permute.xlu0 0
  %2852 = vperm.xlu0 %2851, %v2828
  %v2853 = vpop.permute.xlu0 %2852
  %2854 = vset.pattern.permute.xlu0 0
  %2855 = vperm.xlu0 %2854, %v2829
  %v2856 = vpop.permute.xlu0 %2855
  %2857 = vset.pattern.permute.xlu0 0
  %2858 = vperm.xlu0 %2857, %v2830
  %v2859 = vpop.permute.xlu0 %2858
  %2860 = vset.pattern.permute.xlu0 0
  %2861 = vperm.xlu0 %2860, %v2831
  %v2862 = vpop.permute.xlu0 %2861
  %2863 = vset.pattern.permute.xlu0 0
  %2864 = vperm.xlu0 %2863, %v2832
  %v2865 = vpop.permute.xlu0 %2864
  %2866 = vset.pattern.permute.xlu0 0
  %2867 = vperm.xlu0 %2866, %v2833
  %v2868 = vpop.permute.xlu0 %2867
  %2869 = vset.pattern.permute.xlu0 0
  %2870 = vperm.xlu0 %2869, %v2834
  %v2871 = vpop.permute.xlu0 %2870
  %v2872 = vperm.slane %v2850, %v1849
  %v2873 = vperm.slane %v2853, %v1849
  %v2874 = vperm.slane %v2856, %v1849
  %v2875 = vperm.slane %v2859, %v1849
  %v2876 = vperm.slane %v2862, %v1849
  %v2877 = vperm.slane %v2865, %v1849
  %v2878 = vperm.slane %v2868, %v1849
  %v2879 = vperm.slane %v2871, %v1849
  %v2880 = vsel %vm2061, %v2873, %v2872
  %v2881 = vsel %vm2063, %v2874, %v2880
  %v2882 = vsel %vm2065, %v2875, %v2881
  %v2883 = vsel %vm2067, %v2876, %v2882
  %v2884 = vsel %vm2069, %v2877, %v2883
  %v2885 = vsel %vm2071, %v2878, %v2884
  %v2886 = vsel %vm2073, %v2879, %v2885
  %v2888 = vsel %vm2839, %v2886, %v2546
  %v2889 = vadd.s32 %v2547, %v2551
  %s2890 = scalar_lea.vmem [#allocation6], 32
  %v2891 = vld [vmem:[%s2890] sm:$0xff]
  %s2892 = scalar_lea.vmem %s1, 32
  %v2893 = vld [vmem:[%s2892] sm:$0xff]
  %v2895 = vrot.slane %v2888, 1
  %v2896 = vrot.slane %v2888, 2
  %v2897 = vrot.slane %v2888, 3
  %v2898 = vrot.slane %v2888, 4
  %v2899 = vrot.slane %v2888, 5
  %v2900 = vrot.slane %v2888, 6
  %v2901 = vrot.slane %v2888, 7
  %v2902 = vperm.slane %v2888, 0
  %v2903 = vperm.slane %v2895, 0
  %v2904 = vperm.slane %v2896, 0
  %v2905 = vperm.slane %v2897, 0
  %v2906 = vperm.slane %v2898, 0
  %v2907 = vperm.slane %v2899, 0
  %v2908 = vperm.slane %v2900, 0
  %v2909 = vperm.slane %v2901, 0
  %v2918 = vadd.f32 %v2902, %v1847
  %v2919 = vadd.f32 %v2903, %v1847
  %v2920 = vadd.f32 %v2904, %v1847
  %v2921 = vadd.f32 %v2905, %v1847
  %v2922 = vadd.f32 %v2906, %v1847
  %v2923 = vadd.f32 %v2907, %v1847
  %v2924 = vadd.f32 %v2908, %v1847
  %v2925 = vadd.f32 %v2909, %v1847
  %v2926 = vsel %vm1838, %v2918, -inf
  %2927 = vmax.xlane.f32.xlu0 %v2926
  %v2928 = vpop.xlane.xlu0 %2927
  %v2929 = vsel %vm1838, %v2919, -inf
  %2930 = vmax.xlane.f32.xlu0 %v2929
  %v2931 = vpop.xlane.xlu0 %2930
  %v2932 = vsel %vm1838, %v2920, -inf
  %2933 = vmax.xlane.f32.xlu0 %v2932
  %v2934 = vpop.xlane.xlu0 %2933
  %v2935 = vsel %vm1838, %v2921, -inf
  %2936 = vmax.xlane.f32.xlu0 %v2935
  %v2937 = vpop.xlane.xlu0 %2936
  %v2938 = vsel %vm1838, %v2922, -inf
  %2939 = vmax.xlane.f32.xlu0 %v2938
  %v2940 = vpop.xlane.xlu0 %2939
  %v2941 = vsel %vm1838, %v2923, -inf
  %2942 = vmax.xlane.f32.xlu0 %v2941
  %v2943 = vpop.xlane.xlu0 %2942
  %v2944 = vsel %vm1838, %v2924, -inf
  %2945 = vmax.xlane.f32.xlu0 %v2944
  %v2946 = vpop.xlane.xlu0 %2945
  %v2947 = vsel %vm1838, %v2925, -inf
  %2948 = vmax.xlane.f32.xlu0 %v2947
  %v2949 = vpop.xlane.xlu0 %2948
  %vm2950 = vcmp.ge.f32.partialorder %v2918, %v2928
  %vm2951 = vcmp.ge.f32.partialorder %v2919, %v2931
  %vm2952 = vcmp.ge.f32.partialorder %v2920, %v2934
  %vm2953 = vcmp.ge.f32.partialorder %v2921, %v2937
  %vm2954 = vcmp.ge.f32.partialorder %v2922, %v2940
  %vm2955 = vcmp.ge.f32.partialorder %v2923, %v2943
  %vm2956 = vcmp.ge.f32.partialorder %v2924, %v2946
  %vm2957 = vcmp.ge.f32.partialorder %v2925, %v2949
  %v2958 = vsel %vm2950, %v1849, 8
  %v2959 = vsel %vm2951, %v1849, 8
  %v2960 = vsel %vm2952, %v1849, 8
  %v2961 = vsel %vm2953, %v1849, 8
  %v2962 = vsel %vm2954, %v1849, 8
  %v2963 = vsel %vm2955, %v1849, 8
  %v2964 = vsel %vm2956, %v1849, 8
  %v2965 = vsel %vm2957, %v1849, 8
  %v2966 = vsel %vm1838, %v2958, 2147483647
  %v2967 = vand.u32 %v2966, 65535
  %v2968 = vshra.s32 %v2966, 16
  %v2969 = vcvt.s32.f32 %v2967
  %v2970 = vcvt.s32.f32 %v2968
  %2971 = vmin.xlane.f32.xlu0 %v2970
  %v2972 = vpop.xlane.xlu0 %2971
  %vm2973 = vcmp.eq.f32.partialorder %v2970, %v2972
  %v2974 = vsel %vm2973, %v2969, inf
  %2975 = vmin.xlane.f32.xlu0 %v2974
  %v2976 = vpop.xlane.xlu0 %2975
  %v2977 = vcvt.f32.s32 %v2976
  %v2978 = vcvt.f32.s32 %v2972
  %v2979 = vshll.u32 %v2978, 16
  %v2980 = vadd.s32 %v2979, %v2977
  %v2981 = vsel %vm1838, %v2959, 2147483647
  %v2982 = vand.u32 %v2981, 65535
  %v2983 = vshra.s32 %v2981, 16
  %v2984 = vcvt.s32.f32 %v2982
  %v2985 = vcvt.s32.f32 %v2983
  %2986 = vmin.xlane.f32.xlu0 %v2985
  %v2987 = vpop.xlane.xlu0 %2986
  %vm2988 = vcmp.eq.f32.partialorder %v2985, %v2987
  %v2989 = vsel %vm2988, %v2984, inf
  %2990 = vmin.xlane.f32.xlu0 %v2989
  %v2991 = vpop.xlane.xlu0 %2990
  %v2992 = vcvt.f32.s32 %v2991
  %v2993 = vcvt.f32.s32 %v2987
  %v2994 = vshll.u32 %v2993, 16
  %v2995 = vadd.s32 %v2994, %v2992
  %v2996 = vsel %vm1838, %v2960, 2147483647
  %v2997 = vand.u32 %v2996, 65535
  %v2998 = vshra.s32 %v2996, 16
  %v2999 = vcvt.s32.f32 %v2997
  %v3000 = vcvt.s32.f32 %v2998
  %3001 = vmin.xlane.f32.xlu0 %v3000
  %v3002 = vpop.xlane.xlu0 %3001
  %vm3003 = vcmp.eq.f32.partialorder %v3000, %v3002
  %v3004 = vsel %vm3003, %v2999, inf
  %3005 = vmin.xlane.f32.xlu0 %v3004
  %v3006 = vpop.xlane.xlu0 %3005
  %v3007 = vcvt.f32.s32 %v3006
  %v3008 = vcvt.f32.s32 %v3002
  %v3009 = vshll.u32 %v3008, 16
  %v3010 = vadd.s32 %v3009, %v3007
  %v3011 = vsel %vm1838, %v2961, 2147483647
  %v3012 = vand.u32 %v3011, 65535
  %v3013 = vshra.s32 %v3011, 16
  %v3014 = vcvt.s32.f32 %v3012
  %v3015 = vcvt.s32.f32 %v3013
  %3016 = vmin.xlane.f32.xlu0 %v3015
  %v3017 = vpop.xlane.xlu0 %3016
  %vm3018 = vcmp.eq.f32.partialorder %v3015, %v3017
  %v3019 = vsel %vm3018, %v3014, inf
  %3020 = vmin.xlane.f32.xlu0 %v3019
  %v3021 = vpop.xlane.xlu0 %3020
  %v3022 = vcvt.f32.s32 %v3021
  %v3023 = vcvt.f32.s32 %v3017
  %v3024 = vshll.u32 %v3023, 16
  %v3025 = vadd.s32 %v3024, %v3022
  %v3026 = vsel %vm1838, %v2962, 2147483647
  %v3027 = vand.u32 %v3026, 65535
  %v3028 = vshra.s32 %v3026, 16
  %v3029 = vcvt.s32.f32 %v3027
  %v3030 = vcvt.s32.f32 %v3028
  %3031 = vmin.xlane.f32.xlu0 %v3030
  %v3032 = vpop.xlane.xlu0 %3031
  %vm3033 = vcmp.eq.f32.partialorder %v3030, %v3032
  %v3034 = vsel %vm3033, %v3029, inf
  %3035 = vmin.xlane.f32.xlu0 %v3034
  %v3036 = vpop.xlane.xlu0 %3035
  %v3037 = vcvt.f32.s32 %v3036
  %v3038 = vcvt.f32.s32 %v3032
  %v3039 = vshll.u32 %v3038, 16
  %v3040 = vadd.s32 %v3039, %v3037
  %v3041 = vsel %vm1838, %v2963, 2147483647
  %v3042 = vand.u32 %v3041, 65535
  %v3043 = vshra.s32 %v3041, 16
  %v3044 = vcvt.s32.f32 %v3042
  %v3045 = vcvt.s32.f32 %v3043
  %3046 = vmin.xlane.f32.xlu0 %v3045
  %v3047 = vpop.xlane.xlu0 %3046
  %vm3048 = vcmp.eq.f32.partialorder %v3045, %v3047
  %v3049 = vsel %vm3048, %v3044, inf
  %3050 = vmin.xlane.f32.xlu0 %v3049
  %v3051 = vpop.xlane.xlu0 %3050
  %v3052 = vcvt.f32.s32 %v3051
  %v3053 = vcvt.f32.s32 %v3047
  %v3054 = vshll.u32 %v3053, 16
  %v3055 = vadd.s32 %v3054, %v3052
  %v3056 = vsel %vm1838, %v2964, 2147483647
  %v3057 = vand.u32 %v3056, 65535
  %v3058 = vshra.s32 %v3056, 16
  %v3059 = vcvt.s32.f32 %v3057
  %v3060 = vcvt.s32.f32 %v3058
  %3061 = vmin.xlane.f32.xlu0 %v3060
  %v3062 = vpop.xlane.xlu0 %3061
  %vm3063 = vcmp.eq.f32.partialorder %v3060, %v3062
  %v3064 = vsel %vm3063, %v3059, inf
  %3065 = vmin.xlane.f32.xlu0 %v3064
  %v3066 = vpop.xlane.xlu0 %3065
  %v3067 = vcvt.f32.s32 %v3066
  %v3068 = vcvt.f32.s32 %v3062
  %v3069 = vshll.u32 %v3068, 16
  %v3070 = vadd.s32 %v3069, %v3067
  %v3071 = vsel %vm1838, %v2965, 2147483647
  %v3072 = vand.u32 %v3071, 65535
  %v3073 = vshra.s32 %v3071, 16
  %v3074 = vcvt.s32.f32 %v3072
  %v3075 = vcvt.s32.f32 %v3073
  %3076 = vmin.xlane.f32.xlu0 %v3075
  %v3077 = vpop.xlane.xlu0 %3076
  %vm3078 = vcmp.eq.f32.partialorder %v3075, %v3077
  %v3079 = vsel %vm3078, %v3074, inf
  %3080 = vmin.xlane.f32.xlu0 %v3079
  %v3081 = vpop.xlane.xlu0 %3080
  %v3082 = vcvt.f32.s32 %v3081
  %v3083 = vcvt.f32.s32 %v3077
  %v3084 = vshll.u32 %v3083, 16
  %v3085 = vadd.s32 %v3084, %v3082
  %v3086 = vperm.slane %v2980, %v1849
  %v3087 = vperm.slane %v2995, %v1849
  %v3088 = vperm.slane %v3010, %v1849
  %v3089 = vperm.slane %v3025, %v1849
  %v3090 = vperm.slane %v3040, %v1849
  %v3091 = vperm.slane %v3055, %v1849
  %v3092 = vperm.slane %v3070, %v1849
  %v3093 = vperm.slane %v3085, %v1849
  %v3094 = vsel %vm2061, %v3087, %v3086
  %v3095 = vsel %vm2063, %v3088, %v3094
  %v3096 = vsel %vm2065, %v3089, %v3095
  %v3097 = vsel %vm2067, %v3090, %v3096
  %v3098 = vsel %vm2069, %v3091, %v3097
  %v3099 = vsel %vm2071, %v3092, %v3098
  %v3100 = vsel %vm2073, %v3093, %v3099
  %s3101 = scalar_lea.vmem [#allocation7], 32
  %3102 = vst.msk [vmem:[%s3101] sm:$0xff] %vm1838, %v3100
  %vm3103 = vcmp.ne.s32.totalorder %v2893, 0
  %v3105 = vperm.slane %v2891, 0
  %v3106 = vlaneseq
  %v3107 = vshrl.u32 %v3106, 7
  %3109 = vset.pattern.permute.xlu0 %v3107
  %3110 = vperm.xlu0 %3109, %v3105
  %v3111 = vpop.permute.xlu0 %3110
  %v3112 = vperm.slane %v2891, 1
  %v3113 = vlaneseq
  %v3114 = vshrl.u32 %v3113, 7
  %3116 = vset.pattern.permute.xlu0 %v3114
  %3117 = vperm.xlu0 %3116, %v3112
  %v3118 = vpop.permute.xlu0 %3117
  %v3119 = vperm.slane %v2891, 2
  %v3120 = vlaneseq
  %v3121 = vshrl.u32 %v3120, 7
  %3123 = vset.pattern.permute.xlu0 %v3121
  %3124 = vperm.xlu0 %3123, %v3119
  %v3125 = vpop.permute.xlu0 %3124
  %v3126 = vperm.slane %v2891, 3
  %v3127 = vlaneseq
  %v3128 = vshrl.u32 %v3127, 7
  %3130 = vset.pattern.permute.xlu0 %v3128
  %3131 = vperm.xlu0 %3130, %v3126
  %v3132 = vpop.permute.xlu0 %3131
  %v3133 = vperm.slane %v2891, 4
  %v3134 = vlaneseq
  %v3135 = vshrl.u32 %v3134, 7
  %3137 = vset.pattern.permute.xlu0 %v3135
  %3138 = vperm.xlu0 %3137, %v3133
  %v3139 = vpop.permute.xlu0 %3138
  %v3140 = vperm.slane %v2891, 5
  %v3141 = vlaneseq
  %v3142 = vshrl.u32 %v3141, 7
  %3144 = vset.pattern.permute.xlu0 %v3142
  %3145 = vperm.xlu0 %3144, %v3140
  %v3146 = vpop.permute.xlu0 %3145
  %v3147 = vperm.slane %v2891, 6
  %v3148 = vlaneseq
  %v3149 = vshrl.u32 %v3148, 7
  %3151 = vset.pattern.permute.xlu0 %v3149
  %3152 = vperm.xlu0 %3151, %v3147
  %v3153 = vpop.permute.xlu0 %3152
  %v3154 = vperm.slane %v2891, 7
  %v3155 = vlaneseq
  %v3156 = vshrl.u32 %v3155, 7
  %3158 = vset.pattern.permute.xlu0 %v3156
  %3159 = vperm.xlu0 %3158, %v3154
  %v3160 = vpop.permute.xlu0 %3159
  %v3169 = vadd.f32 %v2928, %v3111
  %v3170 = vadd.f32 %v2931, %v3118
  %v3171 = vadd.f32 %v2934, %v3125
  %v3172 = vadd.f32 %v2937, %v3132
  %v3173 = vadd.f32 %v2940, %v3139
  %v3174 = vadd.f32 %v2943, %v3146
  %v3175 = vadd.f32 %v2946, %v3153
  %v3176 = vadd.f32 %v2949, %v3160
  %v3177 = vsel %vm3103, 1, 0
  %3178 = vset.pattern.permute.xlu0 0
  %3179 = vperm.xlu0 %3178, %v3177
  %v3180 = vpop.permute.xlu0 %3179
  %vm3181 = vcmp.eq.s32.totalorder %v3180, 1
  %3190 = vset.pattern.permute.xlu0 0
  %3191 = vperm.xlu0 %3190, %v3169
  %v3192 = vpop.permute.xlu0 %3191
  %3193 = vset.pattern.permute.xlu0 0
  %3194 = vperm.xlu0 %3193, %v3170
  %v3195 = vpop.permute.xlu0 %3194
  %3196 = vset.pattern.permute.xlu0 0
  %3197 = vperm.xlu0 %3196, %v3171
  %v3198 = vpop.permute.xlu0 %3197
  %3199 = vset.pattern.permute.xlu0 0
  %3200 = vperm.xlu0 %3199, %v3172
  %v3201 = vpop.permute.xlu0 %3200
  %3202 = vset.pattern.permute.xlu0 0
  %3203 = vperm.xlu0 %3202, %v3173
  %v3204 = vpop.permute.xlu0 %3203
  %3205 = vset.pattern.permute.xlu0 0
  %3206 = vperm.xlu0 %3205, %v3174
  %v3207 = vpop.permute.xlu0 %3206
  %3208 = vset.pattern.permute.xlu0 0
  %3209 = vperm.xlu0 %3208, %v3175
  %v3210 = vpop.permute.xlu0 %3209
  %3211 = vset.pattern.permute.xlu0 0
  %3212 = vperm.xlu0 %3211, %v3176
  %v3213 = vpop.permute.xlu0 %3212
  %v3214 = vperm.slane %v3192, %v1849
  %v3215 = vperm.slane %v3195, %v1849
  %v3216 = vperm.slane %v3198, %v1849
  %v3217 = vperm.slane %v3201, %v1849
  %v3218 = vperm.slane %v3204, %v1849
  %v3219 = vperm.slane %v3207, %v1849
  %v3220 = vperm.slane %v3210, %v1849
  %v3221 = vperm.slane %v3213, %v1849
  %v3222 = vsel %vm2061, %v3215, %v3214
  %v3223 = vsel %vm2063, %v3216, %v3222
  %v3224 = vsel %vm2065, %v3217, %v3223
  %v3225 = vsel %vm2067, %v3218, %v3224
  %v3226 = vsel %vm2069, %v3219, %v3225
  %v3227 = vsel %vm2071, %v3220, %v3226
  %v3228 = vsel %vm2073, %v3221, %v3227
  %v3230 = vsel %vm3181, %v3228, %v2888
  %v3231 = vadd.s32 %v2889, %v2893
  %s3232 = scalar_lea.vmem [#allocation6], 40
  %v3233 = vld [vmem:[%s3232] sm:$0xff]
  %s3234 = scalar_lea.vmem %s1, 40
  %v3235 = vld [vmem:[%s3234] sm:$0xff]
  %v3237 = vrot.slane %v3230, 1
  %v3238 = vrot.slane %v3230, 2
  %v3239 = vrot.slane %v3230, 3
  %v3240 = vrot.slane %v3230, 4
  %v3241 = vrot.slane %v3230, 5
  %v3242 = vrot.slane %v3230, 6
  %v3243 = vrot.slane %v3230, 7
  %v3244 = vperm.slane %v3230, 0
  %v3245 = vperm.slane %v3237, 0
  %v3246 = vperm.slane %v3238, 0
  %v3247 = vperm.slane %v3239, 0
  %v3248 = vperm.slane %v3240, 0
  %v3249 = vperm.slane %v3241, 0
  %v3250 = vperm.slane %v3242, 0
  %v3251 = vperm.slane %v3243, 0
  %v3260 = vadd.f32 %v3244, %v1847
  %v3261 = vadd.f32 %v3245, %v1847
  %v3262 = vadd.f32 %v3246, %v1847
  %v3263 = vadd.f32 %v3247, %v1847
  %v3264 = vadd.f32 %v3248, %v1847
  %v3265 = vadd.f32 %v3249, %v1847
  %v3266 = vadd.f32 %v3250, %v1847
  %v3267 = vadd.f32 %v3251, %v1847
  %v3268 = vsel %vm1838, %v3260, -inf
  %3269 = vmax.xlane.f32.xlu0 %v3268
  %v3270 = vpop.xlane.xlu0 %3269
  %v3271 = vsel %vm1838, %v3261, -inf
  %3272 = vmax.xlane.f32.xlu0 %v3271
  %v3273 = vpop.xlane.xlu0 %3272
  %v3274 = vsel %vm1838, %v3262, -inf
  %3275 = vmax.xlane.f32.xlu0 %v3274
  %v3276 = vpop.xlane.xlu0 %3275
  %v3277 = vsel %vm1838, %v3263, -inf
  %3278 = vmax.xlane.f32.xlu0 %v3277
  %v3279 = vpop.xlane.xlu0 %3278
  %v3280 = vsel %vm1838, %v3264, -inf
  %3281 = vmax.xlane.f32.xlu0 %v3280
  %v3282 = vpop.xlane.xlu0 %3281
  %v3283 = vsel %vm1838, %v3265, -inf
  %3284 = vmax.xlane.f32.xlu0 %v3283
  %v3285 = vpop.xlane.xlu0 %3284
  %v3286 = vsel %vm1838, %v3266, -inf
  %3287 = vmax.xlane.f32.xlu0 %v3286
  %v3288 = vpop.xlane.xlu0 %3287
  %v3289 = vsel %vm1838, %v3267, -inf
  %3290 = vmax.xlane.f32.xlu0 %v3289
  %v3291 = vpop.xlane.xlu0 %3290
  %vm3292 = vcmp.ge.f32.partialorder %v3260, %v3270
  %vm3293 = vcmp.ge.f32.partialorder %v3261, %v3273
  %vm3294 = vcmp.ge.f32.partialorder %v3262, %v3276
  %vm3295 = vcmp.ge.f32.partialorder %v3263, %v3279
  %vm3296 = vcmp.ge.f32.partialorder %v3264, %v3282
  %vm3297 = vcmp.ge.f32.partialorder %v3265, %v3285
  %vm3298 = vcmp.ge.f32.partialorder %v3266, %v3288
  %vm3299 = vcmp.ge.f32.partialorder %v3267, %v3291
  %v3300 = vsel %vm3292, %v1849, 8
  %v3301 = vsel %vm3293, %v1849, 8
  %v3302 = vsel %vm3294, %v1849, 8
  %v3303 = vsel %vm3295, %v1849, 8
  %v3304 = vsel %vm3296, %v1849, 8
  %v3305 = vsel %vm3297, %v1849, 8
  %v3306 = vsel %vm3298, %v1849, 8
  %v3307 = vsel %vm3299, %v1849, 8
  %v3308 = vsel %vm1838, %v3300, 2147483647
  %v3309 = vand.u32 %v3308, 65535
  %v3310 = vshra.s32 %v3308, 16
  %v3311 = vcvt.s32.f32 %v3309
  %v3312 = vcvt.s32.f32 %v3310
  %3313 = vmin.xlane.f32.xlu0 %v3312
  %v3314 = vpop.xlane.xlu0 %3313
  %vm3315 = vcmp.eq.f32.partialorder %v3312, %v3314
  %v3316 = vsel %vm3315, %v3311, inf
  %3317 = vmin.xlane.f32.xlu0 %v3316
  %v3318 = vpop.xlane.xlu0 %3317
  %v3319 = vcvt.f32.s32 %v3318
  %v3320 = vcvt.f32.s32 %v3314
  %v3321 = vshll.u32 %v3320, 16
  %v3322 = vadd.s32 %v3321, %v3319
  %v3323 = vsel %vm1838, %v3301, 2147483647
  %v3324 = vand.u32 %v3323, 65535
  %v3325 = vshra.s32 %v3323, 16
  %v3326 = vcvt.s32.f32 %v3324
  %v3327 = vcvt.s32.f32 %v3325
  %3328 = vmin.xlane.f32.xlu0 %v3327
  %v3329 = vpop.xlane.xlu0 %3328
  %vm3330 = vcmp.eq.f32.partialorder %v3327, %v3329
  %v3331 = vsel %vm3330, %v3326, inf
  %3332 = vmin.xlane.f32.xlu0 %v3331
  %v3333 = vpop.xlane.xlu0 %3332
  %v3334 = vcvt.f32.s32 %v3333
  %v3335 = vcvt.f32.s32 %v3329
  %v3336 = vshll.u32 %v3335, 16
  %v3337 = vadd.s32 %v3336, %v3334
  %v3338 = vsel %vm1838, %v3302, 2147483647
  %v3339 = vand.u32 %v3338, 65535
  %v3340 = vshra.s32 %v3338, 16
  %v3341 = vcvt.s32.f32 %v3339
  %v3342 = vcvt.s32.f32 %v3340
  %3343 = vmin.xlane.f32.xlu0 %v3342
  %v3344 = vpop.xlane.xlu0 %3343
  %vm3345 = vcmp.eq.f32.partialorder %v3342, %v3344
  %v3346 = vsel %vm3345, %v3341, inf
  %3347 = vmin.xlane.f32.xlu0 %v3346
  %v3348 = vpop.xlane.xlu0 %3347
  %v3349 = vcvt.f32.s32 %v3348
  %v3350 = vcvt.f32.s32 %v3344
  %v3351 = vshll.u32 %v3350, 16
  %v3352 = vadd.s32 %v3351, %v3349
  %v3353 = vsel %vm1838, %v3303, 2147483647
  %v3354 = vand.u32 %v3353, 65535
  %v3355 = vshra.s32 %v3353, 16
  %v3356 = vcvt.s32.f32 %v3354
  %v3357 = vcvt.s32.f32 %v3355
  %3358 = vmin.xlane.f32.xlu0 %v3357
  %v3359 = vpop.xlane.xlu0 %3358
  %vm3360 = vcmp.eq.f32.partialorder %v3357, %v3359
  %v3361 = vsel %vm3360, %v3356, inf
  %3362 = vmin.xlane.f32.xlu0 %v3361
  %v3363 = vpop.xlane.xlu0 %3362
  %v3364 = vcvt.f32.s32 %v3363
  %v3365 = vcvt.f32.s32 %v3359
  %v3366 = vshll.u32 %v3365, 16
  %v3367 = vadd.s32 %v3366, %v3364
  %v3368 = vsel %vm1838, %v3304, 2147483647
  %v3369 = vand.u32 %v3368, 65535
  %v3370 = vshra.s32 %v3368, 16
  %v3371 = vcvt.s32.f32 %v3369
  %v3372 = vcvt.s32.f32 %v3370
  %3373 = vmin.xlane.f32.xlu0 %v3372
  %v3374 = vpop.xlane.xlu0 %3373
  %vm3375 = vcmp.eq.f32.partialorder %v3372, %v3374
  %v3376 = vsel %vm3375, %v3371, inf
  %3377 = vmin.xlane.f32.xlu0 %v3376
  %v3378 = vpop.xlane.xlu0 %3377
  %v3379 = vcvt.f32.s32 %v3378
  %v3380 = vcvt.f32.s32 %v3374
  %v3381 = vshll.u32 %v3380, 16
  %v3382 = vadd.s32 %v3381, %v3379
  %v3383 = vsel %vm1838, %v3305, 2147483647
  %v3384 = vand.u32 %v3383, 65535
  %v3385 = vshra.s32 %v3383, 16
  %v3386 = vcvt.s32.f32 %v3384
  %v3387 = vcvt.s32.f32 %v3385
  %3388 = vmin.xlane.f32.xlu0 %v3387
  %v3389 = vpop.xlane.xlu0 %3388
  %vm3390 = vcmp.eq.f32.partialorder %v3387, %v3389
  %v3391 = vsel %vm3390, %v3386, inf
  %3392 = vmin.xlane.f32.xlu0 %v3391
  %v3393 = vpop.xlane.xlu0 %3392
  %v3394 = vcvt.f32.s32 %v3393
  %v3395 = vcvt.f32.s32 %v3389
  %v3396 = vshll.u32 %v3395, 16
  %v3397 = vadd.s32 %v3396, %v3394
  %v3398 = vsel %vm1838, %v3306, 2147483647
  %v3399 = vand.u32 %v3398, 65535
  %v3400 = vshra.s32 %v3398, 16
  %v3401 = vcvt.s32.f32 %v3399
  %v3402 = vcvt.s32.f32 %v3400
  %3403 = vmin.xlane.f32.xlu0 %v3402
  %v3404 = vpop.xlane.xlu0 %3403
  %vm3405 = vcmp.eq.f32.partialorder %v3402, %v3404
  %v3406 = vsel %vm3405, %v3401, inf
  %3407 = vmin.xlane.f32.xlu0 %v3406
  %v3408 = vpop.xlane.xlu0 %3407
  %v3409 = vcvt.f32.s32 %v3408
  %v3410 = vcvt.f32.s32 %v3404
  %v3411 = vshll.u32 %v3410, 16
  %v3412 = vadd.s32 %v3411, %v3409
  %v3413 = vsel %vm1838, %v3307, 2147483647
  %v3414 = vand.u32 %v3413, 65535
  %v3415 = vshra.s32 %v3413, 16
  %v3416 = vcvt.s32.f32 %v3414
  %v3417 = vcvt.s32.f32 %v3415
  %3418 = vmin.xlane.f32.xlu0 %v3417
  %v3419 = vpop.xlane.xlu0 %3418
  %vm3420 = vcmp.eq.f32.partialorder %v3417, %v3419
  %v3421 = vsel %vm3420, %v3416, inf
  %3422 = vmin.xlane.f32.xlu0 %v3421
  %v3423 = vpop.xlane.xlu0 %3422
  %v3424 = vcvt.f32.s32 %v3423
  %v3425 = vcvt.f32.s32 %v3419
  %v3426 = vshll.u32 %v3425, 16
  %v3427 = vadd.s32 %v3426, %v3424
  %v3428 = vperm.slane %v3322, %v1849
  %v3429 = vperm.slane %v3337, %v1849
  %v3430 = vperm.slane %v3352, %v1849
  %v3431 = vperm.slane %v3367, %v1849
  %v3432 = vperm.slane %v3382, %v1849
  %v3433 = vperm.slane %v3397, %v1849
  %v3434 = vperm.slane %v3412, %v1849
  %v3435 = vperm.slane %v3427, %v1849
  %v3436 = vsel %vm2061, %v3429, %v3428
  %v3437 = vsel %vm2063, %v3430, %v3436
  %v3438 = vsel %vm2065, %v3431, %v3437
  %v3439 = vsel %vm2067, %v3432, %v3438
  %v3440 = vsel %vm2069, %v3433, %v3439
  %v3441 = vsel %vm2071, %v3434, %v3440
  %v3442 = vsel %vm2073, %v3435, %v3441
  %s3443 = scalar_lea.vmem [#allocation7], 40
  %3444 = vst.msk [vmem:[%s3443] sm:$0xff] %vm1838, %v3442
  %vm3445 = vcmp.ne.s32.totalorder %v3235, 0
  %v3447 = vperm.slane %v3233, 0
  %v3448 = vlaneseq
  %v3449 = vshrl.u32 %v3448, 7
  %3451 = vset.pattern.permute.xlu0 %v3449
  %3452 = vperm.xlu0 %3451, %v3447
  %v3453 = vpop.permute.xlu0 %3452
  %v3454 = vperm.slane %v3233, 1
  %v3455 = vlaneseq
  %v3456 = vshrl.u32 %v3455, 7
  %3458 = vset.pattern.permute.xlu0 %v3456
  %3459 = vperm.xlu0 %3458, %v3454
  %v3460 = vpop.permute.xlu0 %3459
  %v3461 = vperm.slane %v3233, 2
  %v3462 = vlaneseq
  %v3463 = vshrl.u32 %v3462, 7
  %3465 = vset.pattern.permute.xlu0 %v3463
  %3466 = vperm.xlu0 %3465, %v3461
  %v3467 = vpop.permute.xlu0 %3466
  %v3468 = vperm.slane %v3233, 3
  %v3469 = vlaneseq
  %v3470 = vshrl.u32 %v3469, 7
  %3472 = vset.pattern.permute.xlu0 %v3470
  %3473 = vperm.xlu0 %3472, %v3468
  %v3474 = vpop.permute.xlu0 %3473
  %v3475 = vperm.slane %v3233, 4
  %v3476 = vlaneseq
  %v3477 = vshrl.u32 %v3476, 7
  %3479 = vset.pattern.permute.xlu0 %v3477
  %3480 = vperm.xlu0 %3479, %v3475
  %v3481 = vpop.permute.xlu0 %3480
  %v3482 = vperm.slane %v3233, 5
  %v3483 = vlaneseq
  %v3484 = vshrl.u32 %v3483, 7
  %3486 = vset.pattern.permute.xlu0 %v3484
  %3487 = vperm.xlu0 %3486, %v3482
  %v3488 = vpop.permute.xlu0 %3487
  %v3489 = vperm.slane %v3233, 6
  %v3490 = vlaneseq
  %v3491 = vshrl.u32 %v3490, 7
  %3493 = vset.pattern.permute.xlu0 %v3491
  %3494 = vperm.xlu0 %3493, %v3489
  %v3495 = vpop.permute.xlu0 %3494
  %v3496 = vperm.slane %v3233, 7
  %v3497 = vlaneseq
  %v3498 = vshrl.u32 %v3497, 7
  %3500 = vset.pattern.permute.xlu0 %v3498
  %3501 = vperm.xlu0 %3500, %v3496
  %v3502 = vpop.permute.xlu0 %3501
  %v3511 = vadd.f32 %v3270, %v3453
  %v3512 = vadd.f32 %v3273, %v3460
  %v3513 = vadd.f32 %v3276, %v3467
  %v3514 = vadd.f32 %v3279, %v3474
  %v3515 = vadd.f32 %v3282, %v3481
  %v3516 = vadd.f32 %v3285, %v3488
  %v3517 = vadd.f32 %v3288, %v3495
  %v3518 = vadd.f32 %v3291, %v3502
  %v3519 = vsel %vm3445, 1, 0
  %3520 = vset.pattern.permute.xlu0 0
  %3521 = vperm.xlu0 %3520, %v3519
  %v3522 = vpop.permute.xlu0 %3521
  %vm3523 = vcmp.eq.s32.totalorder %v3522, 1
  %3532 = vset.pattern.permute.xlu0 0
  %3533 = vperm.xlu0 %3532, %v3511
  %v3534 = vpop.permute.xlu0 %3533
  %3535 = vset.pattern.permute.xlu0 0
  %3536 = vperm.xlu0 %3535, %v3512
  %v3537 = vpop.permute.xlu0 %3536
  %3538 = vset.pattern.permute.xlu0 0
  %3539 = vperm.xlu0 %3538, %v3513
  %v3540 = vpop.permute.xlu0 %3539
  %3541 = vset.pattern.permute.xlu0 0
  %3542 = vperm.xlu0 %3541, %v3514
  %v3543 = vpop.permute.xlu0 %3542
  %3544 = vset.pattern.permute.xlu0 0
  %3545 = vperm.xlu0 %3544, %v3515
  %v3546 = vpop.permute.xlu0 %3545
  %3547 = vset.pattern.permute.xlu0 0
  %3548 = vperm.xlu0 %3547, %v3516
  %v3549 = vpop.permute.xlu0 %3548
  %3550 = vset.pattern.permute.xlu0 0
  %3551 = vperm.xlu0 %3550, %v3517
  %v3552 = vpop.permute.xlu0 %3551
  %3553 = vset.pattern.permute.xlu0 0
  %3554 = vperm.xlu0 %3553, %v3518
  %v3555 = vpop.permute.xlu0 %3554
  %v3556 = vperm.slane %v3534, %v1849
  %v3557 = vperm.slane %v3537, %v1849
  %v3558 = vperm.slane %v3540, %v1849
  %v3559 = vperm.slane %v3543, %v1849
  %v3560 = vperm.slane %v3546, %v1849
  %v3561 = vperm.slane %v3549, %v1849
  %v3562 = vperm.slane %v3552, %v1849
  %v3563 = vperm.slane %v3555, %v1849
  %v3564 = vsel %vm2061, %v3557, %v3556
  %v3565 = vsel %vm2063, %v3558, %v3564
  %v3566 = vsel %vm2065, %v3559, %v3565
  %v3567 = vsel %vm2067, %v3560, %v3566
  %v3568 = vsel %vm2069, %v3561, %v3567
  %v3569 = vsel %vm2071, %v3562, %v3568
  %v3570 = vsel %vm2073, %v3563, %v3569
  %v3572 = vsel %vm3523, %v3570, %v3230
  %v3573 = vadd.s32 %v3231, %v3235
  %s3574 = scalar_lea.vmem [#allocation6], 48
  %v3575 = vld [vmem:[%s3574] sm:$0xff]
  %s3576 = scalar_lea.vmem %s1, 48
  %v3577 = vld [vmem:[%s3576] sm:$0xff]
  %v3579 = vrot.slane %v3572, 1
  %v3580 = vrot.slane %v3572, 2
  %v3581 = vrot.slane %v3572, 3
  %v3582 = vrot.slane %v3572, 4
  %v3583 = vrot.slane %v3572, 5
  %v3584 = vrot.slane %v3572, 6
  %v3585 = vrot.slane %v3572, 7
  %v3586 = vperm.slane %v3572, 0
  %v3587 = vperm.slane %v3579, 0
  %v3588 = vperm.slane %v3580, 0
  %v3589 = vperm.slane %v3581, 0
  %v3590 = vperm.slane %v3582, 0
  %v3591 = vperm.slane %v3583, 0
  %v3592 = vperm.slane %v3584, 0
  %v3593 = vperm.slane %v3585, 0
  %v3602 = vadd.f32 %v3586, %v1847
  %v3603 = vadd.f32 %v3587, %v1847
  %v3604 = vadd.f32 %v3588, %v1847
  %v3605 = vadd.f32 %v3589, %v1847
  %v3606 = vadd.f32 %v3590, %v1847
  %v3607 = vadd.f32 %v3591, %v1847
  %v3608 = vadd.f32 %v3592, %v1847
  %v3609 = vadd.f32 %v3593, %v1847
  %v3610 = vsel %vm1838, %v3602, -inf
  %3611 = vmax.xlane.f32.xlu0 %v3610
  %v3612 = vpop.xlane.xlu0 %3611
  %v3613 = vsel %vm1838, %v3603, -inf
  %3614 = vmax.xlane.f32.xlu0 %v3613
  %v3615 = vpop.xlane.xlu0 %3614
  %v3616 = vsel %vm1838, %v3604, -inf
  %3617 = vmax.xlane.f32.xlu0 %v3616
  %v3618 = vpop.xlane.xlu0 %3617
  %v3619 = vsel %vm1838, %v3605, -inf
  %3620 = vmax.xlane.f32.xlu0 %v3619
  %v3621 = vpop.xlane.xlu0 %3620
  %v3622 = vsel %vm1838, %v3606, -inf
  %3623 = vmax.xlane.f32.xlu0 %v3622
  %v3624 = vpop.xlane.xlu0 %3623
  %v3625 = vsel %vm1838, %v3607, -inf
  %3626 = vmax.xlane.f32.xlu0 %v3625
  %v3627 = vpop.xlane.xlu0 %3626
  %v3628 = vsel %vm1838, %v3608, -inf
  %3629 = vmax.xlane.f32.xlu0 %v3628
  %v3630 = vpop.xlane.xlu0 %3629
  %v3631 = vsel %vm1838, %v3609, -inf
  %3632 = vmax.xlane.f32.xlu0 %v3631
  %v3633 = vpop.xlane.xlu0 %3632
  %vm3634 = vcmp.ge.f32.partialorder %v3602, %v3612
  %vm3635 = vcmp.ge.f32.partialorder %v3603, %v3615
  %vm3636 = vcmp.ge.f32.partialorder %v3604, %v3618
  %vm3637 = vcmp.ge.f32.partialorder %v3605, %v3621
  %vm3638 = vcmp.ge.f32.partialorder %v3606, %v3624
  %vm3639 = vcmp.ge.f32.partialorder %v3607, %v3627
  %vm3640 = vcmp.ge.f32.partialorder %v3608, %v3630
  %vm3641 = vcmp.ge.f32.partialorder %v3609, %v3633
  %v3642 = vsel %vm3634, %v1849, 8
  %v3643 = vsel %vm3635, %v1849, 8
  %v3644 = vsel %vm3636, %v1849, 8
  %v3645 = vsel %vm3637, %v1849, 8
  %v3646 = vsel %vm3638, %v1849, 8
  %v3647 = vsel %vm3639, %v1849, 8
  %v3648 = vsel %vm3640, %v1849, 8
  %v3649 = vsel %vm3641, %v1849, 8
  %v3650 = vsel %vm1838, %v3642, 2147483647
  %v3651 = vand.u32 %v3650, 65535
  %v3652 = vshra.s32 %v3650, 16
  %v3653 = vcvt.s32.f32 %v3651
  %v3654 = vcvt.s32.f32 %v3652
  %3655 = vmin.xlane.f32.xlu0 %v3654
  %v3656 = vpop.xlane.xlu0 %3655
  %vm3657 = vcmp.eq.f32.partialorder %v3654, %v3656
  %v3658 = vsel %vm3657, %v3653, inf
  %3659 = vmin.xlane.f32.xlu0 %v3658
  %v3660 = vpop.xlane.xlu0 %3659
  %v3661 = vcvt.f32.s32 %v3660
  %v3662 = vcvt.f32.s32 %v3656
  %v3663 = vshll.u32 %v3662, 16
  %v3664 = vadd.s32 %v3663, %v3661
  %v3665 = vsel %vm1838, %v3643, 2147483647
  %v3666 = vand.u32 %v3665, 65535
  %v3667 = vshra.s32 %v3665, 16
  %v3668 = vcvt.s32.f32 %v3666
  %v3669 = vcvt.s32.f32 %v3667
  %3670 = vmin.xlane.f32.xlu0 %v3669
  %v3671 = vpop.xlane.xlu0 %3670
  %vm3672 = vcmp.eq.f32.partialorder %v3669, %v3671
  %v3673 = vsel %vm3672, %v3668, inf
  %3674 = vmin.xlane.f32.xlu0 %v3673
  %v3675 = vpop.xlane.xlu0 %3674
  %v3676 = vcvt.f32.s32 %v3675
  %v3677 = vcvt.f32.s32 %v3671
  %v3678 = vshll.u32 %v3677, 16
  %v3679 = vadd.s32 %v3678, %v3676
  %v3680 = vsel %vm1838, %v3644, 2147483647
  %v3681 = vand.u32 %v3680, 65535
  %v3682 = vshra.s32 %v3680, 16
  %v3683 = vcvt.s32.f32 %v3681
  %v3684 = vcvt.s32.f32 %v3682
  %3685 = vmin.xlane.f32.xlu0 %v3684
  %v3686 = vpop.xlane.xlu0 %3685
  %vm3687 = vcmp.eq.f32.partialorder %v3684, %v3686
  %v3688 = vsel %vm3687, %v3683, inf
  %3689 = vmin.xlane.f32.xlu0 %v3688
  %v3690 = vpop.xlane.xlu0 %3689
  %v3691 = vcvt.f32.s32 %v3690
  %v3692 = vcvt.f32.s32 %v3686
  %v3693 = vshll.u32 %v3692, 16
  %v3694 = vadd.s32 %v3693, %v3691
  %v3695 = vsel %vm1838, %v3645, 2147483647
  %v3696 = vand.u32 %v3695, 65535
  %v3697 = vshra.s32 %v3695, 16
  %v3698 = vcvt.s32.f32 %v3696
  %v3699 = vcvt.s32.f32 %v3697
  %3700 = vmin.xlane.f32.xlu0 %v3699
  %v3701 = vpop.xlane.xlu0 %3700
  %vm3702 = vcmp.eq.f32.partialorder %v3699, %v3701
  %v3703 = vsel %vm3702, %v3698, inf
  %3704 = vmin.xlane.f32.xlu0 %v3703
  %v3705 = vpop.xlane.xlu0 %3704
  %v3706 = vcvt.f32.s32 %v3705
  %v3707 = vcvt.f32.s32 %v3701
  %v3708 = vshll.u32 %v3707, 16
  %v3709 = vadd.s32 %v3708, %v3706
  %v3710 = vsel %vm1838, %v3646, 2147483647
  %v3711 = vand.u32 %v3710, 65535
  %v3712 = vshra.s32 %v3710, 16
  %v3713 = vcvt.s32.f32 %v3711
  %v3714 = vcvt.s32.f32 %v3712
  %3715 = vmin.xlane.f32.xlu0 %v3714
  %v3716 = vpop.xlane.xlu0 %3715
  %vm3717 = vcmp.eq.f32.partialorder %v3714, %v3716
  %v3718 = vsel %vm3717, %v3713, inf
  %3719 = vmin.xlane.f32.xlu0 %v3718
  %v3720 = vpop.xlane.xlu0 %3719
  %v3721 = vcvt.f32.s32 %v3720
  %v3722 = vcvt.f32.s32 %v3716
  %v3723 = vshll.u32 %v3722, 16
  %v3724 = vadd.s32 %v3723, %v3721
  %v3725 = vsel %vm1838, %v3647, 2147483647
  %v3726 = vand.u32 %v3725, 65535
  %v3727 = vshra.s32 %v3725, 16
  %v3728 = vcvt.s32.f32 %v3726
  %v3729 = vcvt.s32.f32 %v3727
  %3730 = vmin.xlane.f32.xlu0 %v3729
  %v3731 = vpop.xlane.xlu0 %3730
  %vm3732 = vcmp.eq.f32.partialorder %v3729, %v3731
  %v3733 = vsel %vm3732, %v3728, inf
  %3734 = vmin.xlane.f32.xlu0 %v3733
  %v3735 = vpop.xlane.xlu0 %3734
  %v3736 = vcvt.f32.s32 %v3735
  %v3737 = vcvt.f32.s32 %v3731
  %v3738 = vshll.u32 %v3737, 16
  %v3739 = vadd.s32 %v3738, %v3736
  %v3740 = vsel %vm1838, %v3648, 2147483647
  %v3741 = vand.u32 %v3740, 65535
  %v3742 = vshra.s32 %v3740, 16
  %v3743 = vcvt.s32.f32 %v3741
  %v3744 = vcvt.s32.f32 %v3742
  %3745 = vmin.xlane.f32.xlu0 %v3744
  %v3746 = vpop.xlane.xlu0 %3745
  %vm3747 = vcmp.eq.f32.partialorder %v3744, %v3746
  %v3748 = vsel %vm3747, %v3743, inf
  %3749 = vmin.xlane.f32.xlu0 %v3748
  %v3750 = vpop.xlane.xlu0 %3749
  %v3751 = vcvt.f32.s32 %v3750
  %v3752 = vcvt.f32.s32 %v3746
  %v3753 = vshll.u32 %v3752, 16
  %v3754 = vadd.s32 %v3753, %v3751
  %v3755 = vsel %vm1838, %v3649, 2147483647
  %v3756 = vand.u32 %v3755, 65535
  %v3757 = vshra.s32 %v3755, 16
  %v3758 = vcvt.s32.f32 %v3756
  %v3759 = vcvt.s32.f32 %v3757
  %3760 = vmin.xlane.f32.xlu0 %v3759
  %v3761 = vpop.xlane.xlu0 %3760
  %vm3762 = vcmp.eq.f32.partialorder %v3759, %v3761
  %v3763 = vsel %vm3762, %v3758, inf
  %3764 = vmin.xlane.f32.xlu0 %v3763
  %v3765 = vpop.xlane.xlu0 %3764
  %v3766 = vcvt.f32.s32 %v3765
  %v3767 = vcvt.f32.s32 %v3761
  %v3768 = vshll.u32 %v3767, 16
  %v3769 = vadd.s32 %v3768, %v3766
  %v3770 = vperm.slane %v3664, %v1849
  %v3771 = vperm.slane %v3679, %v1849
  %v3772 = vperm.slane %v3694, %v1849
  %v3773 = vperm.slane %v3709, %v1849
  %v3774 = vperm.slane %v3724, %v1849
  %v3775 = vperm.slane %v3739, %v1849
  %v3776 = vperm.slane %v3754, %v1849
  %v3777 = vperm.slane %v3769, %v1849
  %v3778 = vsel %vm2061, %v3771, %v3770
  %v3779 = vsel %vm2063, %v3772, %v3778
  %v3780 = vsel %vm2065, %v3773, %v3779
  %v3781 = vsel %vm2067, %v3774, %v3780
  %v3782 = vsel %vm2069, %v3775, %v3781
  %v3783 = vsel %vm2071, %v3776, %v3782
  %v3784 = vsel %vm2073, %v3777, %v3783
  %s3785 = scalar_lea.vmem [#allocation7], 48
  %3786 = vst.msk [vmem:[%s3785] sm:$0xff] %vm1838, %v3784
  %vm3787 = vcmp.ne.s32.totalorder %v3577, 0
  %v3789 = vperm.slane %v3575, 0
  %v3790 = vlaneseq
  %v3791 = vshrl.u32 %v3790, 7
  %3793 = vset.pattern.permute.xlu0 %v3791
  %3794 = vperm.xlu0 %3793, %v3789
  %v3795 = vpop.permute.xlu0 %3794
  %v3796 = vperm.slane %v3575, 1
  %v3797 = vlaneseq
  %v3798 = vshrl.u32 %v3797, 7
  %3800 = vset.pattern.permute.xlu0 %v3798
  %3801 = vperm.xlu0 %3800, %v3796
  %v3802 = vpop.permute.xlu0 %3801
  %v3803 = vperm.slane %v3575, 2
  %v3804 = vlaneseq
  %v3805 = vshrl.u32 %v3804, 7
  %3807 = vset.pattern.permute.xlu0 %v3805
  %3808 = vperm.xlu0 %3807, %v3803
  %v3809 = vpop.permute.xlu0 %3808
  %v3810 = vperm.slane %v3575, 3
  %v3811 = vlaneseq
  %v3812 = vshrl.u32 %v3811, 7
  %3814 = vset.pattern.permute.xlu0 %v3812
  %3815 = vperm.xlu0 %3814, %v3810
  %v3816 = vpop.permute.xlu0 %3815
  %v3817 = vperm.slane %v3575, 4
  %v3818 = vlaneseq
  %v3819 = vshrl.u32 %v3818, 7
  %3821 = vset.pattern.permute.xlu0 %v3819
  %3822 = vperm.xlu0 %3821, %v3817
  %v3823 = vpop.permute.xlu0 %3822
  %v3824 = vperm.slane %v3575, 5
  %v3825 = vlaneseq
  %v3826 = vshrl.u32 %v3825, 7
  %3828 = vset.pattern.permute.xlu0 %v3826
  %3829 = vperm.xlu0 %3828, %v3824
  %v3830 = vpop.permute.xlu0 %3829
  %v3831 = vperm.slane %v3575, 6
  %v3832 = vlaneseq
  %v3833 = vshrl.u32 %v3832, 7
  %3835 = vset.pattern.permute.xlu0 %v3833
  %3836 = vperm.xlu0 %3835, %v3831
  %v3837 = vpop.permute.xlu0 %3836
  %v3838 = vperm.slane %v3575, 7
  %v3839 = vlaneseq
  %v3840 = vshrl.u32 %v3839, 7
  %3842 = vset.pattern.permute.xlu0 %v3840
  %3843 = vperm.xlu0 %3842, %v3838
  %v3844 = vpop.permute.xlu0 %3843
  %v3853 = vadd.f32 %v3612, %v3795
  %v3854 = vadd.f32 %v3615, %v3802
  %v3855 = vadd.f32 %v3618, %v3809
  %v3856 = vadd.f32 %v3621, %v3816
  %v3857 = vadd.f32 %v3624, %v3823
  %v3858 = vadd.f32 %v3627, %v3830
  %v3859 = vadd.f32 %v3630, %v3837
  %v3860 = vadd.f32 %v3633, %v3844
  %v3861 = vsel %vm3787, 1, 0
  %3862 = vset.pattern.permute.xlu0 0
  %3863 = vperm.xlu0 %3862, %v3861
  %v3864 = vpop.permute.xlu0 %3863
  %vm3865 = vcmp.eq.s32.totalorder %v3864, 1
  %3874 = vset.pattern.permute.xlu0 0
  %3875 = vperm.xlu0 %3874, %v3853
  %v3876 = vpop.permute.xlu0 %3875
  %3877 = vset.pattern.permute.xlu0 0
  %3878 = vperm.xlu0 %3877, %v3854
  %v3879 = vpop.permute.xlu0 %3878
  %3880 = vset.pattern.permute.xlu0 0
  %3881 = vperm.xlu0 %3880, %v3855
  %v3882 = vpop.permute.xlu0 %3881
  %3883 = vset.pattern.permute.xlu0 0
  %3884 = vperm.xlu0 %3883, %v3856
  %v3885 = vpop.permute.xlu0 %3884
  %3886 = vset.pattern.permute.xlu0 0
  %3887 = vperm.xlu0 %3886, %v3857
  %v3888 = vpop.permute.xlu0 %3887
  %3889 = vset.pattern.permute.xlu0 0
  %3890 = vperm.xlu0 %3889, %v3858
  %v3891 = vpop.permute.xlu0 %3890
  %3892 = vset.pattern.permute.xlu0 0
  %3893 = vperm.xlu0 %3892, %v3859
  %v3894 = vpop.permute.xlu0 %3893
  %3895 = vset.pattern.permute.xlu0 0
  %3896 = vperm.xlu0 %3895, %v3860
  %v3897 = vpop.permute.xlu0 %3896
  %v3898 = vperm.slane %v3876, %v1849
  %v3899 = vperm.slane %v3879, %v1849
  %v3900 = vperm.slane %v3882, %v1849
  %v3901 = vperm.slane %v3885, %v1849
  %v3902 = vperm.slane %v3888, %v1849
  %v3903 = vperm.slane %v3891, %v1849
  %v3904 = vperm.slane %v3894, %v1849
  %v3905 = vperm.slane %v3897, %v1849
  %v3906 = vsel %vm2061, %v3899, %v3898
  %v3907 = vsel %vm2063, %v3900, %v3906
  %v3908 = vsel %vm2065, %v3901, %v3907
  %v3909 = vsel %vm2067, %v3902, %v3908
  %v3910 = vsel %vm2069, %v3903, %v3909
  %v3911 = vsel %vm2071, %v3904, %v3910
  %v3912 = vsel %vm2073, %v3905, %v3911
  %v3914 = vsel %vm3865, %v3912, %v3572
  %v3915 = vadd.s32 %v3573, %v3577
  %s3916 = scalar_lea.vmem [#allocation6], 56
  %v3917 = vld [vmem:[%s3916] sm:$0xff]
  %s3918 = scalar_lea.vmem %s1, 56
  %v3919 = vld [vmem:[%s3918] sm:$0xff]
  %v3921 = vrot.slane %v3914, 1
  %v3922 = vrot.slane %v3914, 2
  %v3923 = vrot.slane %v3914, 3
  %v3924 = vrot.slane %v3914, 4
  %v3925 = vrot.slane %v3914, 5
  %v3926 = vrot.slane %v3914, 6
  %v3927 = vrot.slane %v3914, 7
  %v3928 = vperm.slane %v3914, 0
  %v3929 = vperm.slane %v3921, 0
  %v3930 = vperm.slane %v3922, 0
  %v3931 = vperm.slane %v3923, 0
  %v3932 = vperm.slane %v3924, 0
  %v3933 = vperm.slane %v3925, 0
  %v3934 = vperm.slane %v3926, 0
  %v3935 = vperm.slane %v3927, 0
  %v3944 = vadd.f32 %v3928, %v1847
  %v3945 = vadd.f32 %v3929, %v1847
  %v3946 = vadd.f32 %v3930, %v1847
  %v3947 = vadd.f32 %v3931, %v1847
  %v3948 = vadd.f32 %v3932, %v1847
  %v3949 = vadd.f32 %v3933, %v1847
  %v3950 = vadd.f32 %v3934, %v1847
  %v3951 = vadd.f32 %v3935, %v1847
  %v3952 = vsel %vm1838, %v3944, -inf
  %3953 = vmax.xlane.f32.xlu0 %v3952
  %v3954 = vpop.xlane.xlu0 %3953
  %v3955 = vsel %vm1838, %v3945, -inf
  %3956 = vmax.xlane.f32.xlu0 %v3955
  %v3957 = vpop.xlane.xlu0 %3956
  %v3958 = vsel %vm1838, %v3946, -inf
  %3959 = vmax.xlane.f32.xlu0 %v3958
  %v3960 = vpop.xlane.xlu0 %3959
  %v3961 = vsel %vm1838, %v3947, -inf
  %3962 = vmax.xlane.f32.xlu0 %v3961
  %v3963 = vpop.xlane.xlu0 %3962
  %v3964 = vsel %vm1838, %v3948, -inf
  %3965 = vmax.xlane.f32.xlu0 %v3964
  %v3966 = vpop.xlane.xlu0 %3965
  %v3967 = vsel %vm1838, %v3949, -inf
  %3968 = vmax.xlane.f32.xlu0 %v3967
  %v3969 = vpop.xlane.xlu0 %3968
  %v3970 = vsel %vm1838, %v3950, -inf
  %3971 = vmax.xlane.f32.xlu0 %v3970
  %v3972 = vpop.xlane.xlu0 %3971
  %v3973 = vsel %vm1838, %v3951, -inf
  %3974 = vmax.xlane.f32.xlu0 %v3973
  %v3975 = vpop.xlane.xlu0 %3974
  %vm3976 = vcmp.ge.f32.partialorder %v3944, %v3954
  %vm3977 = vcmp.ge.f32.partialorder %v3945, %v3957
  %vm3978 = vcmp.ge.f32.partialorder %v3946, %v3960
  %vm3979 = vcmp.ge.f32.partialorder %v3947, %v3963
  %vm3980 = vcmp.ge.f32.partialorder %v3948, %v3966
  %vm3981 = vcmp.ge.f32.partialorder %v3949, %v3969
  %vm3982 = vcmp.ge.f32.partialorder %v3950, %v3972
  %vm3983 = vcmp.ge.f32.partialorder %v3951, %v3975
  %v3984 = vsel %vm3976, %v1849, 8
  %v3985 = vsel %vm3977, %v1849, 8
  %v3986 = vsel %vm3978, %v1849, 8
  %v3987 = vsel %vm3979, %v1849, 8
  %v3988 = vsel %vm3980, %v1849, 8
  %v3989 = vsel %vm3981, %v1849, 8
  %v3990 = vsel %vm3982, %v1849, 8
  %v3991 = vsel %vm3983, %v1849, 8
  %v3992 = vsel %vm1838, %v3984, 2147483647
  %v3993 = vand.u32 %v3992, 65535
  %v3994 = vshra.s32 %v3992, 16
  %v3995 = vcvt.s32.f32 %v3993
  %v3996 = vcvt.s32.f32 %v3994
  %3997 = vmin.xlane.f32.xlu0 %v3996
  %v3998 = vpop.xlane.xlu0 %3997
  %vm3999 = vcmp.eq.f32.partialorder %v3996, %v3998
  %v4000 = vsel %vm3999, %v3995, inf
  %4001 = vmin.xlane.f32.xlu0 %v4000
  %v4002 = vpop.xlane.xlu0 %4001
  %v4003 = vcvt.f32.s32 %v4002
  %v4004 = vcvt.f32.s32 %v3998
  %v4005 = vshll.u32 %v4004, 16
  %v4006 = vadd.s32 %v4005, %v4003
  %v4007 = vsel %vm1838, %v3985, 2147483647
  %v4008 = vand.u32 %v4007, 65535
  %v4009 = vshra.s32 %v4007, 16
  %v4010 = vcvt.s32.f32 %v4008
  %v4011 = vcvt.s32.f32 %v4009
  %4012 = vmin.xlane.f32.xlu0 %v4011
  %v4013 = vpop.xlane.xlu0 %4012
  %vm4014 = vcmp.eq.f32.partialorder %v4011, %v4013
  %v4015 = vsel %vm4014, %v4010, inf
  %4016 = vmin.xlane.f32.xlu0 %v4015
  %v4017 = vpop.xlane.xlu0 %4016
  %v4018 = vcvt.f32.s32 %v4017
  %v4019 = vcvt.f32.s32 %v4013
  %v4020 = vshll.u32 %v4019, 16
  %v4021 = vadd.s32 %v4020, %v4018
  %v4022 = vsel %vm1838, %v3986, 2147483647
  %v4023 = vand.u32 %v4022, 65535
  %v4024 = vshra.s32 %v4022, 16
  %v4025 = vcvt.s32.f32 %v4023
  %v4026 = vcvt.s32.f32 %v4024
  %4027 = vmin.xlane.f32.xlu0 %v4026
  %v4028 = vpop.xlane.xlu0 %4027
  %vm4029 = vcmp.eq.f32.partialorder %v4026, %v4028
  %v4030 = vsel %vm4029, %v4025, inf
  %4031 = vmin.xlane.f32.xlu0 %v4030
  %v4032 = vpop.xlane.xlu0 %4031
  %v4033 = vcvt.f32.s32 %v4032
  %v4034 = vcvt.f32.s32 %v4028
  %v4035 = vshll.u32 %v4034, 16
  %v4036 = vadd.s32 %v4035, %v4033
  %v4037 = vsel %vm1838, %v3987, 2147483647
  %v4038 = vand.u32 %v4037, 65535
  %v4039 = vshra.s32 %v4037, 16
  %v4040 = vcvt.s32.f32 %v4038
  %v4041 = vcvt.s32.f32 %v4039
  %4042 = vmin.xlane.f32.xlu0 %v4041
  %v4043 = vpop.xlane.xlu0 %4042
  %vm4044 = vcmp.eq.f32.partialorder %v4041, %v4043
  %v4045 = vsel %vm4044, %v4040, inf
  %4046 = vmin.xlane.f32.xlu0 %v4045
  %v4047 = vpop.xlane.xlu0 %4046
  %v4048 = vcvt.f32.s32 %v4047
  %v4049 = vcvt.f32.s32 %v4043
  %v4050 = vshll.u32 %v4049, 16
  %v4051 = vadd.s32 %v4050, %v4048
  %v4052 = vsel %vm1838, %v3988, 2147483647
  %v4053 = vand.u32 %v4052, 65535
  %v4054 = vshra.s32 %v4052, 16
  %v4055 = vcvt.s32.f32 %v4053
  %v4056 = vcvt.s32.f32 %v4054
  %4057 = vmin.xlane.f32.xlu0 %v4056
  %v4058 = vpop.xlane.xlu0 %4057
  %vm4059 = vcmp.eq.f32.partialorder %v4056, %v4058
  %v4060 = vsel %vm4059, %v4055, inf
  %4061 = vmin.xlane.f32.xlu0 %v4060
  %v4062 = vpop.xlane.xlu0 %4061
  %v4063 = vcvt.f32.s32 %v4062
  %v4064 = vcvt.f32.s32 %v4058
  %v4065 = vshll.u32 %v4064, 16
  %v4066 = vadd.s32 %v4065, %v4063
  %v4067 = vsel %vm1838, %v3989, 2147483647
  %v4068 = vand.u32 %v4067, 65535
  %v4069 = vshra.s32 %v4067, 16
  %v4070 = vcvt.s32.f32 %v4068
  %v4071 = vcvt.s32.f32 %v4069
  %4072 = vmin.xlane.f32.xlu0 %v4071
  %v4073 = vpop.xlane.xlu0 %4072
  %vm4074 = vcmp.eq.f32.partialorder %v4071, %v4073
  %v4075 = vsel %vm4074, %v4070, inf
  %4076 = vmin.xlane.f32.xlu0 %v4075
  %v4077 = vpop.xlane.xlu0 %4076
  %v4078 = vcvt.f32.s32 %v4077
  %v4079 = vcvt.f32.s32 %v4073
  %v4080 = vshll.u32 %v4079, 16
  %v4081 = vadd.s32 %v4080, %v4078
  %v4082 = vsel %vm1838, %v3990, 2147483647
  %v4083 = vand.u32 %v4082, 65535
  %v4084 = vshra.s32 %v4082, 16
  %v4085 = vcvt.s32.f32 %v4083
  %v4086 = vcvt.s32.f32 %v4084
  %4087 = vmin.xlane.f32.xlu0 %v4086
  %v4088 = vpop.xlane.xlu0 %4087
  %vm4089 = vcmp.eq.f32.partialorder %v4086, %v4088
  %v4090 = vsel %vm4089, %v4085, inf
  %4091 = vmin.xlane.f32.xlu0 %v4090
  %v4092 = vpop.xlane.xlu0 %4091
  %v4093 = vcvt.f32.s32 %v4092
  %v4094 = vcvt.f32.s32 %v4088
  %v4095 = vshll.u32 %v4094, 16
  %v4096 = vadd.s32 %v4095, %v4093
  %v4097 = vsel %vm1838, %v3991, 2147483647
  %v4098 = vand.u32 %v4097, 65535
  %v4099 = vshra.s32 %v4097, 16
  %v4100 = vcvt.s32.f32 %v4098
  %v4101 = vcvt.s32.f32 %v4099
  %4102 = vmin.xlane.f32.xlu0 %v4101
  %v4103 = vpop.xlane.xlu0 %4102
  %vm4104 = vcmp.eq.f32.partialorder %v4101, %v4103
  %v4105 = vsel %vm4104, %v4100, inf
  %4106 = vmin.xlane.f32.xlu0 %v4105
  %v4107 = vpop.xlane.xlu0 %4106
  %v4108 = vcvt.f32.s32 %v4107
  %v4109 = vcvt.f32.s32 %v4103
  %v4110 = vshll.u32 %v4109, 16
  %v4111 = vadd.s32 %v4110, %v4108
  %v4112 = vperm.slane %v4006, %v1849
  %v4113 = vperm.slane %v4021, %v1849
  %v4114 = vperm.slane %v4036, %v1849
  %v4115 = vperm.slane %v4051, %v1849
  %v4116 = vperm.slane %v4066, %v1849
  %v4117 = vperm.slane %v4081, %v1849
  %v4118 = vperm.slane %v4096, %v1849
  %v4119 = vperm.slane %v4111, %v1849
  %v4120 = vsel %vm2061, %v4113, %v4112
  %v4121 = vsel %vm2063, %v4114, %v4120
  %v4122 = vsel %vm2065, %v4115, %v4121
  %v4123 = vsel %vm2067, %v4116, %v4122
  %v4124 = vsel %vm2069, %v4117, %v4123
  %v4125 = vsel %vm2071, %v4118, %v4124
  %v4126 = vsel %vm2073, %v4119, %v4125
  %s4127 = scalar_lea.vmem [#allocation7], 56
  %4128 = vst.msk [vmem:[%s4127] sm:$0xff] %vm1838, %v4126
  %vm4129 = vcmp.ne.s32.totalorder %v3919, 0
  %v4131 = vperm.slane %v3917, 0
  %v4132 = vlaneseq
  %v4133 = vshrl.u32 %v4132, 7
  %4135 = vset.pattern.permute.xlu0 %v4133
  %4136 = vperm.xlu0 %4135, %v4131
  %v4137 = vpop.permute.xlu0 %4136
  %v4138 = vperm.slane %v3917, 1
  %v4139 = vlaneseq
  %v4140 = vshrl.u32 %v4139, 7
  %4142 = vset.pattern.permute.xlu0 %v4140
  %4143 = vperm.xlu0 %4142, %v4138
  %v4144 = vpop.permute.xlu0 %4143
  %v4145 = vperm.slane %v3917, 2
  %v4146 = vlaneseq
  %v4147 = vshrl.u32 %v4146, 7
  %4149 = vset.pattern.permute.xlu0 %v4147
  %4150 = vperm.xlu0 %4149, %v4145
  %v4151 = vpop.permute.xlu0 %4150
  %v4152 = vperm.slane %v3917, 3
  %v4153 = vlaneseq
  %v4154 = vshrl.u32 %v4153, 7
  %4156 = vset.pattern.permute.xlu0 %v4154
  %4157 = vperm.xlu0 %4156, %v4152
  %v4158 = vpop.permute.xlu0 %4157
  %v4159 = vperm.slane %v3917, 4
  %v4160 = vlaneseq
  %v4161 = vshrl.u32 %v4160, 7
  %4163 = vset.pattern.permute.xlu0 %v4161
  %4164 = vperm.xlu0 %4163, %v4159
  %v4165 = vpop.permute.xlu0 %4164
  %v4166 = vperm.slane %v3917, 5
  %v4167 = vlaneseq
  %v4168 = vshrl.u32 %v4167, 7
  %4170 = vset.pattern.permute.xlu0 %v4168
  %4171 = vperm.xlu0 %4170, %v4166
  %v4172 = vpop.permute.xlu0 %4171
  %v4173 = vperm.slane %v3917, 6
  %v4174 = vlaneseq
  %v4175 = vshrl.u32 %v4174, 7
  %4177 = vset.pattern.permute.xlu0 %v4175
  %4178 = vperm.xlu0 %4177, %v4173
  %v4179 = vpop.permute.xlu0 %4178
  %v4180 = vperm.slane %v3917, 7
  %v4181 = vlaneseq
  %v4182 = vshrl.u32 %v4181, 7
  %4184 = vset.pattern.permute.xlu0 %v4182
  %4185 = vperm.xlu0 %4184, %v4180
  %v4186 = vpop.permute.xlu0 %4185
  %v4195 = vadd.f32 %v3954, %v4137
  %v4196 = vadd.f32 %v3957, %v4144
  %v4197 = vadd.f32 %v3960, %v4151
  %v4198 = vadd.f32 %v3963, %v4158
  %v4199 = vadd.f32 %v3966, %v4165
  %v4200 = vadd.f32 %v3969, %v4172
  %v4201 = vadd.f32 %v3972, %v4179
  %v4202 = vadd.f32 %v3975, %v4186
  %v4203 = vsel %vm4129, 1, 0
  %4204 = vset.pattern.permute.xlu0 0
  %4205 = vperm.xlu0 %4204, %v4203
  %v4206 = vpop.permute.xlu0 %4205
  %vm4207 = vcmp.eq.s32.totalorder %v4206, 1
  %4216 = vset.pattern.permute.xlu0 0
  %4217 = vperm.xlu0 %4216, %v4195
  %v4218 = vpop.permute.xlu0 %4217
  %4219 = vset.pattern.permute.xlu0 0
  %4220 = vperm.xlu0 %4219, %v4196
  %v4221 = vpop.permute.xlu0 %4220
  %4222 = vset.pattern.permute.xlu0 0
  %4223 = vperm.xlu0 %4222, %v4197
  %v4224 = vpop.permute.xlu0 %4223
  %4225 = vset.pattern.permute.xlu0 0
  %4226 = vperm.xlu0 %4225, %v4198
  %v4227 = vpop.permute.xlu0 %4226
  %4228 = vset.pattern.permute.xlu0 0
  %4229 = vperm.xlu0 %4228, %v4199
  %v4230 = vpop.permute.xlu0 %4229
  %4231 = vset.pattern.permute.xlu0 0
  %4232 = vperm.xlu0 %4231, %v4200
  %v4233 = vpop.permute.xlu0 %4232
  %4234 = vset.pattern.permute.xlu0 0
  %4235 = vperm.xlu0 %4234, %v4201
  %v4236 = vpop.permute.xlu0 %4235
  %4237 = vset.pattern.permute.xlu0 0
  %4238 = vperm.xlu0 %4237, %v4202
  %v4239 = vpop.permute.xlu0 %4238
  %v4240 = vperm.slane %v4218, %v1849
  %v4241 = vperm.slane %v4221, %v1849
  %v4242 = vperm.slane %v4224, %v1849
  %v4243 = vperm.slane %v4227, %v1849
  %v4244 = vperm.slane %v4230, %v1849
  %v4245 = vperm.slane %v4233, %v1849
  %v4246 = vperm.slane %v4236, %v1849
  %v4247 = vperm.slane %v4239, %v1849
  %v4248 = vsel %vm2061, %v4241, %v4240
  %v4249 = vsel %vm2063, %v4242, %v4248
  %v4250 = vsel %vm2065, %v4243, %v4249
  %v4251 = vsel %vm2067, %v4244, %v4250
  %v4252 = vsel %vm2069, %v4245, %v4251
  %v4253 = vsel %vm2071, %v4246, %v4252
  %v4254 = vsel %vm2073, %v4247, %v4253
  %v4256 = vsel %vm4207, %v4254, %v3914
  %v4257 = vadd.s32 %v3915, %v3919
  %v4258 = vld [vmem:[%s12] sm:$0x1]
  %v4260 = vperm.slane %v4258, 0
  %v4262 = vadd.f32 %v4256, %v4260
  %v4263 = vsub.s32 %v4257, 1
  %vm4264 = vcmp.gt.s32.totalorder %v4263, 0
  %v4265 = vsel %vm4264, %v4263, 0
  %v4266 = vsel %vm1838, %v4262, -inf
  %4267 = vmax.xlane.f32.xlu0 %v4266
  %v4268 = vpop.xlane.xlu0 %4267
  %vm4269 = vcmp.ge.f32.partialorder %v4262, %v4268
  %v4270 = vsel %vm4269, %v1849, 8
  %v4271 = vsel %vm1838, %v4270, 2147483647
  %v4272 = vand.u32 %v4271, 65535
  %v4273 = vshra.s32 %v4271, 16
  %v4274 = vcvt.s32.f32 %v4272
  %v4275 = vcvt.s32.f32 %v4273
  %4276 = vmin.xlane.f32.xlu0 %v4275
  %v4277 = vpop.xlane.xlu0 %4276
  %vm4278 = vcmp.eq.f32.partialorder %v4275, %v4277
  %v4279 = vsel %vm4278, %v4274, inf
  %4280 = vmin.xlane.f32.xlu0 %v4279
  %v4281 = vpop.xlane.xlu0 %4280
  %v4282 = vcvt.f32.s32 %v4281
  %v4283 = vcvt.f32.s32 %v4277
  %v4284 = vshll.u32 %v4283, 16
  %v4285 = vadd.s32 %v4284, %v4282
  %vm4286 = vcmp.eq.s32.totalorder %v4265, 7
  %v4287 = vsel %vm4286, %v4285, 4294967295
  %vm4288 = vcmask 7168
  %4289 = vst.msk [vmem:[%s13 + $0x38] sm:$0xff] %vm4288, %v4287
  %v4290 = vld [vmem:[%s4127] sm:$0xff]
  %vm4291 = vcmp.eq.s32.totalorder %v1849, %v4285
  %v4292 = vsel %vm4291, %v4290, 0
  %v4293 = vsel %vm1838, %v4292, 0
  %v4294 = vand.u32 %v4293, 65535
  %v4295 = vshrl.u32 %v4293, 16
  %v4296 = vcvt.s32.f32 %v4294
  %v4297 = vcvt.s32.f32 %v4295
  %4298 = vadd.xlane.f32.xlu0 %v4296
  %v4299 = vpop.xlane.xlu0 %4298
  %4300 = vadd.xlane.f32.xlu0 %v4297
  %v4301 = vpop.xlane.xlu0 %4300
  %v4302 = vcvt.f32.s32 %v4299
  %v4303 = vcvt.f32.s32 %v4301
  %v4304 = vshll.u32 %v4303, 16
  %v4305 = vadd.s32 %v4304, %v4302
  %vm4306 = vcmp.gt.s32.totalorder %v4265, 6
  %v4307 = vsel %vm4306, %v4305, %v4285
  %vm4308 = vcmp.lt.s32.totalorder %v4265, 6
  %v4309 = vsel %vm4308, 4294967295, %v4307
  %s4310 = scalar_lea.vmem %s13, 48
  %4311 = vst.msk [vmem:[%s4310] sm:$0xff] %vm4288, %v4309
  %v4312 = vld [vmem:[%s3785] sm:$0xff]
  %4313 = vset.pattern.permute.xlu0 0
  %4314 = vperm.xlu0 %4313, %v4307
  %v4315 = vpop.permute.xlu0 %4314
  %vm4316 = vcmp.eq.s32.totalorder %v1849, %v4315
  %v4317 = vsel %vm4316, %v4312, 0
  %v4318 = vsel %vm1838, %v4317, 0
  %v4319 = vand.u32 %v4318, 65535
  %v4320 = vshrl.u32 %v4318, 16
  %v4321 = vcvt.s32.f32 %v4319
  %v4322 = vcvt.s32.f32 %v4320
  %4323 = vadd.xlane.f32.xlu0 %v4321
  %v4324 = vpop.xlane.xlu0 %4323
  %4325 = vadd.xlane.f32.xlu0 %v4322
  %v4326 = vpop.xlane.xlu0 %4325
  %v4327 = vcvt.f32.s32 %v4324
  %v4328 = vcvt.f32.s32 %v4326
  %v4329 = vshll.u32 %v4328, 16
  %v4330 = vadd.s32 %v4329, %v4327
  %vm4331 = vcmp.gt.s32.totalorder %v4265, 5
  %v4332 = vsel %vm4331, %v4330, %v4307
  %vm4333 = vcmp.lt.s32.totalorder %v4265, 5
  %v4334 = vsel %vm4333, 4294967295, %v4332
  %s4335 = scalar_lea.vmem %s13, 40
  %4336 = vst.msk [vmem:[%s4335] sm:$0xff] %vm4288, %v4334
  %v4337 = vld [vmem:[%s3443] sm:$0xff]
  %4338 = vset.pattern.permute.xlu0 0
  %4339 = vperm.xlu0 %4338, %v4332
  %v4340 = vpop.permute.xlu0 %4339
  %vm4341 = vcmp.eq.s32.totalorder %v1849, %v4340
  %v4342 = vsel %vm4341, %v4337, 0
  %v4343 = vsel %vm1838, %v4342, 0
  %v4344 = vand.u32 %v4343, 65535
  %v4345 = vshrl.u32 %v4343, 16
  %v4346 = vcvt.s32.f32 %v4344
  %v4347 = vcvt.s32.f32 %v4345
  %4348 = vadd.xlane.f32.xlu0 %v4346
  %v4349 = vpop.xlane.xlu0 %4348
  %4350 = vadd.xlane.f32.xlu0 %v4347
  %v4351 = vpop.xlane.xlu0 %4350
  %v4352 = vcvt.f32.s32 %v4349
  %v4353 = vcvt.f32.s32 %v4351
  %v4354 = vshll.u32 %v4353, 16
  %v4355 = vadd.s32 %v4354, %v4352
  %vm4356 = vcmp.gt.s32.totalorder %v4265, 4
  %v4357 = vsel %vm4356, %v4355, %v4332
  %vm4358 = vcmp.lt.s32.totalorder %v4265, 4
  %v4359 = vsel %vm4358, 4294967295, %v4357
  %s4360 = scalar_lea.vmem %s13, 32
  %4361 = vst.msk [vmem:[%s4360] sm:$0xff] %vm4288, %v4359
  %v4362 = vld [vmem:[%s3101] sm:$0xff]
  %4363 = vset.pattern.permute.xlu0 0
  %4364 = vperm.xlu0 %4363, %v4357
  %v4365 = vpop.permute.xlu0 %4364
  %vm4366 = vcmp.eq.s32.totalorder %v1849, %v4365
  %v4367 = vsel %vm4366, %v4362, 0
  %v4368 = vsel %vm1838, %v4367, 0
  %v4369 = vand.u32 %v4368, 65535
  %v4370 = vshrl.u32 %v4368, 16
  %v4371 = vcvt.s32.f32 %v4369
  %v4372 = vcvt.s32.f32 %v4370
  %4373 = vadd.xlane.f32.xlu0 %v4371
  %v4374 = vpop.xlane.xlu0 %4373
  %4375 = vadd.xlane.f32.xlu0 %v4372
  %v4376 = vpop.xlane.xlu0 %4375
  %v4377 = vcvt.f32.s32 %v4374
  %v4378 = vcvt.f32.s32 %v4376
  %v4379 = vshll.u32 %v4378, 16
  %v4380 = vadd.s32 %v4379, %v4377
  %vm4381 = vcmp.gt.s32.totalorder %v4265, 3
  %v4382 = vsel %vm4381, %v4380, %v4357
  %vm4383 = vcmp.lt.s32.totalorder %v4265, 3
  %v4384 = vsel %vm4383, 4294967295, %v4382
  %s4385 = scalar_lea.vmem %s13, 24
  %4386 = vst.msk [vmem:[%s4385] sm:$0xff] %vm4288, %v4384
  %v4387 = vld [vmem:[%s2759] sm:$0xff]
  %4388 = vset.pattern.permute.xlu0 0
  %4389 = vperm.xlu0 %4388, %v4382
  %v4390 = vpop.permute.xlu0 %4389
  %vm4391 = vcmp.eq.s32.totalorder %v1849, %v4390
  %v4392 = vsel %vm4391, %v4387, 0
  %v4393 = vsel %vm1838, %v4392, 0
  %v4394 = vand.u32 %v4393, 65535
  %v4395 = vshrl.u32 %v4393, 16
  %v4396 = vcvt.s32.f32 %v4394
  %v4397 = vcvt.s32.f32 %v4395
  %4398 = vadd.xlane.f32.xlu0 %v4396
  %v4399 = vpop.xlane.xlu0 %4398
  %4400 = vadd.xlane.f32.xlu0 %v4397
  %v4401 = vpop.xlane.xlu0 %4400
  %v4402 = vcvt.f32.s32 %v4399
  %v4403 = vcvt.f32.s32 %v4401
  %v4404 = vshll.u32 %v4403, 16
  %v4405 = vadd.s32 %v4404, %v4402
  %vm4406 = vcmp.gt.s32.totalorder %v4265, 2
  %v4407 = vsel %vm4406, %v4405, %v4382
  %vm4408 = vcmp.lt.s32.totalorder %v4265, 2
  %v4409 = vsel %vm4408, 4294967295, %v4407
  %s4410 = scalar_lea.vmem %s13, 16
  %4411 = vst.msk [vmem:[%s4410] sm:$0xff] %vm4288, %v4409
  %v4412 = vld [vmem:[%s2417] sm:$0xff]
  %4413 = vset.pattern.permute.xlu0 0
  %4414 = vperm.xlu0 %4413, %v4407
  %v4415 = vpop.permute.xlu0 %4414
  %vm4416 = vcmp.eq.s32.totalorder %v1849, %v4415
  %v4417 = vsel %vm4416, %v4412, 0
  %v4418 = vsel %vm1838, %v4417, 0
  %v4419 = vand.u32 %v4418, 65535
  %v4420 = vshrl.u32 %v4418, 16
  %v4421 = vcvt.s32.f32 %v4419
  %v4422 = vcvt.s32.f32 %v4420
  %4423 = vadd.xlane.f32.xlu0 %v4421
  %v4424 = vpop.xlane.xlu0 %4423
  %4425 = vadd.xlane.f32.xlu0 %v4422
  %v4426 = vpop.xlane.xlu0 %4425
  %v4427 = vcvt.f32.s32 %v4424
  %v4428 = vcvt.f32.s32 %v4426
  %v4429 = vshll.u32 %v4428, 16
  %v4430 = vadd.s32 %v4429, %v4427
  %vm4431 = vcmp.gt.s32.totalorder %v4265, 1
  %v4432 = vsel %vm4431, %v4430, %v4407
  %vm4433 = vcmp.lt.s32.totalorder %v4265, 1
  %v4434 = vsel %vm4433, 4294967295, %v4432
  %s4435 = scalar_lea.vmem %s13, 8
  %4436 = vst.msk [vmem:[%s4435] sm:$0xff] %vm4288, %v4434
  %v4437 = vld [vmem:[%s2075] sm:$0xff]
  %4438 = vset.pattern.permute.xlu0 0
  %4439 = vperm.xlu0 %4438, %v4432
  %v4440 = vpop.permute.xlu0 %4439
  %vm4441 = vcmp.eq.s32.totalorder %v1849, %v4440
  %v4442 = vsel %vm4441, %v4437, 0
  %v4443 = vsel %vm1838, %v4442, 0
  %v4444 = vand.u32 %v4443, 65535
  %v4445 = vshrl.u32 %v4443, 16
  %v4446 = vcvt.s32.f32 %v4444
  %v4447 = vcvt.s32.f32 %v4445
  %4448 = vadd.xlane.f32.xlu0 %v4446
  %v4449 = vpop.xlane.xlu0 %4448
  %4450 = vadd.xlane.f32.xlu0 %v4447
  %v4451 = vpop.xlane.xlu0 %4450
  %v4452 = vcvt.f32.s32 %v4449
  %v4453 = vcvt.f32.s32 %v4451
  %v4454 = vshll.u32 %v4453, 16
  %v4455 = vadd.s32 %v4454, %v4452
  %vm4456 = vcmp.gt.s32.totalorder %v4265, 0
  %v4457 = vsel %vm4456, %v4455, %v4432
  %vm4458 = vcmp.lt.s32.totalorder %v4265, 0
  %v4459 = vsel %vm4458, 4294967295, %v4457
  %4460 = vst.msk [vmem:[%s13] sm:$0xff] %vm4288, %v4459
  // Predicated region
  $region54: #{ner_forward.1} parent=0 // pred_check
    _
  $region55: #{ner_forward.1} parent=0 // pred_check_branch
    %4462 = sbr.rel (0) target = $region57
  $region56: #{ner_forward.1} parent=0 // pred_region
    _
  $region57: #{ner_forward.1} parent=0 // pred_fallthru
    _
  // Predicated region
  $region58: #{ner_forward.1} parent=0 // pred_check
    _
  $region59: #{ner_forward.1} parent=0 // pred_check_branch
    %4464 = sbr.rel (0) target = $region61
  $region60: #{ner_forward.1} parent=0 // pred_region
    _
  $region61: #{ner_forward.1} parent=0 // pred_fallthru
    _

</llo_original>
